<compile_context>
chip_gen: v7x
topology: tpu7x:2x2x1
jax: 0.10.0
libtpu: 0.0.40
codegen_flags: <defaults>
</compile_context>

<pallas_src>
import functools
import math

import jax
import jax.numpy as jnp
from jax.experimental import pallas as pl
from jax.experimental.pallas import tpu as pltpu

BN_EPS = 1e-5
CP = 128                       # padded channel width == lane dim
VMEM_LIMIT = 32 * 1024 * 1024  # safe scoped limit on v5e/v6e/v7x
MXU_DTYPE = jnp.bfloat16       # matmul operand dtype (accumulation stays f32)


def _compiler_params(semantics):
    return pltpu.CompilerParams(dimension_semantics=semantics,
                                vmem_limit_bytes=VMEM_LIMIT)


# ---------------------------------------------------------------------------
# Kernels
# ---------------------------------------------------------------------------
def _write_partial_stats(stats_ref, conv):
    """stats_ref is a (2, CP) block private to this grid step (parallel-safe)."""
    stats_ref[0:1, :] = jnp.sum(conv, axis=0, keepdims=True)
    stats_ref[1:2, :] = jnp.sum(conv * conv, axis=0, keepdims=True)


def pw_conv_stats_kernel(x_ref, w_ref, conv_ref, stats_ref):
    """1x1 conv (bf16 MXU matmul, f32 acc) + per-step partial sum/sumsq."""
    conv = jnp.dot(x_ref[...].astype(MXU_DTYPE), w_ref[...],
                   preferred_element_type=jnp.float32)
    conv_ref[...] = conv
    _write_partial_stats(stats_ref, conv)


def residual_pw_conv_stats_kernel(conv3_ref, sc_ref, scale_ref, shift_ref, w_ref,
                                  y_ref, conv_ref, stats_ref):
    """Fused: BN3 + residual add of block k, then block k+1's 1x1 conv + stats."""
    y = sc_ref[...] + conv3_ref[...] * scale_ref[...] + shift_ref[...]
    y_ref[...] = y                                     # new shortcut (f32)
    conv = jnp.dot(y.astype(MXU_DTYPE), w_ref[...],
                   preferred_element_type=jnp.float32)
    conv_ref[...] = conv
    _write_partial_stats(stats_ref, conv)


def act_pw_conv_stats_kernel(xraw_ref, scale_ref, shift_ref, alpha_ref, w_ref,
                             conv_ref, stats_ref):
    """Fused: BN2 (scale/shift) + PReLU, then projection 1x1 conv + stats."""
    y = xraw_ref[...] * scale_ref[...] + shift_ref[...]
    a = jnp.where(y >= 0.0, y, alpha_ref[...] * y)
    conv = jnp.dot(a.astype(MXU_DTYPE), w_ref[...],
                   preferred_element_type=jnp.float32)
    conv_ref[...] = conv
    _write_partial_stats(stats_ref, conv)


def dw_conv_fused_kernel(conv1_ref, scale_ref, shift_ref, alpha_ref, wdw_ref,
                         conv2_ref, stats_ref, pad_ref, *, H, W, BH):
    """Fused BN1 + PReLU + depthwise 3x3 (stride 1, pad 1) + partial stats.

    conv1_ref: (H, W, CP) raw 1x1-conv output for one image (leading N squeezed).
    pad_ref:   (H+2, W+2, CP) VMEM scratch; border zeroed every step (megacore-safe),
               interior holds the activated feature map.
    Output rows are produced in BH-row bands whose accumulator lives in vregs across
    all 9 taps (single store per band instead of 9 read-modify-writes).
    """
    # BN1 + PReLU on the whole image, written into the padded scratch interior.
    y = conv1_ref[...] * scale_ref[...] + shift_ref[...]
    act = jnp.where(y >= 0.0, y, alpha_ref[...] * y)

    zrow = jnp.zeros((1, W + 2, CP), jnp.float32)
    pad_ref[0:1, :, :] = zrow
    pad_ref[H + 1:H + 2, :, :] = zrow
    zcol = jnp.zeros((H + 2, 1, CP), jnp.float32)
    pad_ref[:, 0:1, :] = zcol
    pad_ref[:, W + 1:W + 2, :] = zcol
    pad_ref[1:H + 1, 1:W + 1, :] = act

    w_all = wdw_ref[...]                                # (9, CP) taps, f32
    n_bands = H // BH

    def band(b, carry):
        s, ss = carry
        r0 = pl.multiple_of(b * BH, BH)
        acc = jnp.zeros((BH, W, CP), jnp.float32)
        for di in range(3):
            for dj in range(3):
                part = pad_ref[pl.ds(r0 + di, BH), dj:dj + W, :]
                tap = w_all[di * 3 + dj:di * 3 + dj + 1, :]      # (1, CP)
                acc = acc + part * tap
        conv2_ref[pl.ds(r0, BH), :, :] = acc
        s = s + jnp.sum(jnp.sum(acc, axis=0), axis=0, keepdims=True)
        ss = ss + jnp.sum(jnp.sum(acc * acc, axis=0), axis=0, keepdims=True)
        return s, ss

    s, ss = jax.lax.fori_loop(
        0, n_bands, band,
        (jnp.zeros((1, CP), jnp.float32), jnp.zeros((1, CP), jnp.float32)))
    stats_ref[0:1, :] = s
    stats_ref[1:2, :] = ss


def bn_residual_kernel(conv_ref, scale_ref, shift_ref, sc_ref, out_ref):
    """Final block only: BN3 + residual add (shortcut aliased to the output)."""
    out_ref[...] = sc_ref[...] + conv_ref[...] * scale_ref[...] + shift_ref[...]


# ---------------------------------------------------------------------------
# pallas_call wrappers
# ---------------------------------------------------------------------------
def _row_spec():
    return pl.BlockSpec((1, CP), lambda i: (0, 0))


def _stats_spec():
    return pl.BlockSpec((None, 2, CP), lambda i: (i, 0, 0))


def _pw_conv_stats(x_flat, w, tm):
    M = x_flat.shape[0]
    steps = M // tm
    return pl.pallas_call(
        pw_conv_stats_kernel,
        out_shape=(jax.ShapeDtypeStruct((M, CP), jnp.float32),
                   jax.ShapeDtypeStruct((steps, 2, CP), jnp.float32)),
        grid_spec=pltpu.PrefetchScalarGridSpec(
            num_scalar_prefetch=0,
            grid=(steps,),
            in_specs=[pl.BlockSpec((tm, CP), lambda i: (i, 0)),
                      pl.BlockSpec((CP, CP), lambda i: (0, 0))],
            out_specs=(pl.BlockSpec((tm, CP), lambda i: (i, 0)),
                       _stats_spec())),
        compiler_params=_compiler_params(("parallel",)),
    )(x_flat, w)


def _residual_pw_conv_stats(conv3, shortcut, scale, shift, w_next, tm):
    M = conv3.shape[0]
    steps = M // tm
    tile = pl.BlockSpec((tm, CP), lambda i: (i, 0))
    return pl.pallas_call(
        residual_pw_conv_stats_kernel,
        out_shape=(jax.ShapeDtypeStruct((M, CP), jnp.float32),    # new shortcut
                   jax.ShapeDtypeStruct((M, CP), jnp.float32),    # next conv1
                   jax.ShapeDtypeStruct((steps, 2, CP), jnp.float32)),
        grid_spec=pltpu.PrefetchScalarGridSpec(
            num_scalar_prefetch=0,
            grid=(steps,),
            in_specs=[tile, tile, _row_spec(), _row_spec(),
                      pl.BlockSpec((CP, CP), lambda i: (0, 0))],
            out_specs=(tile, tile, _stats_spec())),
        compiler_params=_compiler_params(("parallel",)),
    )(conv3, shortcut, scale, shift, w_next)


def _act_pw_conv_stats(xraw, scale, shift, alpha, w, tm):
    M = xraw.shape[0]
    steps = M // tm
    tile = pl.BlockSpec((tm, CP), lambda i: (i, 0))
    return pl.pallas_call(
        act_pw_conv_stats_kernel,
        out_shape=(jax.ShapeDtypeStruct((M, CP), jnp.float32),
                   jax.ShapeDtypeStruct((steps, 2, CP), jnp.float32)),
        grid_spec=pltpu.PrefetchScalarGridSpec(
            num_scalar_prefetch=0,
            grid=(steps,),
            in_specs=[tile, _row_spec(), _row_spec(), _row_spec(),
                      pl.BlockSpec((CP, CP), lambda i: (0, 0))],
            out_specs=(tile, _stats_spec())),
        compiler_params=_compiler_params(("parallel",)),
    )(xraw, scale, shift, alpha, w)


def _dw_conv_fused(conv1_img, scale, shift, alpha, wdw, H, W, BH):
    N = conv1_img.shape[0]
    return pl.pallas_call(
        functools.partial(dw_conv_fused_kernel, H=H, W=W, BH=BH),
        out_shape=(jax.ShapeDtypeStruct((N, H, W, CP), jnp.float32),
                   jax.ShapeDtypeStruct((N, 2, CP), jnp.float32)),
        grid_spec=pltpu.PrefetchScalarGridSpec(
            num_scalar_prefetch=0,
            grid=(N,),
            in_specs=[pl.BlockSpec((None, H, W, CP), lambda n: (n, 0, 0, 0)),
                      _row_spec(), _row_spec(), _row_spec(),
                      pl.BlockSpec((9, CP), lambda n: (0, 0))],
            out_specs=(pl.BlockSpec((None, H, W, CP), lambda n: (n, 0, 0, 0)),
                       pl.BlockSpec((None, 2, CP), lambda n: (n, 0, 0))),
            scratch_shapes=[pltpu.VMEM((H + 2, W + 2, CP), jnp.float32)]),
        compiler_params=_compiler_params(("parallel",)),
    )(conv1_img, scale, shift, alpha, wdw)


def _bn_residual(conv, scale, shift, shortcut, tm):
    M = conv.shape[0]
    tile = pl.BlockSpec((tm, CP), lambda i: (i, 0))
    return pl.pallas_call(
        bn_residual_kernel,
        out_shape=jax.ShapeDtypeStruct((M, CP), jnp.float32),
        grid_spec=pltpu.PrefetchScalarGridSpec(
            num_scalar_prefetch=0,
            grid=(M // tm,),
            in_specs=[tile, _row_spec(), _row_spec(), tile],
            out_specs=tile),
        compiler_params=_compiler_params(("parallel",)),
        input_output_aliases={3: 0},        # reuse the (dead) shortcut buffer
    )(conv, scale, shift, shortcut)


# ---------------------------------------------------------------------------
# Forward pass (NHWC, channel-padded, M-flattened)
# ---------------------------------------------------------------------------
def _bn_scale_shift(partial_stats, gamma_row, beta_row, m):
    stats = jnp.sum(partial_stats, axis=0)             # (2, CP) combine partials
    mean = stats[0:1, :] / m
    var = stats[1:2, :] / m - mean * mean              # biased, train-mode BN
    inv = jax.lax.rsqrt(var + BN_EPS)
    scale = gamma_row * inv
    shift = beta_row - mean * scale
    return scale, shift


def _pick_tile_m(M):
    for tm in (2048, 1024, 512, 256, 128, 64, 32, 16, 8):
        if M % tm == 0:
            return tm
    # Fallback: largest multiple-of-8 divisor (sublane-aligned blocks).
    for tm in range(2048, 7, -8):
        if M % tm == 0:
            return tm
    return M  # TODO(synk): pad M up to a multiple of 8 for exotic shapes.


def _pick_bh(H):
    for bh in (8, 4, 2, 1):
        if H % bh == 0:
            return bh
    return 1


def residual_forward(x_nchw, packed_blocks, c):
    N, _, H, W = x_nchw.shape
    M = N * H * W
    tm = _pick_tile_m(M)
    bh = _pick_bh(H)

    x = jnp.transpose(x_nchw, (0, 2, 3, 1)).astype(jnp.float32)   # NHWC
    x = jnp.pad(x, ((0, 0), (0, 0), (0, 0), (0, CP - x.shape[-1])))
    shortcut = x.reshape(M, CP)

    nb = len(packed_blocks)
    # First 1x1 conv of the first block (no residual to fuse yet).
    conv1, stats1 = _pw_conv_stats(shortcut, packed_blocks[0]['w1'], tm)

    out = None
    for k, bp in enumerate(packed_blocks):
        # BN1 scale/shift from the accumulated stats.
        scale1, shift1 = _bn_scale_shift(stats1, bp['g1'], bp['b1'], M)
        # Depthwise 3x3 with fused BN1 + PReLU (+ stats2).
        conv2, stats2 = _dw_conv_fused(conv1.reshape(N, H, W, CP),
                                       scale1, shift1, bp['a1'], bp['wdw'],
                                       H, W, bh)
        scale2, shift2 = _bn_scale_shift(stats2, bp['g2'], bp['b2'], M)
        # Projection 1x1 conv with fused BN2 + PReLU (+ stats3).
        conv3, stats3 = _act_pw_conv_stats(conv2.reshape(M, CP), scale2, shift2,
                                           bp['a2'], bp['w3'], tm)
        scale3, shift3 = _bn_scale_shift(stats3, bp['g3'], bp['b3'], M)
        if k + 1 < nb:
            # Fuse BN3 + residual add into the next block's first 1x1 conv.
            shortcut, conv1, stats1 = _residual_pw_conv_stats(
                conv3, shortcut, scale3, shift3, packed_blocks[k + 1]['w1'], tm)
        else:
            out = _bn_residual(conv3, scale3, shift3, shortcut, tm)

    out = out.reshape(N, H, W, CP)[..., :c]
    return jnp.transpose(out, (0, 3, 1, 2))                        # back to NCHW


# ---------------------------------------------------------------------------
# Parameter construction / packing
# ---------------------------------------------------------------------------
def init_depth_wise_params(key, c, g, kh=3, kw=3):
    ks = jax.random.split(key, 11)
    p = {}
    p['w1'] = jax.random.normal(ks[0], (g, c, 1, 1), jnp.float32) / math.sqrt(c)
    p['wdw'] = jax.random.normal(ks[1], (g, 1, kh, kw), jnp.float32) / math.sqrt(kh * kw)
    p['w3'] = jax.random.normal(ks[2], (c, g, 1, 1), jnp.float32) / math.sqrt(g)
    p['g1'] = 1.0 + 0.1 * jax.random.normal(ks[3], (g,), jnp.float32)
    p['b1'] = 0.1 * jax.random.normal(ks[4], (g,), jnp.float32)
    p['a1'] = 0.25 + 0.1 * jax.random.normal(ks[5], (g,), jnp.float32)
    p['g2'] = 1.0 + 0.1 * jax.random.normal(ks[6], (g,), jnp.float32)
    p['b2'] = 0.1 * jax.random.normal(ks[7], (g,), jnp.float32)
    p['a2'] = 0.25 + 0.1 * jax.random.normal(ks[8], (g,), jnp.float32)
    p['g3'] = 1.0 + 0.1 * jax.random.normal(ks[9], (c,), jnp.float32)
    p['b3'] = 0.1 * jax.random.normal(ks[10], (c,), jnp.float32)
    return p


def _pad2d(a, rows, cols):
    return jnp.zeros((rows, cols), jnp.float32).at[:a.shape[0], :a.shape[1]].set(a)


def _pad_row(v):
    return _pad2d(v.reshape(1, -1), 1, CP)


def pack_depth_wise_params(p, c, g, kh=3, kw=3):
    assert c <= CP and g <= CP, "channel dims above 128 need a channel grid axis"
    # TODO(synk): shrink the padded lane width when production c,g << 128.
    return {
        'w1': _pad2d(p['w1'].reshape(g, c).T, CP, CP).astype(MXU_DTYPE),   # (Cin=c, Cout=g)
        'wdw': _pad2d(p['wdw'].reshape(g, kh * kw).T, kh * kw, CP),         # (9, g) taps, f32
        'w3': _pad2d(p['w3'].reshape(c, g).T, CP, CP).astype(MXU_DTYPE),   # (Cin=g, Cout=c)
        'g1': _pad_row(p['g1']), 'b1': _pad_row(p['b1']), 'a1': _pad_row(p['a1']),
        'g2': _pad_row(p['g2']), 'b2': _pad_row(p['b2']), 'a2': _pad_row(p['a2']),
        'g3': _pad_row(p['g3']), 'b3': _pad_row(p['b3']),
    }


# ---------------------------------------------------------------------------
# Plain-JAX reference (training-mode BN, biased variance)
#   matmul_dtype=bf16 reproduces the kernel's MXU operand precision; f32 gives the
#   exact PyTorch-style reference (used as a loose sanity bound).
# ---------------------------------------------------------------------------
def _conv_bn_ref(x, w, gamma, beta, stride, padding, groups, conv_dtype=jnp.float32):
    conv = jax.lax.conv_general_dilated(
        x.astype(conv_dtype), w.astype(conv_dtype), window_strides=stride,
        padding=[(padding[0], padding[0]), (padding[1], padding[1])],
        dimension_numbers=("NCHW", "OIHW", "NCHW"),
        feature_group_count=groups,
        preferred_element_type=jnp.float32)
    mean = conv.mean(axis=(0, 2, 3), keepdims=True)
    var = conv.var(axis=(0, 2, 3), keepdims=True)
    y = (conv - mean) * jax.lax.rsqrt(var + BN_EPS)
    return y * gamma.reshape(1, -1, 1, 1) + beta.reshape(1, -1, 1, 1)


def _prelu_ref(y, alpha):
    return jnp.where(y >= 0.0, y, alpha.reshape(1, -1, 1, 1) * y)


def depth_wise_ref(x, p, matmul_dtype=jnp.float32):
    g = p['w1'].shape[0]
    y = _prelu_ref(_conv_bn_ref(x, p['w1'], p['g1'], p['b1'], (1, 1), (0, 0), 1,
                                matmul_dtype), p['a1'])
    y = _prelu_ref(_conv_bn_ref(y, p['wdw'], p['g2'], p['b2'], (1, 1), (1, 1), g,
                                jnp.float32), p['a2'])      # depthwise stays f32
    y = _conv_bn_ref(y, p['w3'], p['g3'], p['b3'], (1, 1), (0, 0), 1, matmul_dtype)
    return x + y


def residual_ref(x, raw_blocks, matmul_dtype=jnp.float32):
    for p in raw_blocks:
        x = depth_wise_ref(x, p, matmul_dtype)
    return x


# ---------------------------------------------------------------------------
if __name__ == "__main__":
    N, c, H, W = 2, 4, 16, 16
    groups, num_block = 8, 2

    key = jax.random.PRNGKey(0)
    kx, kp = jax.random.split(key)
    x = jax.random.normal(kx, (N, c, H, W), jnp.float32)

    raw_blocks = [init_depth_wise_params(k, c, groups)
                  for k in jax.random.split(kp, num_block)]
    packed_blocks = [pack_depth_wise_params(p, c, groups) for p in raw_blocks]

    fwd = jax.jit(residual_forward, static_argnums=(2,))
    out = jax.block_until_ready(fwd(x, packed_blocks, c))
    assert out.shape == (N, c, H, W), out.shape

    # 1) Matched-precision reference (bf16 MXU operands, like the kernel): tight check.
    ref_matched = residual_ref(x, raw_blocks, matmul_dtype=MXU_DTYPE)
    err_matched = float(jnp.max(jnp.abs(out - ref_matched)))
    assert jnp.allclose(out, ref_matched, atol=2e-2, rtol=2e-2), err_matched

    # 2) Full-f32 reference: loose sanity bound on the deliberate bf16 MXU tradeoff.
    ref_f32 = residual_ref(x, raw_blocks, matmul_dtype=jnp.float32)
    err_f32 = float(jnp.max(jnp.abs(out - ref_f32)))
    assert jnp.allclose(out, ref_f32, atol=2.5e-1, rtol=2.5e-1), err_f32

    print("KERNEL_OK")
</pallas_src>

<mosaic_0001>
module attributes {stable_mosaic.version = 11 : i64} {
  func.func @pw_conv_stats_kernel(%arg0: i32, %arg1: memref<512x128xf32, #tpu.memory_space<vmem>>, %arg2: memref<128x128xbf16, #tpu.memory_space<vmem>>, %arg3: memref<512x128xf32, #tpu.memory_space<vmem>>, %arg4: memref<1x2x128xf32, #tpu.memory_space<vmem>>) attributes {dimension_semantics = [#tpu.dimension_semantics<parallel>], iteration_bounds = array<i64: 1>, scalar_prefetch = 0 : i64, scratch_operands = 0 : i64, tpu.core_type = #tpu.core_type<tc>, window_params = [{transform_indices = @transform_0, window_bounds = array<i64: 512, 128>}, {pipeline_mode = #tpu.pipeline_mode<synchronous>, transform_indices = @transform_1, window_bounds = array<i64: 128, 128>}, {transform_indices = @transform_2, window_bounds = array<i64: 512, 128>}, {transform_indices = @transform_3, window_bounds = array<i64: 1, 2, 128>}]} {
    %c0 = arith.constant 0 : index
    %c0_0 = arith.constant 0 : index
    %0 = vector.load %arg1[%c0, %c0_0] : memref<512x128xf32, #tpu.memory_space<vmem>>, vector<512x128xf32>
    %1 = arith.truncf %0 : vector<512x128xf32> to vector<512x128xbf16>
    %c0_1 = arith.constant 0 : index
    %c0_2 = arith.constant 0 : index
    %2 = vector.load %arg2[%c0_1, %c0_2] : memref<128x128xbf16, #tpu.memory_space<vmem>>, vector<128x128xbf16>
    %cst = arith.constant dense<0.000000e+00> : vector<512x128xf32>
    %3 = tpu.matmul %1, %2, %cst {dimension_numbers = #tpu.dot_dimension_numbers<[1], [0], [0], [1], [0, 0, 1, 1], [], []>} : vector<512x128xbf16>, vector<128x128xbf16>, vector<512x128xf32> -> vector<512x128xf32>
    %c0_3 = arith.constant 0 : index
    %c0_4 = arith.constant 0 : index
    %4 = vector.load %arg3[%c0_3, %c0_4] : memref<512x128xf32, #tpu.memory_space<vmem>>, vector<512x128xf32>
    tpu.vector_store %arg3[%c0_3, %c0_4], %3 {strides = array<i32>} : memref<512x128xf32, #tpu.memory_space<vmem>>, vector<512x128xf32>,
    %cst_5 = arith.constant dense<0.000000e+00> : vector<128xf32>
    %5 = vector.multi_reduction <add>, %3, %cst_5 [0] : vector<512x128xf32> to vector<128xf32>
    %6 = vector.shape_cast %5 : vector<128xf32> to vector<1x128xf32>
    %c0_6 = arith.constant 0 : index
    %c0_7 = arith.constant 0 : index
    %c0_8 = arith.constant 0 : index
    %7 = vector.load %arg4[%c0_6, %c0_7, %c0_8] : memref<1x2x128xf32, #tpu.memory_space<vmem>>, vector<1x1x128xf32>
    %8 = vector.shape_cast %7 : vector<1x1x128xf32> to vector<1x128xf32>
    %9 = vector.shape_cast %6 : vector<1x128xf32> to vector<1x1x128xf32>
    tpu.vector_store %arg4[%c0_6, %c0_7, %c0_8], %9 {strides = array<i32>} : memref<1x2x128xf32, #tpu.memory_space<vmem>>, vector<1x1x128xf32>,
    %10 = arith.mulf %3, %3 : vector<512x128xf32>
    %cst_9 = arith.constant dense<0.000000e+00> : vector<128xf32>
    %11 = vector.multi_reduction <add>, %10, %cst_9 [0] : vector<512x128xf32> to vector<128xf32>
    %12 = vector.shape_cast %11 : vector<128xf32> to vector<1x128xf32>
    %c0_10 = arith.constant 0 : index
    %c1 = arith.constant 1 : index
    %c0_11 = arith.constant 0 : index
    %13 = vector.load %arg4[%c0_10, %c1, %c0_11] : memref<1x2x128xf32, #tpu.memory_space<vmem>>, vector<1x1x128xf32>
    %14 = vector.shape_cast %13 : vector<1x1x128xf32> to vector<1x128xf32>
    %15 = vector.shape_cast %12 : vector<1x128xf32> to vector<1x1x128xf32>
    tpu.vector_store %arg4[%c0_10, %c1, %c0_11], %15 {strides = array<i32>} : memref<1x2x128xf32, #tpu.memory_space<vmem>>, vector<1x1x128xf32>,
    return
  }
  func.func @transform_0(%arg0: i32) -> (i32, i32) {
    %c0_i32 = arith.constant 0 : i32
    %c0_i32_0 = arith.constant 0 : i32
    return %arg0, %c0_i32 : i32, i32
  }
  func.func @transform_1(%arg0: i32) -> (i32, i32) {
    %c0_i32 = arith.constant 0 : i32
    %c0_i32_0 = arith.constant 0 : i32
    %c0_i32_1 = arith.constant 0 : i32
    return %c0_i32, %c0_i32_0 : i32, i32
  }
  func.func @transform_2(%arg0: i32) -> (i32, i32) {
    %c0_i32 = arith.constant 0 : i32
    %c0_i32_0 = arith.constant 0 : i32
    return %arg0, %c0_i32 : i32, i32
  }
  func.func @transform_3(%arg0: i32) -> (i32, i32, i32) {
    %c0_i32 = arith.constant 0 : i32
    %c0_i32_0 = arith.constant 0 : i32
    %c0_i32_1 = arith.constant 0 : i32
    return %arg0, %c0_i32, %c0_i32_0 : i32, i32, i32
  }
}

module attributes {stable_mosaic.version = 11 : i64} {
  func.func @dw_conv_fused_kernel(%arg0: i32, %arg1: memref<1x16x16x128xf32, #tpu.memory_space<vmem>>, %arg2: memref<1x128xf32, #tpu.memory_space<vmem>>, %arg3: memref<1x128xf32, #tpu.memory_space<vmem>>, %arg4: memref<1x128xf32, #tpu.memory_space<vmem>>, %arg5: memref<9x128xf32, #tpu.memory_space<vmem>>, %arg6: memref<1x16x16x128xf32, #tpu.memory_space<vmem>>, %arg7: memref<1x2x128xf32, #tpu.memory_space<vmem>>, %arg8: memref<18x18x128xf32, #tpu.memory_space<vmem>>) attributes {dimension_semantics = [#tpu.dimension_semantics<parallel>], iteration_bounds = array<i64: 2>, scalar_prefetch = 0 : i64, scratch_operands = 1 : i64, tpu.core_type = #tpu.core_type<tc>, window_params = [{transform_indices = @transform_0, window_bounds = array<i64: 1, 16, 16, 128>}, {pipeline_mode = #tpu.pipeline_mode<synchronous>, transform_indices = @transform_1, window_bounds = array<i64: 1, 128>}, {pipeline_mode = #tpu.pipeline_mode<synchronous>, transform_indices = @transform_2, window_bounds = array<i64: 1, 128>}, {pipeline_mode = #tpu.pipeline_mode<synchronous>, transform_indices = @transform_3, window_bounds = array<i64: 1, 128>}, {pipeline_mode = #tpu.pipeline_mode<synchronous>, transform_indices = @transform_4, window_bounds = array<i64: 9, 128>}, {transform_indices = @transform_5, window_bounds = array<i64: 1, 16, 16, 128>}, {transform_indices = @transform_6, window_bounds = array<i64: 1, 2, 128>}]} {
    %c0 = arith.constant 0 : index
    %c0_0 = arith.constant 0 : index
    %c0_1 = arith.constant 0 : index
    %c0_2 = arith.constant 0 : index
    %0 = vector.load %arg1[%c0, %c0_0, %c0_1, %c0_2] : memref<1x16x16x128xf32, #tpu.memory_space<vmem>>, vector<1x16x16x128xf32>
    %1 = vector.shape_cast %0 : vector<1x16x16x128xf32> to vector<16x16x128xf32>
    %c0_3 = arith.constant 0 : index
    %c0_4 = arith.constant 0 : index
    %2 = vector.load %arg2[%c0_3, %c0_4] : memref<1x128xf32, #tpu.memory_space<vmem>>, vector<1x128xf32>
    %3 = vector.shape_cast %2 : vector<1x128xf32> to vector<1x1x128xf32>
    %4 = vector.broadcast %3 : vector<1x1x128xf32> to vector<16x16x128xf32>
    %5 = arith.mulf %1, %4 : vector<16x16x128xf32>
    %c0_5 = arith.constant 0 : index
    %c0_6 = arith.constant 0 : index
    %6 = vector.load %arg3[%c0_5, %c0_6] : memref<1x128xf32, #tpu.memory_space<vmem>>, vector<1x128xf32>
    %7 = vector.shape_cast %6 : vector<1x128xf32> to vector<1x1x128xf32>
    %8 = vector.broadcast %7 : vector<1x1x128xf32> to vector<16x16x128xf32>
    %9 = arith.addf %5, %8 : vector<16x16x128xf32>
    %cst = arith.constant 0.000000e+00 : f32
    %10 = vector.broadcast %cst : f32 to vector<16x16x128xf32>
    %11 = arith.cmpf oge, %9, %10 : vector<16x16x128xf32>
    %c0_7 = arith.constant 0 : index
    %c0_8 = arith.constant 0 : index
    %12 = vector.load %arg4[%c0_7, %c0_8] : memref<1x128xf32, #tpu.memory_space<vmem>>, vector<1x128xf32>
    %13 = vector.shape_cast %12 : vector<1x128xf32> to vector<1x1x128xf32>
    %14 = vector.broadcast %13 : vector<1x1x128xf32> to vector<16x16x128xf32>
    %15 = arith.mulf %14, %9 : vector<16x16x128xf32>
    %16 = arith.select %11, %9, %15 : vector<16x16x128xi1>, vector<16x16x128xf32>
    %cst_9 = arith.constant 0.000000e+00 : f32
    %17 = vector.broadcast %cst_9 : f32 to vector<1x18x128xf32>
    %c0_10 = arith.constant 0 : index
    %c0_11 = arith.constant 0 : index
    %c0_12 = arith.constant 0 : index
    %18 = vector.load %arg8[%c0_10, %c0_11, %c0_12] : memref<18x18x128xf32, #tpu.memory_space<vmem>>, vector<1x18x128xf32>
    tpu.vector_store %arg8[%c0_10, %c0_11, %c0_12], %17 {strides = array<i32>} : memref<18x18x128xf32, #tpu.memory_space<vmem>>, vector<1x18x128xf32>,
    %c17 = arith.constant 17 : index
    %c0_13 = arith.constant 0 : index
    %c0_14 = arith.constant 0 : index
    %19 = vector.load %arg8[%c17, %c0_13, %c0_14] : memref<18x18x128xf32, #tpu.memory_space<vmem>>, vector<1x18x128xf32>
    tpu.vector_store %arg8[%c17, %c0_13, %c0_14], %17 {strides = array<i32>} : memref<18x18x128xf32, #tpu.memory_space<vmem>>, vector<1x18x128xf32>,
    %cst_15 = arith.constant 0.000000e+00 : f32
    %20 = vector.broadcast %cst_15 : f32 to vector<18x1x128xf32>
    %c0_16 = arith.constant 0 : index
    %c0_17 = arith.constant 0 : index
    %c0_18 = arith.constant 0 : index
    %21 = vector.load %arg8[%c0_16, %c0_17, %c0_18] : memref<18x18x128xf32, #tpu.memory_space<vmem>>, vector<18x1x128xf32>
    tpu.vector_store %arg8[%c0_16, %c0_17, %c0_18], %20 {strides = array<i32>} : memref<18x18x128xf32, #tpu.memory_space<vmem>>, vector<18x1x128xf32>,
    %c0_19 = arith.constant 0 : index
    %c17_20 = arith.constant 17 : index
    %c0_21 = arith.constant 0 : index
    %22 = vector.load %arg8[%c0_19, %c17_20, %c0_21] : memref<18x18x128xf32, #tpu.memory_space<vmem>>, vector<18x1x128xf32>
    tpu.vector_store %arg8[%c0_19, %c17_20, %c0_21], %20 {strides = array<i32>} : memref<18x18x128xf32, #tpu.memory_space<vmem>>, vector<18x1x128xf32>,
    %c1 = arith.constant 1 : index
    %c1_22 = arith.constant 1 : index
    %c0_23 = arith.constant 0 : index
    %23 = vector.load %arg8[%c1, %c1_22, %c0_23] : memref<18x18x128xf32, #tpu.memory_space<vmem>>, vector<16x16x128xf32>
    tpu.vector_store %arg8[%c1, %c1_22, %c0_23], %16 {strides = array<i32>} : memref<18x18x128xf32, #tpu.memory_space<vmem>>, vector<16x16x128xf32>,
    %c0_24 = arith.constant 0 : index
    %c0_25 = arith.constant 0 : index
    %24 = vector.load %arg5[%c0_24, %c0_25] : memref<9x128xf32, #tpu.memory_space<vmem>>, vector<9x128xf32>
    %cst_26 = arith.constant 0.000000e+00 : f32
    %25 = vector.broadcast %cst_26 : f32 to vector<1x128xf32>
    %cst_27 = arith.constant 0.000000e+00 : f32
    %26 = vector.broadcast %cst_27 : f32 to vector<1x128xf32>
    %c0_i32 = arith.constant 0 : i32
    %c2_i32 = arith.constant 2 : i32
    %27 = arith.addi %c0_i32, %c2_i32 : i32
    %c1_i32 = arith.constant 1 : i32
    %28:2 = scf.for %arg9 = %c0_i32 to %27 step %c1_i32 iter_args(%arg10 = %25, %arg11 = %26) -> (vector<1x128xf32>, vector<1x128xf32>)  : i32 {
      %c8_i32 = arith.constant 8 : i32
      %35 = arith.muli %arg9, %c8_i32 : i32
      %36 = tpu.assume_multiple %35, 8 : i32
      %cst_35 = arith.constant 0.000000e+00 : f32
      %37 = vector.broadcast %cst_35 : f32 to vector<8x16x128xf32>
      %c0_i32_36 = arith.constant 0 : i32
      %38 = arith.addi %36, %c0_i32_36 : i32
      %39 = arith.index_cast %38 : i32 to index
      %c0_37 = arith.constant 0 : index
      %c0_38 = arith.constant 0 : index
      %40 = vector.load %arg8[%39, %c0_37, %c0_38] : memref<18x18x128xf32, #tpu.memory_space<vmem>>, vector<8x16x128xf32>
      %41 = vector.extract_strided_slice %24 {offsets = [0, 0], sizes = [1, 128], strides = [1, 1]} : vector<9x128xf32> to vector<1x128xf32>
      %42 = vector.shape_cast %41 : vector<1x128xf32> to vector<1x1x128xf32>
      %43 = vector.broadcast %42 : vector<1x1x128xf32> to vector<8x16x128xf32>
      %44 = arith.mulf %40, %43 : vector<8x16x128xf32>
      %45 = arith.addf %37, %44 : vector<8x16x128xf32>
      %c0_i32_39 = arith.constant 0 : i32
      %46 = arith.addi %36, %c0_i32_39 : i32
      %47 = arith.index_cast %46 : i32 to index
      %c1_40 = arith.constant 1 : index
      %c0_41 = arith.constant 0 : index
      %48 = vector.load %arg8[%47, %c1_40, %c0_41] : memref<18x18x128xf32, #tpu.memory_space<vmem>>, vector<8x16x128xf32>
      %49 = vector.extract_strided_slice %24 {offsets = [1, 0], sizes = [1, 128], strides = [1, 1]} : vector<9x128xf32> to vector<1x128xf32>
      %50 = vector.shape_cast %49 : vector<1x128xf32> to vector<1x1x128xf32>
      %51 = vector.broadcast %50 : vector<1x1x128xf32> to vector<8x16x128xf32>
      %52 = arith.mulf %48, %51 : vector<8x16x128xf32>
      %53 = arith.addf %45, %52 : vector<8x16x128xf32>
      %c0_i32_42 = arith.constant 0 : i32
      %54 = arith.addi %36, %c0_i32_42 : i32
      %55 = arith.index_cast %54 : i32 to index
      %c2 = arith.constant 2 : index
      %c0_43 = arith.constant 0 : index
      %56 = vector.load %arg8[%55, %c2, %c0_43] : memref<18x18x128xf32, #tpu.memory_space<vmem>>, vector<8x16x128xf32>
      %57 = vector.extract_strided_slice %24 {offsets = [2, 0], sizes = [1, 128], strides = [1, 1]} : vector<9x128xf32> to vector<1x128xf32>
      %58 = vector.shape_cast %57 : vector<1x128xf32> to vector<1x1x128xf32>
      %59 = vector.broadcast %58 : vector<1x1x128xf32> to vector<8x16x128xf32>
      %60 = arith.mulf %56, %59 : vector<8x16x128xf32>
      %61 = arith.addf %53, %60 : vector<8x16x128xf32>
      %c1_i32_44 = arith.constant 1 : i32
      %62 = arith.addi %36, %c1_i32_44 : i32
      %63 = arith.index_cast %62 : i32 to index
      %c0_45 = arith.constant 0 : index
      %c0_46 = arith.constant 0 : index
      %64 = vector.load %arg8[%63, %c0_45, %c0_46] : memref<18x18x128xf32, #tpu.memory_space<vmem>>, vector<8x16x128xf32>
      %65 = vector.extract_strided_slice %24 {offsets = [3, 0], sizes = [1, 128], strides = [1, 1]} : vector<9x128xf32> to vector<1x128xf32>
      %66 = vector.shape_cast %65 : vector<1x128xf32> to vector<1x1x128xf32>
      %67 = vector.broadcast %66 : vector<1x1x128xf32> to vector<8x16x128xf32>
      %68 = arith.mulf %64, %67 : vector<8x16x128xf32>
      %69 = arith.addf %61, %68 : vector<8x16x128xf32>
      %c1_i32_47 = arith.constant 1 : i32
      %70 = arith.addi %36, %c1_i32_47 : i32
      %71 = arith.index_cast %70 : i32 to index
      %c1_48 = arith.constant 1 : index
      %c0_49 = arith.constant 0 : index
      %72 = vector.load %arg8[%71, %c1_48, %c0_49] : memref<18x18x128xf32, #tpu.memory_space<vmem>>, vector<8x16x128xf32>
      %73 = vector.extract_strided_slice %24 {offsets = [4, 0], sizes = [1, 128], strides = [1, 1]} : vector<9x128xf32> to vector<1x128xf32>
      %74 = vector.shape_cast %73 : vector<1x128xf32> to vector<1x1x128xf32>
      %75 = vector.broadcast %74 : vector<1x1x128xf32> to vector<8x16x128xf32>
      %76 = arith.mulf %72, %75 : vector<8x16x128xf32>
      %77 = arith.addf %69, %76 : vector<8x16x128xf32>
      %c1_i32_50 = arith.constant 1 : i32
      %78 = arith.addi %36, %c1_i32_50 : i32
      %79 = arith.index_cast %78 : i32 to index
      %c2_51 = arith.constant 2 : index
      %c0_52 = arith.constant 0 : index
      %80 = vector.load %arg8[%79, %c2_51, %c0_52] : memref<18x18x128xf32, #tpu.memory_space<vmem>>, vector<8x16x128xf32>
      %81 = vector.extract_strided_slice %24 {offsets = [5, 0], sizes = [1, 128], strides = [1, 1]} : vector<9x128xf32> to vector<1x128xf32>
      %82 = vector.shape_cast %81 : vector<1x128xf32> to vector<1x1x128xf32>
      %83 = vector.broadcast %82 : vector<1x1x128xf32> to vector<8x16x128xf32>
      %84 = arith.mulf %80, %83 : vector<8x16x128xf32>
      %85 = arith.addf %77, %84 : vector<8x16x128xf32>
      %c2_i32_53 = arith.constant 2 : i32
      %86 = arith.addi %36, %c2_i32_53 : i32
      %87 = arith.index_cast %86 : i32 to index
      %c0_54 = arith.constant 0 : index
      %c0_55 = arith.constant 0 : index
      %88 = vector.load %arg8[%87, %c0_54, %c0_55] : memref<18x18x128xf32, #tpu.memory_space<vmem>>, vector<8x16x128xf32>
      %89 = vector.extract_strided_slice %24 {offsets = [6, 0], sizes = [1, 128], strides = [1, 1]} : vector<9x128xf32> to vector<1x128xf32>
      %90 = vector.shape_cast %89 : vector<1x128xf32> to vector<1x1x128xf32>
      %91 = vector.broadcast %90 : vector<1x1x128xf32> to vector<8x16x128xf32>
      %92 = arith.mulf %88, %91 : vector<8x16x128xf32>
      %93 = arith.addf %85, %92 : vector<8x16x128xf32>
      %c2_i32_56 = arith.constant 2 : i32
      %94 = arith.addi %36, %c2_i32_56 : i32
      %95 = arith.index_cast %94 : i32 to index
      %c1_57 = arith.constant 1 : index
      %c0_58 = arith.constant 0 : index
      %96 = vector.load %arg8[%95, %c1_57, %c0_58] : memref<18x18x128xf32, #tpu.memory_space<vmem>>, vector<8x16x128xf32>
      %97 = vector.extract_strided_slice %24 {offsets = [7, 0], sizes = [1, 128], strides = [1, 1]} : vector<9x128xf32> to vector<1x128xf32>
      %98 = vector.shape_cast %97 : vector<1x128xf32> to vector<1x1x128xf32>
      %99 = vector.broadcast %98 : vector<1x1x128xf32> to vector<8x16x128xf32>
      %100 = arith.mulf %96, %99 : vector<8x16x128xf32>
      %101 = arith.addf %93, %100 : vector<8x16x128xf32>
      %c2_i32_59 = arith.constant 2 : i32
      %102 = arith.addi %36, %c2_i32_59 : i32
      %103 = arith.index_cast %102 : i32 to index
      %c2_60 = arith.constant 2 : index
      %c0_61 = arith.constant 0 : index
      %104 = vector.load %arg8[%103, %c2_60, %c0_61] : memref<18x18x128xf32, #tpu.memory_space<vmem>>, vector<8x16x128xf32>
      %105 = vector.extract_strided_slice %24 {offsets = [8, 0], sizes = [1, 128], strides = [1, 1]} : vector<9x128xf32> to vector<1x128xf32>
      %106 = vector.shape_cast %105 : vector<1x128xf32> to vector<1x1x128xf32>
      %107 = vector.broadcast %106 : vector<1x1x128xf32> to vector<8x16x128xf32>
      %108 = arith.mulf %104, %107 : vector<8x16x128xf32>
      %109 = arith.addf %101, %108 : vector<8x16x128xf32>
      %c0_62 = arith.constant 0 : index
      %110 = arith.index_cast %36 : i32 to index
      %c0_63 = arith.constant 0 : index
      %c0_64 = arith.constant 0 : index
      %111 = vector.load %arg6[%c0_62, %110, %c0_63, %c0_64] : memref<1x16x16x128xf32, #tpu.memory_space<vmem>>, vector<1x8x16x128xf32>
      %112 = vector.shape_cast %111 : vector<1x8x16x128xf32> to vector<8x16x128xf32>
      %113 = vector.shape_cast %109 : vector<8x16x128xf32> to vector<1x8x16x128xf32>
      tpu.vector_store %arg6[%c0_62, %110, %c0_63, %c0_64], %113 {strides = array<i32>} : memref<1x16x16x128xf32, #tpu.memory_space<vmem>>, vector<1x8x16x128xf32>,
      %cst_65 = arith.constant dense<0.000000e+00> : vector<16x128xf32>
      %114 = vector.multi_reduction <add>, %109, %cst_65 [0] : vector<8x16x128xf32> to vector<16x128xf32>
      %cst_66 = arith.constant dense<0.000000e+00> : vector<128xf32>
      %115 = vector.multi_reduction <add>, %114, %cst_66 [0] : vector<16x128xf32> to vector<128xf32>
      %116 = vector.shape_cast %115 : vector<128xf32> to vector<1x128xf32>
      %117 = arith.addf %arg10, %116 : vector<1x128xf32>
      %118 = arith.mulf %109, %109 : vector<8x16x128xf32>
      %cst_67 = arith.constant dense<0.000000e+00> : vector<16x128xf32>
      %119 = vector.multi_reduction <add>, %118, %cst_67 [0] : vector<8x16x128xf32> to vector<16x128xf32>
      %cst_68 = arith.constant dense<0.000000e+00> : vector<128xf32>
      %120 = vector.multi_reduction <add>, %119, %cst_68 [0] : vector<16x128xf32> to vector<128xf32>
      %121 = vector.shape_cast %120 : vector<128xf32> to vector<1x128xf32>
      %122 = arith.addf %arg11, %121 : vector<1x128xf32>
      scf.yield %117, %122 : vector<1x128xf32>, vector<1x128xf32>
    }
    %c2_i32_28 = arith.constant 2 : i32
    %c0_29 = arith.constant 0 : index
    %c0_30 = arith.constant 0 : index
    %c0_31 = arith.constant 0 : index
    %29 = vector.load %arg7[%c0_29, %c0_30, %c0_31] : memref<1x2x128xf32, #tpu.memory_space<vmem>>, vector<1x1x128xf32>
    %30 = vector.shape_cast %29 : vector<1x1x128xf32> to vector<1x128xf32>
    %31 = vector.shape_cast %28#0 : vector<1x128xf32> to vector<1x1x128xf32>
    tpu.vector_store %arg7[%c0_29, %c0_30, %c0_31], %31 {strides = array<i32>} : memref<1x2x128xf32, #tpu.memory_space<vmem>>, vector<1x1x128xf32>,
    %c0_32 = arith.constant 0 : index
    %c1_33 = arith.constant 1 : index
    %c0_34 = arith.constant 0 : index
    %32 = vector.load %arg7[%c0_32, %c1_33, %c0_34] : memref<1x2x128xf32, #tpu.memory_space<vmem>>, vector<1x1x128xf32>
    %33 = vector.shape_cast %32 : vector<1x1x128xf32> to vector<1x128xf32>
    %34 = vector.shape_cast %28#1 : vector<1x128xf32> to vector<1x1x128xf32>
    tpu.vector_store %arg7[%c0_32, %c1_33, %c0_34], %34 {strides = array<i32>} : memref<1x2x128xf32, #tpu.memory_space<vmem>>, vector<1x1x128xf32>,
    return
  }
  func.func @transform_0(%arg0: i32) -> (i32, i32, i32, i32) {
    %c0_i32 = arith.constant 0 : i32
    %c0_i32_0 = arith.constant 0 : i32
    %c0_i32_1 = arith.constant 0 : i32
    %c0_i32_2 = arith.constant 0 : i32
    return %arg0, %c0_i32, %c0_i32_0, %c0_i32_1 : i32, i32, i32, i32
  }
  func.func @transform_1(%arg0: i32) -> (i32, i32) {
    %c0_i32 = arith.constant 0 : i32
    %c0_i32_0 = arith.constant 0 : i32
    %c0_i32_1 = arith.constant 0 : i32
    return %c0_i32, %c0_i32_0 : i32, i32
  }
  func.func @transform_2(%arg0: i32) -> (i32, i32) {
    %c0_i32 = arith.constant 0 : i32
    %c0_i32_0 = arith.constant 0 : i32
    %c0_i32_1 = arith.constant 0 : i32
    return %c0_i32, %c0_i32_0 : i32, i32
  }
  func.func @transform_3(%arg0: i32) -> (i32, i32) {
    %c0_i32 = arith.constant 0 : i32
    %c0_i32_0 = arith.constant 0 : i32
    %c0_i32_1 = arith.constant 0 : i32
    return %c0_i32, %c0_i32_0 : i32, i32
  }
  func.func @transform_4(%arg0: i32) -> (i32, i32) {
    %c0_i32 = arith.constant 0 : i32
    %c0_i32_0 = arith.constant 0 : i32
    %c0_i32_1 = arith.constant 0 : i32
    return %c0_i32, %c0_i32_0 : i32, i32
  }
  func.func @transform_5(%arg0: i32) -> (i32, i32, i32, i32) {
    %c0_i32 = arith.constant 0 : i32
    %c0_i32_0 = arith.constant 0 : i32
    %c0_i32_1 = arith.constant 0 : i32
    %c0_i32_2 = arith.constant 0 : i32
    return %arg0, %c0_i32, %c0_i32_0, %c0_i32_1 : i32, i32, i32, i32
  }
  func.func @transform_6(%arg0: i32) -> (i32, i32, i32) {
    %c0_i32 = arith.constant 0 : i32
    %c0_i32_0 = arith.constant 0 : i32
    %c0_i32_1 = arith.constant 0 : i32
    return %arg0, %c0_i32, %c0_i32_0 : i32, i32, i32
  }
}

module attributes {stable_mosaic.version = 11 : i64} {
  func.func @residual_pw_conv_stats_kernel(%arg0: i32, %arg1: memref<512x128xf32, #tpu.memory_space<vmem>>, %arg2: memref<512x128xf32, #tpu.memory_space<vmem>>, %arg3: memref<1x128xf32, #tpu.memory_space<vmem>>, %arg4: memref<1x128xf32, #tpu.memory_space<vmem>>, %arg5: memref<128x128xbf16, #tpu.memory_space<vmem>>, %arg6: memref<512x128xf32, #tpu.memory_space<vmem>>, %arg7: memref<512x128xf32, #tpu.memory_space<vmem>>, %arg8: memref<1x2x128xf32, #tpu.memory_space<vmem>>) attributes {dimension_semantics = [#tpu.dimension_semantics<parallel>], iteration_bounds = array<i64: 1>, scalar_prefetch = 0 : i64, scratch_operands = 0 : i64, tpu.core_type = #tpu.core_type<tc>, window_params = [{transform_indices = @transform_0, window_bounds = array<i64: 512, 128>}, {transform_indices = @transform_1, window_bounds = array<i64: 512, 128>}, {pipeline_mode = #tpu.pipeline_mode<synchronous>, transform_indices = @transform_2, window_bounds = array<i64: 1, 128>}, {pipeline_mode = #tpu.pipeline_mode<synchronous>, transform_indices = @transform_3, window_bounds = array<i64: 1, 128>}, {pipeline_mode = #tpu.pipeline_mode<synchronous>, transform_indices = @transform_4, window_bounds = array<i64: 128, 128>}, {transform_indices = @transform_5, window_bounds = array<i64: 512, 128>}, {transform_indices = @transform_6, window_bounds = array<i64: 512, 128>}, {transform_indices = @transform_7, window_bounds = array<i64: 1, 2, 128>}]} {
    %c0 = arith.constant 0 : index
    %c0_0 = arith.constant 0 : index
    %0 = vector.load %arg2[%c0, %c0_0] : memref<512x128xf32, #tpu.memory_space<vmem>>, vector<512x128xf32>
    %c0_1 = arith.constant 0 : index
    %c0_2 = arith.constant 0 : index
    %1 = vector.load %arg1[%c0_1, %c0_2] : memref<512x128xf32, #tpu.memory_space<vmem>>, vector<512x128xf32>
    %c0_3 = arith.constant 0 : index
    %c0_4 = arith.constant 0 : index
    %2 = vector.load %arg3[%c0_3, %c0_4] : memref<1x128xf32, #tpu.memory_space<vmem>>, vector<1x128xf32>
    %3 = vector.broadcast %2 : vector<1x128xf32> to vector<512x128xf32>
    %4 = arith.mulf %1, %3 : vector<512x128xf32>
    %5 = arith.addf %0, %4 : vector<512x128xf32>
    %c0_5 = arith.constant 0 : index
    %c0_6 = arith.constant 0 : index
    %6 = vector.load %arg4[%c0_5, %c0_6] : memref<1x128xf32, #tpu.memory_space<vmem>>, vector<1x128xf32>
    %7 = vector.broadcast %6 : vector<1x128xf32> to vector<512x128xf32>
    %8 = arith.addf %5, %7 : vector<512x128xf32>
    %c0_7 = arith.constant 0 : index
    %c0_8 = arith.constant 0 : index
    %9 = vector.load %arg6[%c0_7, %c0_8] : memref<512x128xf32, #tpu.memory_space<vmem>>, vector<512x128xf32>
    tpu.vector_store %arg6[%c0_7, %c0_8], %8 {strides = array<i32>} : memref<512x128xf32, #tpu.memory_space<vmem>>, vector<512x128xf32>,
    %10 = arith.truncf %8 : vector<512x128xf32> to vector<512x128xbf16>
    %c0_9 = arith.constant 0 : index
    %c0_10 = arith.constant 0 : index
    %11 = vector.load %arg5[%c0_9, %c0_10] : memref<128x128xbf16, #tpu.memory_space<vmem>>, vector<128x128xbf16>
    %cst = arith.constant dense<0.000000e+00> : vector<512x128xf32>
    %12 = tpu.matmul %10, %11, %cst {dimension_numbers = #tpu.dot_dimension_numbers<[1], [0], [0], [1], [0, 0, 1, 1], [], []>} : vector<512x128xbf16>, vector<128x128xbf16>, vector<512x128xf32> -> vector<512x128xf32>
    %c0_11 = arith.constant 0 : index
    %c0_12 = arith.constant 0 : index
    %13 = vector.load %arg7[%c0_11, %c0_12] : memref<512x128xf32, #tpu.memory_space<vmem>>, vector<512x128xf32>
    tpu.vector_store %arg7[%c0_11, %c0_12], %12 {strides = array<i32>} : memref<512x128xf32, #tpu.memory_space<vmem>>, vector<512x128xf32>,
    %cst_13 = arith.constant dense<0.000000e+00> : vector<128xf32>
    %14 = vector.multi_reduction <add>, %12, %cst_13 [0] : vector<512x128xf32> to vector<128xf32>
    %15 = vector.shape_cast %14 : vector<128xf32> to vector<1x128xf32>
    %c0_14 = arith.constant 0 : index
    %c0_15 = arith.constant 0 : index
    %c0_16 = arith.constant 0 : index
    %16 = vector.load %arg8[%c0_14, %c0_15, %c0_16] : memref<1x2x128xf32, #tpu.memory_space<vmem>>, vector<1x1x128xf32>
    %17 = vector.shape_cast %16 : vector<1x1x128xf32> to vector<1x128xf32>
    %18 = vector.shape_cast %15 : vector<1x128xf32> to vector<1x1x128xf32>
    tpu.vector_store %arg8[%c0_14, %c0_15, %c0_16], %18 {strides = array<i32>} : memref<1x2x128xf32, #tpu.memory_space<vmem>>, vector<1x1x128xf32>,
    %19 = arith.mulf %12, %12 : vector<512x128xf32>
    %cst_17 = arith.constant dense<0.000000e+00> : vector<128xf32>
    %20 = vector.multi_reduction <add>, %19, %cst_17 [0] : vector<512x128xf32> to vector<128xf32>
    %21 = vector.shape_cast %20 : vector<128xf32> to vector<1x128xf32>
    %c0_18 = arith.constant 0 : index
    %c1 = arith.constant 1 : index
    %c0_19 = arith.constant 0 : index
    %22 = vector.load %arg8[%c0_18, %c1, %c0_19] : memref<1x2x128xf32, #tpu.memory_space<vmem>>, vector<1x1x128xf32>
    %23 = vector.shape_cast %22 : vector<1x1x128xf32> to vector<1x128xf32>
    %24 = vector.shape_cast %21 : vector<1x128xf32> to vector<1x1x128xf32>
    tpu.vector_store %arg8[%c0_18, %c1, %c0_19], %24 {strides = array<i32>} : memref<1x2x128xf32, #tpu.memory_space<vmem>>, vector<1x1x128xf32>,
    return
  }
  func.func @transform_0(%arg0: i32) -> (i32, i32) {
    %c0_i32 = arith.constant 0 : i32
    %c0_i32_0 = arith.constant 0 : i32
    return %arg0, %c0_i32 : i32, i32
  }
  func.func @transform_1(%arg0: i32) -> (i32, i32) {
    %c0_i32 = arith.constant 0 : i32
    %c0_i32_0 = arith.constant 0 : i32
    return %arg0, %c0_i32 : i32, i32
  }
  func.func @transform_2(%arg0: i32) -> (i32, i32) {
    %c0_i32 = arith.constant 0 : i32
    %c0_i32_0 = arith.constant 0 : i32
    %c0_i32_1 = arith.constant 0 : i32
    return %c0_i32, %c0_i32_0 : i32, i32
  }
  func.func @transform_3(%arg0: i32) -> (i32, i32) {
    %c0_i32 = arith.constant 0 : i32
    %c0_i32_0 = arith.constant 0 : i32
    %c0_i32_1 = arith.constant 0 : i32
    return %c0_i32, %c0_i32_0 : i32, i32
  }
  func.func @transform_4(%arg0: i32) -> (i32, i32) {
    %c0_i32 = arith.constant 0 : i32
    %c0_i32_0 = arith.constant 0 : i32
    %c0_i32_1 = arith.constant 0 : i32
    return %c0_i32, %c0_i32_0 : i32, i32
  }
  func.func @transform_5(%arg0: i32) -> (i32, i32) {
    %c0_i32 = arith.constant 0 : i32
    %c0_i32_0 = arith.constant 0 : i32
    return %arg0, %c0_i32 : i32, i32
  }
  func.func @transform_6(%arg0: i32) -> (i32, i32) {
    %c0_i32 = arith.constant 0 : i32
    %c0_i32_0 = arith.constant 0 : i32
    return %arg0, %c0_i32 : i32, i32
  }
  func.func @transform_7(%arg0: i32) -> (i32, i32, i32) {
    %c0_i32 = arith.constant 0 : i32
    %c0_i32_0 = arith.constant 0 : i32
    %c0_i32_1 = arith.constant 0 : i32
    return %arg0, %c0_i32, %c0_i32_0 : i32, i32, i32
  }
}

module attributes {stable_mosaic.version = 11 : i64} {
  func.func @act_pw_conv_stats_kernel(%arg0: i32, %arg1: memref<512x128xf32, #tpu.memory_space<vmem>>, %arg2: memref<1x128xf32, #tpu.memory_space<vmem>>, %arg3: memref<1x128xf32, #tpu.memory_space<vmem>>, %arg4: memref<1x128xf32, #tpu.memory_space<vmem>>, %arg5: memref<128x128xbf16, #tpu.memory_space<vmem>>, %arg6: memref<512x128xf32, #tpu.memory_space<vmem>>, %arg7: memref<1x2x128xf32, #tpu.memory_space<vmem>>) attributes {dimension_semantics = [#tpu.dimension_semantics<parallel>], iteration_bounds = array<i64: 1>, scalar_prefetch = 0 : i64, scratch_operands = 0 : i64, tpu.core_type = #tpu.core_type<tc>, window_params = [{transform_indices = @transform_0, window_bounds = array<i64: 512, 128>}, {pipeline_mode = #tpu.pipeline_mode<synchronous>, transform_indices = @transform_1, window_bounds = array<i64: 1, 128>}, {pipeline_mode = #tpu.pipeline_mode<synchronous>, transform_indices = @transform_2, window_bounds = array<i64: 1, 128>}, {pipeline_mode = #tpu.pipeline_mode<synchronous>, transform_indices = @transform_3, window_bounds = array<i64: 1, 128>}, {pipeline_mode = #tpu.pipeline_mode<synchronous>, transform_indices = @transform_4, window_bounds = array<i64: 128, 128>}, {transform_indices = @transform_5, window_bounds = array<i64: 512, 128>}, {transform_indices = @transform_6, window_bounds = array<i64: 1, 2, 128>}]} {
    %c0 = arith.constant 0 : index
    %c0_0 = arith.constant 0 : index
    %0 = vector.load %arg1[%c0, %c0_0] : memref<512x128xf32, #tpu.memory_space<vmem>>, vector<512x128xf32>
    %c0_1 = arith.constant 0 : index
    %c0_2 = arith.constant 0 : index
    %1 = vector.load %arg2[%c0_1, %c0_2] : memref<1x128xf32, #tpu.memory_space<vmem>>, vector<1x128xf32>
    %2 = vector.broadcast %1 : vector<1x128xf32> to vector<512x128xf32>
    %3 = arith.mulf %0, %2 : vector<512x128xf32>
    %c0_3 = arith.constant 0 : index
    %c0_4 = arith.constant 0 : index
    %4 = vector.load %arg3[%c0_3, %c0_4] : memref<1x128xf32, #tpu.memory_space<vmem>>, vector<1x128xf32>
    %5 = vector.broadcast %4 : vector<1x128xf32> to vector<512x128xf32>
    %6 = arith.addf %3, %5 : vector<512x128xf32>
    %cst = arith.constant 0.000000e+00 : f32
    %7 = vector.broadcast %cst : f32 to vector<512x128xf32>
    %8 = arith.cmpf oge, %6, %7 : vector<512x128xf32>
    %c0_5 = arith.constant 0 : index
    %c0_6 = arith.constant 0 : index
    %9 = vector.load %arg4[%c0_5, %c0_6] : memref<1x128xf32, #tpu.memory_space<vmem>>, vector<1x128xf32>
    %10 = vector.broadcast %9 : vector<1x128xf32> to vector<512x128xf32>
    %11 = arith.mulf %10, %6 : vector<512x128xf32>
    %12 = arith.select %8, %6, %11 : vector<512x128xi1>, vector<512x128xf32>
    %13 = arith.truncf %12 : vector<512x128xf32> to vector<512x128xbf16>
    %c0_7 = arith.constant 0 : index
    %c0_8 = arith.constant 0 : index
    %14 = vector.load %arg5[%c0_7, %c0_8] : memref<128x128xbf16, #tpu.memory_space<vmem>>, vector<128x128xbf16>
    %cst_9 = arith.constant dense<0.000000e+00> : vector<512x128xf32>
    %15 = tpu.matmul %13, %14, %cst_9 {dimension_numbers = #tpu.dot_dimension_numbers<[1], [0], [0], [1], [0, 0, 1, 1], [], []>} : vector<512x128xbf16>, vector<128x128xbf16>, vector<512x128xf32> -> vector<512x128xf32>
    %c0_10 = arith.constant 0 : index
    %c0_11 = arith.constant 0 : index
    %16 = vector.load %arg6[%c0_10, %c0_11] : memref<512x128xf32, #tpu.memory_space<vmem>>, vector<512x128xf32>
    tpu.vector_store %arg6[%c0_10, %c0_11], %15 {strides = array<i32>} : memref<512x128xf32, #tpu.memory_space<vmem>>, vector<512x128xf32>,
    %cst_12 = arith.constant dense<0.000000e+00> : vector<128xf32>
    %17 = vector.multi_reduction <add>, %15, %cst_12 [0] : vector<512x128xf32> to vector<128xf32>
    %18 = vector.shape_cast %17 : vector<128xf32> to vector<1x128xf32>
    %c0_13 = arith.constant 0 : index
    %c0_14 = arith.constant 0 : index
    %c0_15 = arith.constant 0 : index
    %19 = vector.load %arg7[%c0_13, %c0_14, %c0_15] : memref<1x2x128xf32, #tpu.memory_space<vmem>>, vector<1x1x128xf32>
    %20 = vector.shape_cast %19 : vector<1x1x128xf32> to vector<1x128xf32>
    %21 = vector.shape_cast %18 : vector<1x128xf32> to vector<1x1x128xf32>
    tpu.vector_store %arg7[%c0_13, %c0_14, %c0_15], %21 {strides = array<i32>} : memref<1x2x128xf32, #tpu.memory_space<vmem>>, vector<1x1x128xf32>,
    %22 = arith.mulf %15, %15 : vector<512x128xf32>
    %cst_16 = arith.constant dense<0.000000e+00> : vector<128xf32>
    %23 = vector.multi_reduction <add>, %22, %cst_16 [0] : vector<512x128xf32> to vector<128xf32>
    %24 = vector.shape_cast %23 : vector<128xf32> to vector<1x128xf32>
    %c0_17 = arith.constant 0 : index
    %c1 = arith.constant 1 : index
    %c0_18 = arith.constant 0 : index
    %25 = vector.load %arg7[%c0_17, %c1, %c0_18] : memref<1x2x128xf32, #tpu.memory_space<vmem>>, vector<1x1x128xf32>
    %26 = vector.shape_cast %25 : vector<1x1x128xf32> to vector<1x128xf32>
    %27 = vector.shape_cast %24 : vector<1x128xf32> to vector<1x1x128xf32>
    tpu.vector_store %arg7[%c0_17, %c1, %c0_18], %27 {strides = array<i32>} : memref<1x2x128xf32, #tpu.memory_space<vmem>>, vector<1x1x128xf32>,
    return
  }
  func.func @transform_0(%arg0: i32) -> (i32, i32) {
    %c0_i32 = arith.constant 0 : i32
    %c0_i32_0 = arith.constant 0 : i32
    return %arg0, %c0_i32 : i32, i32
  }
  func.func @transform_1(%arg0: i32) -> (i32, i32) {
    %c0_i32 = arith.constant 0 : i32
    %c0_i32_0 = arith.constant 0 : i32
    %c0_i32_1 = arith.constant 0 : i32
    return %c0_i32, %c0_i32_0 : i32, i32
  }
  func.func @transform_2(%arg0: i32) -> (i32, i32) {
    %c0_i32 = arith.constant 0 : i32
    %c0_i32_0 = arith.constant 0 : i32
    %c0_i32_1 = arith.constant 0 : i32
    return %c0_i32, %c0_i32_0 : i32, i32
  }
  func.func @transform_3(%arg0: i32) -> (i32, i32) {
    %c0_i32 = arith.constant 0 : i32
    %c0_i32_0 = arith.constant 0 : i32
    %c0_i32_1 = arith.constant 0 : i32
    return %c0_i32, %c0_i32_0 : i32, i32
  }
  func.func @transform_4(%arg0: i32) -> (i32, i32) {
    %c0_i32 = arith.constant 0 : i32
    %c0_i32_0 = arith.constant 0 : i32
    %c0_i32_1 = arith.constant 0 : i32
    return %c0_i32, %c0_i32_0 : i32, i32
  }
  func.func @transform_5(%arg0: i32) -> (i32, i32) {
    %c0_i32 = arith.constant 0 : i32
    %c0_i32_0 = arith.constant 0 : i32
    return %arg0, %c0_i32 : i32, i32
  }
  func.func @transform_6(%arg0: i32) -> (i32, i32, i32) {
    %c0_i32 = arith.constant 0 : i32
    %c0_i32_0 = arith.constant 0 : i32
    %c0_i32_1 = arith.constant 0 : i32
    return %arg0, %c0_i32, %c0_i32_0 : i32, i32, i32
  }
}

module attributes {stable_mosaic.version = 11 : i64} {
  func.func @bn_residual_kernel(%arg0: i32, %arg1: memref<512x128xf32, #tpu.memory_space<vmem>>, %arg2: memref<1x128xf32, #tpu.memory_space<vmem>>, %arg3: memref<1x128xf32, #tpu.memory_space<vmem>>, %arg4: memref<512x128xf32, #tpu.memory_space<vmem>>, %arg5: memref<512x128xf32, #tpu.memory_space<vmem>>) attributes {dimension_semantics = [#tpu.dimension_semantics<parallel>], iteration_bounds = array<i64: 1>, scalar_prefetch = 0 : i64, scratch_operands = 0 : i64, tpu.core_type = #tpu.core_type<tc>, window_params = [{transform_indices = @transform_0, window_bounds = array<i64: 512, 128>}, {pipeline_mode = #tpu.pipeline_mode<synchronous>, transform_indices = @transform_1, window_bounds = array<i64: 1, 128>}, {pipeline_mode = #tpu.pipeline_mode<synchronous>, transform_indices = @transform_2, window_bounds = array<i64: 1, 128>}, {transform_indices = @transform_3, window_bounds = array<i64: 512, 128>}, {transform_indices = @transform_4, window_bounds = array<i64: 512, 128>}]} {
    %c0 = arith.constant 0 : index
    %c0_0 = arith.constant 0 : index
    %0 = vector.load %arg4[%c0, %c0_0] : memref<512x128xf32, #tpu.memory_space<vmem>>, vector<512x128xf32>
    %c0_1 = arith.constant 0 : index
    %c0_2 = arith.constant 0 : index
    %1 = vector.load %arg1[%c0_1, %c0_2] : memref<512x128xf32, #tpu.memory_space<vmem>>, vector<512x128xf32>
    %c0_3 = arith.constant 0 : index
    %c0_4 = arith.constant 0 : index
    %2 = vector.load %arg2[%c0_3, %c0_4] : memref<1x128xf32, #tpu.memory_space<vmem>>, vector<1x128xf32>
    %3 = vector.broadcast %2 : vector<1x128xf32> to vector<512x128xf32>
    %4 = arith.mulf %1, %3 : vector<512x128xf32>
    %5 = arith.addf %0, %4 : vector<512x128xf32>
    %c0_5 = arith.constant 0 : index
    %c0_6 = arith.constant 0 : index
    %6 = vector.load %arg3[%c0_5, %c0_6] : memref<1x128xf32, #tpu.memory_space<vmem>>, vector<1x128xf32>
    %7 = vector.broadcast %6 : vector<1x128xf32> to vector<512x128xf32>
    %8 = arith.addf %5, %7 : vector<512x128xf32>
    %c0_7 = arith.constant 0 : index
    %c0_8 = arith.constant 0 : index
    %9 = vector.load %arg5[%c0_7, %c0_8] : memref<512x128xf32, #tpu.memory_space<vmem>>, vector<512x128xf32>
    tpu.vector_store %arg5[%c0_7, %c0_8], %8 {strides = array<i32>} : memref<512x128xf32, #tpu.memory_space<vmem>>, vector<512x128xf32>,
    return
  }
  func.func @transform_0(%arg0: i32) -> (i32, i32) {
    %c0_i32 = arith.constant 0 : i32
    %c0_i32_0 = arith.constant 0 : i32
    return %arg0, %c0_i32 : i32, i32
  }
  func.func @transform_1(%arg0: i32) -> (i32, i32) {
    %c0_i32 = arith.constant 0 : i32
    %c0_i32_0 = arith.constant 0 : i32
    %c0_i32_1 = arith.constant 0 : i32
    return %c0_i32, %c0_i32_0 : i32, i32
  }
  func.func @transform_2(%arg0: i32) -> (i32, i32) {
    %c0_i32 = arith.constant 0 : i32
    %c0_i32_0 = arith.constant 0 : i32
    %c0_i32_1 = arith.constant 0 : i32
    return %c0_i32, %c0_i32_0 : i32, i32
  }
  func.func @transform_3(%arg0: i32) -> (i32, i32) {
    %c0_i32 = arith.constant 0 : i32
    %c0_i32_0 = arith.constant 0 : i32
    return %arg0, %c0_i32 : i32, i32
  }
  func.func @transform_4(%arg0: i32) -> (i32, i32) {
    %c0_i32 = arith.constant 0 : i32
    %c0_i32_0 = arith.constant 0 : i32
    return %arg0, %c0_i32 : i32, i32
  }
}

</mosaic_0001>

<llo_original>
// kernel: residual_forward.7
$region0: #{residual_forward.7}
  #allocation0 [shape = 'u32[]', space=smem, size = 0x4, offset = 0x4, fixed_abs, tag = 'smem constant byte address 0x4 - core index']
  #allocation1 [shape = 'u32[144,128]{1,0:T(1,128)}', space=vmem, size = 0x12000, scoped, tag = 'internal scratch']
  %s0 = inlined_call_operand.vmem [shape: f32[512,128], index: 0, kind: input, shape index: {}]
  %s1 = inlined_call_operand.vmem [shape: bf16[128,128], index: 1, kind: input, shape index: {}]
  %s2 = inlined_call_operand.vmem [shape: f32[512,128], index: 2, kind: output, shape index: {0}]
  %s3 = inlined_call_operand.vmem [shape: f32[1,2,128], index: 3, kind: output, shape index: {1}]
  %4 = xla_tuple %s2, %s3
  %s5 = sld [smem:[#allocation0]]
  $region26: #{residual_forward.7} parent=0
    _
  %s7 = ssub.s32 1, %s5
  %s8 = scalar_select 0, %s7, %s5
  // Predicated region
  $region2: #{residual_forward.7} parent=0 // pred_check
    _
  $region3: #{residual_forward.7} parent=0 // pred_check_branch
    %10 = sbr.rel (0) target = $region5
  $region4: #{residual_forward.7} parent=0 // pred_region
    _
  $region5: #{residual_forward.7} parent=0 // pred_fallthru
    _
  // Predicated region
  $region6: #{residual_forward.7} parent=0 // pred_check
    _
  $region7: #{residual_forward.7} parent=0 // pred_check_branch
    %12 = sbr.rel (0) target = $region9
  $region8: #{residual_forward.7} parent=0 // pred_region
    _
  $region9: #{residual_forward.7} parent=0 // pred_fallthru
    _
  %v14 = vld [vmem:[%s0] sm:$0xff]
  %v15 = vld [vmem:[%s0 + $0x8] sm:$0xff]
  %v16 = vld [vmem:[%s0 + $0x10] sm:$0xff]
  %v17 = vld [vmem:[%s0 + $0x18] sm:$0xff]
  %v18 = vld [vmem:[%s0 + $0x20] sm:$0xff]
  %v19 = vld [vmem:[%s0 + $0x28] sm:$0xff]
  %v20 = vld [vmem:[%s0 + $0x30] sm:$0xff]
  %v21 = vld [vmem:[%s0 + $0x38] sm:$0xff]
  %v22 = vld [vmem:[%s0 + $0x40] sm:$0xff]
  %v23 = vld [vmem:[%s0 + $0x48] sm:$0xff]
  %v24 = vld [vmem:[%s0 + $0x50] sm:$0xff]
  %v25 = vld [vmem:[%s0 + $0x58] sm:$0xff]
  %v26 = vld [vmem:[%s0 + $0x60] sm:$0xff]
  %v27 = vld [vmem:[%s0 + $0x68] sm:$0xff]
  %v28 = vld [vmem:[%s0 + $0x70] sm:$0xff]
  %v29 = vld [vmem:[%s0 + $0x78] sm:$0xff]
  %v30 = vld [vmem:[%s0 + $0x80] sm:$0xff]
  %v31 = vld [vmem:[%s0 + $0x88] sm:$0xff]
  %v32 = vld [vmem:[%s0 + $0x90] sm:$0xff]
  %v33 = vld [vmem:[%s0 + $0x98] sm:$0xff]
  %v34 = vld [vmem:[%s0 + $0xa0] sm:$0xff]
  %v35 = vld [vmem:[%s0 + $0xa8] sm:$0xff]
  %v36 = vld [vmem:[%s0 + $0xb0] sm:$0xff]
  %v37 = vld [vmem:[%s0 + $0xb8] sm:$0xff]
  %v38 = vld [vmem:[%s0 + $0xc0] sm:$0xff]
  %v39 = vld [vmem:[%s0 + $0xc8] sm:$0xff]
  %v40 = vld [vmem:[%s0 + $0xd0] sm:$0xff]
  %v41 = vld [vmem:[%s0 + $0xd8] sm:$0xff]
  %v42 = vld [vmem:[%s0 + $0xe0] sm:$0xff]
  %v43 = vld [vmem:[%s0 + $0xe8] sm:$0xff]
  %v44 = vld [vmem:[%s0 + $0xf0] sm:$0xff]
  %v45 = vld [vmem:[%s0 + $0xf8] sm:$0xff]
  %v46 = vld [vmem:[%s0 + $0x100] sm:$0xff]
  %v47 = vld [vmem:[%s0 + $0x108] sm:$0xff]
  %v48 = vld [vmem:[%s0 + $0x110] sm:$0xff]
  %v49 = vld [vmem:[%s0 + $0x118] sm:$0xff]
  %v50 = vld [vmem:[%s0 + $0x120] sm:$0xff]
  %v51 = vld [vmem:[%s0 + $0x128] sm:$0xff]
  %v52 = vld [vmem:[%s0 + $0x130] sm:$0xff]
  %v53 = vld [vmem:[%s0 + $0x138] sm:$0xff]
  %v54 = vld [vmem:[%s0 + $0x140] sm:$0xff]
  %v55 = vld [vmem:[%s0 + $0x148] sm:$0xff]
  %v56 = vld [vmem:[%s0 + $0x150] sm:$0xff]
  %v57 = vld [vmem:[%s0 + $0x158] sm:$0xff]
  %v58 = vld [vmem:[%s0 + $0x160] sm:$0xff]
  %v59 = vld [vmem:[%s0 + $0x168] sm:$0xff]
  %v60 = vld [vmem:[%s0 + $0x170] sm:$0xff]
  %v61 = vld [vmem:[%s0 + $0x178] sm:$0xff]
  %v62 = vld [vmem:[%s0 + $0x180] sm:$0xff]
  %v63 = vld [vmem:[%s0 + $0x188] sm:$0xff]
  %v64 = vld [vmem:[%s0 + $0x190] sm:$0xff]
  %v65 = vld [vmem:[%s0 + $0x198] sm:$0xff]
  %v66 = vld [vmem:[%s0 + $0x1a0] sm:$0xff]
  %v67 = vld [vmem:[%s0 + $0x1a8] sm:$0xff]
  %v68 = vld [vmem:[%s0 + $0x1b0] sm:$0xff]
  %v69 = vld [vmem:[%s0 + $0x1b8] sm:$0xff]
  %v70 = vld [vmem:[%s0 + $0x1c0] sm:$0xff]
  %v71 = vld [vmem:[%s0 + $0x1c8] sm:$0xff]
  %v72 = vld [vmem:[%s0 + $0x1d0] sm:$0xff]
  %v73 = vld [vmem:[%s0 + $0x1d8] sm:$0xff]
  %v74 = vld [vmem:[%s0 + $0x1e0] sm:$0xff]
  %v75 = vld [vmem:[%s0 + $0x1e8] sm:$0xff]
  %v76 = vld [vmem:[%s0 + $0x1f0] sm:$0xff]
  %v77 = vld [vmem:[%s0 + $0x1f8] sm:$0xff]
  %v78 = vpack.c.bf16 %v15, %v14
  %v79 = vpack.c.bf16 %v17, %v16
  %v80 = vpack.c.bf16 %v19, %v18
  %v81 = vpack.c.bf16 %v21, %v20
  %v82 = vpack.c.bf16 %v23, %v22
  %v83 = vpack.c.bf16 %v25, %v24
  %v84 = vpack.c.bf16 %v27, %v26
  %v85 = vpack.c.bf16 %v29, %v28
  %v86 = vpack.c.bf16 %v31, %v30
  %v87 = vpack.c.bf16 %v33, %v32
  %v88 = vpack.c.bf16 %v35, %v34
  %v89 = vpack.c.bf16 %v37, %v36
  %v90 = vpack.c.bf16 %v39, %v38
  %v91 = vpack.c.bf16 %v41, %v40
  %v92 = vpack.c.bf16 %v43, %v42
  %v93 = vpack.c.bf16 %v45, %v44
  %v94 = vpack.c.bf16 %v47, %v46
  %v95 = vpack.c.bf16 %v49, %v48
  %v96 = vpack.c.bf16 %v51, %v50
  %v97 = vpack.c.bf16 %v53, %v52
  %v98 = vpack.c.bf16 %v55, %v54
  %v99 = vpack.c.bf16 %v57, %v56
  %v100 = vpack.c.bf16 %v59, %v58
  %v101 = vpack.c.bf16 %v61, %v60
  %v102 = vpack.c.bf16 %v63, %v62
  %v103 = vpack.c.bf16 %v65, %v64
  %v104 = vpack.c.bf16 %v67, %v66
  %v105 = vpack.c.bf16 %v69, %v68
  %v106 = vpack.c.bf16 %v71, %v70
  %v107 = vpack.c.bf16 %v73, %v72
  %v108 = vpack.c.bf16 %v75, %v74
  %v109 = vpack.c.bf16 %v77, %v76
  %v110 = vld [vmem:[%s1] sm:$0xf]
  %v111 = vld [vmem:[%s1 + $0x4] sm:$0xf]
  %v112 = vld [vmem:[%s1 + $0x8] sm:$0xf]
  %v113 = vld [vmem:[%s1 + $0xc] sm:$0xf]
  %v114 = vld [vmem:[%s1 + $0x10] sm:$0xf]
  %v115 = vld [vmem:[%s1 + $0x14] sm:$0xf]
  %v116 = vld [vmem:[%s1 + $0x18] sm:$0xf]
  %v117 = vld [vmem:[%s1 + $0x1c] sm:$0xf]
  %v118 = vld [vmem:[%s1 + $0x20] sm:$0xf]
  %v119 = vld [vmem:[%s1 + $0x24] sm:$0xf]
  %v120 = vld [vmem:[%s1 + $0x28] sm:$0xf]
  %v121 = vld [vmem:[%s1 + $0x2c] sm:$0xf]
  %v122 = vld [vmem:[%s1 + $0x30] sm:$0xf]
  %v123 = vld [vmem:[%s1 + $0x34] sm:$0xf]
  %v124 = vld [vmem:[%s1 + $0x38] sm:$0xf]
  %v125 = vld [vmem:[%s1 + $0x3c] sm:$0xf]
  %v142 = vunpack.c.l.b16 %v110
  %v143 = vunpack.c.l.b16 %v111
  %v144 = vunpack.c.l.b16 %v112
  %v145 = vunpack.c.l.b16 %v113
  %v146 = vunpack.c.l.b16 %v114
  %v147 = vunpack.c.l.b16 %v115
  %v148 = vunpack.c.l.b16 %v116
  %v149 = vunpack.c.l.b16 %v117
  %v150 = vunpack.c.l.b16 %v118
  %v151 = vunpack.c.l.b16 %v119
  %v152 = vunpack.c.l.b16 %v120
  %v153 = vunpack.c.l.b16 %v121
  %v154 = vunpack.c.l.b16 %v122
  %v155 = vunpack.c.l.b16 %v123
  %v156 = vunpack.c.l.b16 %v124
  %v157 = vunpack.c.l.b16 %v125
  %v158 = vpack.c.b16 %v143, %v142
  %v159 = vpack.c.b16 %v145, %v144
  %v160 = vpack.c.b16 %v147, %v146
  %v161 = vpack.c.b16 %v149, %v148
  %v162 = vpack.c.b16 %v151, %v150
  %v163 = vpack.c.b16 %v153, %v152
  %v164 = vpack.c.b16 %v155, %v154
  %v165 = vpack.c.b16 %v157, %v156
  %174 = vmatprep.subr.bf16.mxu0 0
  %175 = vmatpush1.bf16.msra.mxu0 %v158
  %176 = vmatprep.subr.bf16.mxu0 0
  %177 = vmatpush1.bf16.msra.mxu0 %v159
  %178 = vmatprep.subr.bf16.mxu0 0
  %179 = vmatpush1.bf16.msra.mxu0 %v160
  %180 = vmatprep.subr.bf16.mxu0 0
  %181 = vmatpush1.bf16.msra.mxu0 %v161
  %182 = vmatprep.subr.bf16.mxu0 0
  %183 = vmatpush1.bf16.msra.mxu0 %v162
  %184 = vmatprep.subr.bf16.mxu0 0
  %185 = vmatpush1.bf16.msra.mxu0 %v163
  %186 = vmatprep.subr.bf16.mxu0 0
  %187 = vmatpush1.bf16.msra.mxu0 %v164
  %188 = vmatprep.subr.bf16.mxu0 0
  %189 = vmatpush1.bf16.msra.mxu0 %v165
  %190 = vmatprep.subr.bf16.mxu0 0
  %191 = vmatpush1.bf16.msra.mxu0 0
  %192 = vmatprep.subr.bf16.mxu0 0
  %193 = vmatpush1.bf16.msra.mxu0 0
  %194 = vmatprep.subr.bf16.mxu0 0
  %195 = vmatpush1.bf16.msra.mxu0 0
  %196 = vmatprep.subr.bf16.mxu0 0
  %197 = vmatpush1.bf16.msra.mxu0 0
  %198 = vmatprep.subr.bf16.mxu0 0
  %199 = vmatpush1.bf16.msra.mxu0 0
  %200 = vmatprep.subr.bf16.mxu0 0
  %201 = vmatpush1.bf16.msra.mxu0 0
  %202 = vmatprep.subr.bf16.mxu0 0
  %203 = vmatpush1.bf16.msra.mxu0 0
  %204 = vmatprep.subr.bf16.mxu0 0
  %205 = vmatpush1.bf16.msra.mxu0 0
  %206 = vmatprep.mubr.bf16.mxu0 0
  %207 = vmatmul.mubr.bf16.gmra.mrb[0].mxu0 %v78
  %v208 = vpop.f32.mrb[0].mxu0
  %v209 = vadd.f32 0.0, %v208
  %v210 = vpop.f32.mrb[0].mxu0
  %v211 = vpop.f32.mrb[0].mxu0
  %v212 = vadd.f32 0.0, %v211
  %v213 = vpop.f32.mrb[0].mxu0
  %214 = vmatprep.mubr.bf16.mxu0 0
  %215 = vmatmul.mubr.bf16.gmra.mrb[0].mxu0 %v79
  %v216 = vpop.f32.mrb[0].mxu0
  %v217 = vadd.f32 0.0, %v216
  %v218 = vpop.f32.mrb[0].mxu0
  %v219 = vpop.f32.mrb[0].mxu0
  %v220 = vadd.f32 0.0, %v219
  %v221 = vpop.f32.mrb[0].mxu0
  %222 = vmatprep.mubr.bf16.mxu0 0
  %223 = vmatmul.mubr.bf16.gmra.mrb[0].mxu0 %v80
  %v224 = vpop.f32.mrb[0].mxu0
  %v225 = vadd.f32 0.0, %v224
  %v226 = vpop.f32.mrb[0].mxu0
  %v227 = vpop.f32.mrb[0].mxu0
  %v228 = vadd.f32 0.0, %v227
  %v229 = vpop.f32.mrb[0].mxu0
  %230 = vmatprep.mubr.bf16.mxu0 0
  %231 = vmatmul.mubr.bf16.gmra.mrb[0].mxu0 %v81
  %v232 = vpop.f32.mrb[0].mxu0
  %v233 = vadd.f32 0.0, %v232
  %v234 = vpop.f32.mrb[0].mxu0
  %v235 = vpop.f32.mrb[0].mxu0
  %v236 = vadd.f32 0.0, %v235
  %v237 = vpop.f32.mrb[0].mxu0
  %238 = vmatprep.mubr.bf16.mxu0 0
  %239 = vmatmul.mubr.bf16.gmra.mrb[0].mxu0 %v82
  %v240 = vpop.f32.mrb[0].mxu0
  %v241 = vadd.f32 0.0, %v240
  %v242 = vpop.f32.mrb[0].mxu0
  %v243 = vpop.f32.mrb[0].mxu0
  %v244 = vadd.f32 0.0, %v243
  %v245 = vpop.f32.mrb[0].mxu0
  %246 = vmatprep.mubr.bf16.mxu0 0
  %247 = vmatmul.mubr.bf16.gmra.mrb[0].mxu0 %v83
  %v248 = vpop.f32.mrb[0].mxu0
  %v249 = vadd.f32 0.0, %v248
  %v250 = vpop.f32.mrb[0].mxu0
  %v251 = vpop.f32.mrb[0].mxu0
  %v252 = vadd.f32 0.0, %v251
  %v253 = vpop.f32.mrb[0].mxu0
  %254 = vmatprep.mubr.bf16.mxu0 0
  %255 = vmatmul.mubr.bf16.gmra.mrb[0].mxu0 %v84
  %v256 = vpop.f32.mrb[0].mxu0
  %v257 = vadd.f32 0.0, %v256
  %v258 = vpop.f32.mrb[0].mxu0
  %v259 = vpop.f32.mrb[0].mxu0
  %v260 = vadd.f32 0.0, %v259
  %v261 = vpop.f32.mrb[0].mxu0
  %262 = vmatprep.mubr.bf16.mxu0 0
  %263 = vmatmul.mubr.bf16.gmra.mrb[0].mxu0 %v85
  %v264 = vpop.f32.mrb[0].mxu0
  %v265 = vadd.f32 0.0, %v264
  %v266 = vpop.f32.mrb[0].mxu0
  %v267 = vpop.f32.mrb[0].mxu0
  %v268 = vadd.f32 0.0, %v267
  %v269 = vpop.f32.mrb[0].mxu0
  %270 = vmatprep.mubr.bf16.mxu0 0
  %271 = vmatmul.mubr.bf16.gmra.mrb[0].mxu0 %v86
  %v272 = vpop.f32.mrb[0].mxu0
  %v273 = vadd.f32 0.0, %v272
  %v274 = vpop.f32.mrb[0].mxu0
  %v275 = vpop.f32.mrb[0].mxu0
  %v276 = vadd.f32 0.0, %v275
  %v277 = vpop.f32.mrb[0].mxu0
  %278 = vmatprep.mubr.bf16.mxu0 0
  %279 = vmatmul.mubr.bf16.gmra.mrb[0].mxu0 %v87
  %v280 = vpop.f32.mrb[0].mxu0
  %v281 = vadd.f32 0.0, %v280
  %v282 = vpop.f32.mrb[0].mxu0
  %v283 = vpop.f32.mrb[0].mxu0
  %v284 = vadd.f32 0.0, %v283
  %v285 = vpop.f32.mrb[0].mxu0
  %286 = vmatprep.mubr.bf16.mxu0 0
  %287 = vmatmul.mubr.bf16.gmra.mrb[0].mxu0 %v88
  %v288 = vpop.f32.mrb[0].mxu0
  %v289 = vadd.f32 0.0, %v288
  %v290 = vpop.f32.mrb[0].mxu0
  %v291 = vpop.f32.mrb[0].mxu0
  %v292 = vadd.f32 0.0, %v291
  %v293 = vpop.f32.mrb[0].mxu0
  %294 = vmatprep.mubr.bf16.mxu0 0
  %295 = vmatmul.mubr.bf16.gmra.mrb[0].mxu0 %v89
  %v296 = vpop.f32.mrb[0].mxu0
  %v297 = vadd.f32 0.0, %v296
  %v298 = vpop.f32.mrb[0].mxu0
  %v299 = vpop.f32.mrb[0].mxu0
  %v300 = vadd.f32 0.0, %v299
  %v301 = vpop.f32.mrb[0].mxu0
  %302 = vmatprep.mubr.bf16.mxu0 0
  %303 = vmatmul.mubr.bf16.gmra.mrb[0].mxu0 %v90
  %v304 = vpop.f32.mrb[0].mxu0
  %v305 = vadd.f32 0.0, %v304
  %v306 = vpop.f32.mrb[0].mxu0
  %v307 = vpop.f32.mrb[0].mxu0
  %v308 = vadd.f32 0.0, %v307
  %v309 = vpop.f32.mrb[0].mxu0
  %310 = vmatprep.mubr.bf16.mxu0 0
  %311 = vmatmul.mubr.bf16.gmra.mrb[0].mxu0 %v91
  %v312 = vpop.f32.mrb[0].mxu0
  %v313 = vadd.f32 0.0, %v312
  %v314 = vpop.f32.mrb[0].mxu0
  %v315 = vpop.f32.mrb[0].mxu0
  %v316 = vadd.f32 0.0, %v315
  %v317 = vpop.f32.mrb[0].mxu0
  %318 = vmatprep.mubr.bf16.mxu0 0
  %319 = vmatmul.mubr.bf16.gmra.mrb[0].mxu0 %v92
  %v320 = vpop.f32.mrb[0].mxu0
  %v321 = vadd.f32 0.0, %v320
  %v322 = vpop.f32.mrb[0].mxu0
  %v323 = vpop.f32.mrb[0].mxu0
  %v324 = vadd.f32 0.0, %v323
  %v325 = vpop.f32.mrb[0].mxu0
  %326 = vmatprep.mubr.bf16.mxu0 0
  %327 = vmatmul.mubr.bf16.gmra.mrb[0].mxu0 %v93
  %v328 = vpop.f32.mrb[0].mxu0
  %v329 = vadd.f32 0.0, %v328
  %v330 = vpop.f32.mrb[0].mxu0
  %v331 = vpop.f32.mrb[0].mxu0
  %v332 = vadd.f32 0.0, %v331
  %v333 = vpop.f32.mrb[0].mxu0
  %334 = vmatprep.mubr.bf16.mxu0 0
  %335 = vmatmul.mubr.bf16.gmra.mrb[0].mxu0 %v94
  %v336 = vpop.f32.mrb[0].mxu0
  %v337 = vadd.f32 0.0, %v336
  %v338 = vpop.f32.mrb[0].mxu0
  %v339 = vpop.f32.mrb[0].mxu0
  %v340 = vadd.f32 0.0, %v339
  %v341 = vpop.f32.mrb[0].mxu0
  %342 = vmatprep.mubr.bf16.mxu0 0
  %343 = vmatmul.mubr.bf16.gmra.mrb[0].mxu0 %v95
  %v344 = vpop.f32.mrb[0].mxu0
  %v345 = vadd.f32 0.0, %v344
  %v346 = vpop.f32.mrb[0].mxu0
  %v347 = vpop.f32.mrb[0].mxu0
  %v348 = vadd.f32 0.0, %v347
  %v349 = vpop.f32.mrb[0].mxu0
  %350 = vmatprep.mubr.bf16.mxu0 0
  %351 = vmatmul.mubr.bf16.gmra.mrb[0].mxu0 %v96
  %v352 = vpop.f32.mrb[0].mxu0
  %v353 = vadd.f32 0.0, %v352
  %v354 = vpop.f32.mrb[0].mxu0
  %v355 = vpop.f32.mrb[0].mxu0
  %v356 = vadd.f32 0.0, %v355
  %v357 = vpop.f32.mrb[0].mxu0
  %358 = vmatprep.mubr.bf16.mxu0 0
  %359 = vmatmul.mubr.bf16.gmra.mrb[0].mxu0 %v97
  %v360 = vpop.f32.mrb[0].mxu0
  %v361 = vadd.f32 0.0, %v360
  %v362 = vpop.f32.mrb[0].mxu0
  %v363 = vpop.f32.mrb[0].mxu0
  %v364 = vadd.f32 0.0, %v363
  %v365 = vpop.f32.mrb[0].mxu0
  %366 = vmatprep.mubr.bf16.mxu0 0
  %367 = vmatmul.mubr.bf16.gmra.mrb[0].mxu0 %v98
  %v368 = vpop.f32.mrb[0].mxu0
  %v369 = vadd.f32 0.0, %v368
  %v370 = vpop.f32.mrb[0].mxu0
  %v371 = vpop.f32.mrb[0].mxu0
  %v372 = vadd.f32 0.0, %v371
  %v373 = vpop.f32.mrb[0].mxu0
  %374 = vmatprep.mubr.bf16.mxu0 0
  %375 = vmatmul.mubr.bf16.gmra.mrb[0].mxu0 %v99
  %v376 = vpop.f32.mrb[0].mxu0
  %v377 = vadd.f32 0.0, %v376
  %v378 = vpop.f32.mrb[0].mxu0
  %v379 = vpop.f32.mrb[0].mxu0
  %v380 = vadd.f32 0.0, %v379
  %v381 = vpop.f32.mrb[0].mxu0
  %382 = vmatprep.mubr.bf16.mxu0 0
  %383 = vmatmul.mubr.bf16.gmra.mrb[0].mxu0 %v100
  %v384 = vpop.f32.mrb[0].mxu0
  %v385 = vadd.f32 0.0, %v384
  %v386 = vpop.f32.mrb[0].mxu0
  %v387 = vpop.f32.mrb[0].mxu0
  %v388 = vadd.f32 0.0, %v387
  %v389 = vpop.f32.mrb[0].mxu0
  %390 = vmatprep.mubr.bf16.mxu0 0
  %391 = vmatmul.mubr.bf16.gmra.mrb[0].mxu0 %v101
  %v392 = vpop.f32.mrb[0].mxu0
  %v393 = vadd.f32 0.0, %v392
  %v394 = vpop.f32.mrb[0].mxu0
  %v395 = vpop.f32.mrb[0].mxu0
  %v396 = vadd.f32 0.0, %v395
  %v397 = vpop.f32.mrb[0].mxu0
  %398 = vmatprep.mubr.bf16.mxu0 0
  %399 = vmatmul.mubr.bf16.gmra.mrb[0].mxu0 %v102
  %v400 = vpop.f32.mrb[0].mxu0
  %v401 = vadd.f32 0.0, %v400
  %v402 = vpop.f32.mrb[0].mxu0
  %v403 = vpop.f32.mrb[0].mxu0
  %v404 = vadd.f32 0.0, %v403
  %v405 = vpop.f32.mrb[0].mxu0
  %406 = vmatprep.mubr.bf16.mxu0 0
  %407 = vmatmul.mubr.bf16.gmra.mrb[0].mxu0 %v103
  %v408 = vpop.f32.mrb[0].mxu0
  %v409 = vadd.f32 0.0, %v408
  %v410 = vpop.f32.mrb[0].mxu0
  %v411 = vpop.f32.mrb[0].mxu0
  %v412 = vadd.f32 0.0, %v411
  %v413 = vpop.f32.mrb[0].mxu0
  %414 = vmatprep.mubr.bf16.mxu0 0
  %415 = vmatmul.mubr.bf16.gmra.mrb[0].mxu0 %v104
  %v416 = vpop.f32.mrb[0].mxu0
  %v417 = vadd.f32 0.0, %v416
  %v418 = vpop.f32.mrb[0].mxu0
  %v419 = vpop.f32.mrb[0].mxu0
  %v420 = vadd.f32 0.0, %v419
  %v421 = vpop.f32.mrb[0].mxu0
  %422 = vmatprep.mubr.bf16.mxu0 0
  %423 = vmatmul.mubr.bf16.gmra.mrb[0].mxu0 %v105
  %v424 = vpop.f32.mrb[0].mxu0
  %v425 = vadd.f32 0.0, %v424
  %v426 = vpop.f32.mrb[0].mxu0
  %v427 = vpop.f32.mrb[0].mxu0
  %v428 = vadd.f32 0.0, %v427
  %v429 = vpop.f32.mrb[0].mxu0
  %430 = vmatprep.mubr.bf16.mxu0 0
  %431 = vmatmul.mubr.bf16.gmra.mrb[0].mxu0 %v106
  %v432 = vpop.f32.mrb[0].mxu0
  %v433 = vadd.f32 0.0, %v432
  %v434 = vpop.f32.mrb[0].mxu0
  %v435 = vpop.f32.mrb[0].mxu0
  %v436 = vadd.f32 0.0, %v435
  %v437 = vpop.f32.mrb[0].mxu0
  %438 = vmatprep.mubr.bf16.mxu0 0
  %439 = vmatmul.mubr.bf16.gmra.mrb[0].mxu0 %v107
  %v440 = vpop.f32.mrb[0].mxu0
  %v441 = vadd.f32 0.0, %v440
  %v442 = vpop.f32.mrb[0].mxu0
  %v443 = vpop.f32.mrb[0].mxu0
  %v444 = vadd.f32 0.0, %v443
  %v445 = vpop.f32.mrb[0].mxu0
  %446 = vmatprep.mubr.bf16.mxu0 0
  %447 = vmatmul.mubr.bf16.gmra.mrb[0].mxu0 %v108
  %v448 = vpop.f32.mrb[0].mxu0
  %v449 = vadd.f32 0.0, %v448
  %v450 = vpop.f32.mrb[0].mxu0
  %v451 = vpop.f32.mrb[0].mxu0
  %v452 = vadd.f32 0.0, %v451
  %v453 = vpop.f32.mrb[0].mxu0
  %454 = vmatprep.mubr.bf16.mxu0 0
  %455 = vmatmul.mubr.bf16.gmra.mrb[0].mxu0 %v109
  %v456 = vpop.f32.mrb[0].mxu0
  %v457 = vadd.f32 0.0, %v456
  %v458 = vpop.f32.mrb[0].mxu0
  %v459 = vpop.f32.mrb[0].mxu0
  %v460 = vadd.f32 0.0, %v459
  %v461 = vpop.f32.mrb[0].mxu0
  %462 = vdwg.mxu0
  %463 = vst [vmem:[%s2] sm:$0xff] %v209
  %464 = vst [vmem:[%s2 + $0x8] sm:$0xff] %v212
  %465 = vst [vmem:[%s2 + $0x10] sm:$0xff] %v217
  %466 = vst [vmem:[%s2 + $0x18] sm:$0xff] %v220
  %467 = vst [vmem:[%s2 + $0x20] sm:$0xff] %v225
  %468 = vst [vmem:[%s2 + $0x28] sm:$0xff] %v228
  %469 = vst [vmem:[%s2 + $0x30] sm:$0xff] %v233
  %470 = vst [vmem:[%s2 + $0x38] sm:$0xff] %v236
  %471 = vst [vmem:[%s2 + $0x40] sm:$0xff] %v241
  %472 = vst [vmem:[%s2 + $0x48] sm:$0xff] %v244
  %473 = vst [vmem:[%s2 + $0x50] sm:$0xff] %v249
  %474 = vst [vmem:[%s2 + $0x58] sm:$0xff] %v252
  %475 = vst [vmem:[%s2 + $0x60] sm:$0xff] %v257
  %476 = vst [vmem:[%s2 + $0x68] sm:$0xff] %v260
  %477 = vst [vmem:[%s2 + $0x70] sm:$0xff] %v265
  %478 = vst [vmem:[%s2 + $0x78] sm:$0xff] %v268
  %479 = vst [vmem:[%s2 + $0x80] sm:$0xff] %v273
  %480 = vst [vmem:[%s2 + $0x88] sm:$0xff] %v276
  %481 = vst [vmem:[%s2 + $0x90] sm:$0xff] %v281
  %482 = vst [vmem:[%s2 + $0x98] sm:$0xff] %v284
  %483 = vst [vmem:[%s2 + $0xa0] sm:$0xff] %v289
  %484 = vst [vmem:[%s2 + $0xa8] sm:$0xff] %v292
  %485 = vst [vmem:[%s2 + $0xb0] sm:$0xff] %v297
  %486 = vst [vmem:[%s2 + $0xb8] sm:$0xff] %v300
  %487 = vst [vmem:[%s2 + $0xc0] sm:$0xff] %v305
  %488 = vst [vmem:[%s2 + $0xc8] sm:$0xff] %v308
  %489 = vst [vmem:[%s2 + $0xd0] sm:$0xff] %v313
  %490 = vst [vmem:[%s2 + $0xd8] sm:$0xff] %v316
  %491 = vst [vmem:[%s2 + $0xe0] sm:$0xff] %v321
  %492 = vst [vmem:[%s2 + $0xe8] sm:$0xff] %v324
  %493 = vst [vmem:[%s2 + $0xf0] sm:$0xff] %v329
  %494 = vst [vmem:[%s2 + $0xf8] sm:$0xff] %v332
  %495 = vst [vmem:[%s2 + $0x100] sm:$0xff] %v337
  %496 = vst [vmem:[%s2 + $0x108] sm:$0xff] %v340
  %497 = vst [vmem:[%s2 + $0x110] sm:$0xff] %v345
  %498 = vst [vmem:[%s2 + $0x118] sm:$0xff] %v348
  %499 = vst [vmem:[%s2 + $0x120] sm:$0xff] %v353
  %500 = vst [vmem:[%s2 + $0x128] sm:$0xff] %v356
  %501 = vst [vmem:[%s2 + $0x130] sm:$0xff] %v361
  %502 = vst [vmem:[%s2 + $0x138] sm:$0xff] %v364
  %503 = vst [vmem:[%s2 + $0x140] sm:$0xff] %v369
  %504 = vst [vmem:[%s2 + $0x148] sm:$0xff] %v372
  %505 = vst [vmem:[%s2 + $0x150] sm:$0xff] %v377
  %506 = vst [vmem:[%s2 + $0x158] sm:$0xff] %v380
  %507 = vst [vmem:[%s2 + $0x160] sm:$0xff] %v385
  %508 = vst [vmem:[%s2 + $0x168] sm:$0xff] %v388
  %509 = vst [vmem:[%s2 + $0x170] sm:$0xff] %v393
  %510 = vst [vmem:[%s2 + $0x178] sm:$0xff] %v396
  %511 = vst [vmem:[%s2 + $0x180] sm:$0xff] %v401
  %512 = vst [vmem:[%s2 + $0x188] sm:$0xff] %v404
  %513 = vst [vmem:[%s2 + $0x190] sm:$0xff] %v409
  %514 = vst [vmem:[%s2 + $0x198] sm:$0xff] %v412
  %515 = vst [vmem:[%s2 + $0x1a0] sm:$0xff] %v417
  %516 = vst [vmem:[%s2 + $0x1a8] sm:$0xff] %v420
  %517 = vst [vmem:[%s2 + $0x1b0] sm:$0xff] %v425
  %518 = vst [vmem:[%s2 + $0x1b8] sm:$0xff] %v428
  %519 = vst [vmem:[%s2 + $0x1c0] sm:$0xff] %v433
  %520 = vst [vmem:[%s2 + $0x1c8] sm:$0xff] %v436
  %521 = vst [vmem:[%s2 + $0x1d0] sm:$0xff] %v441
  %522 = vst [vmem:[%s2 + $0x1d8] sm:$0xff] %v444
  %523 = vst [vmem:[%s2 + $0x1e0] sm:$0xff] %v449
  %524 = vst [vmem:[%s2 + $0x1e8] sm:$0xff] %v452
  %525 = vst [vmem:[%s2 + $0x1f0] sm:$0xff] %v457
  %526 = vst [vmem:[%s2 + $0x1f8] sm:$0xff] %v460
  %v527 = vadd.f32 %v209, %v212
  %v528 = vadd.f32 %v527, %v217
  %v529 = vadd.f32 %v528, %v220
  %v530 = vadd.f32 %v529, %v225
  %v531 = vadd.f32 %v530, %v228
  %v532 = vadd.f32 %v531, %v233
  %v533 = vadd.f32 %v532, %v236
  %v534 = vadd.f32 %v533, %v241
  %v535 = vadd.f32 %v534, %v244
  %v536 = vadd.f32 %v535, %v249
  %v537 = vadd.f32 %v536, %v252
  %v538 = vadd.f32 %v537, %v257
  %v539 = vadd.f32 %v538, %v260
  %v540 = vadd.f32 %v539, %v265
  %v541 = vadd.f32 %v540, %v268
  %v542 = vadd.f32 %v541, %v273
  %v543 = vadd.f32 %v542, %v276
  %v544 = vadd.f32 %v543, %v281
  %v545 = vadd.f32 %v544, %v284
  %v546 = vadd.f32 %v545, %v289
  %v547 = vadd.f32 %v546, %v292
  %v548 = vadd.f32 %v547, %v297
  %v549 = vadd.f32 %v548, %v300
  %v550 = vadd.f32 %v549, %v305
  %v551 = vadd.f32 %v550, %v308
  %v552 = vadd.f32 %v551, %v313
  %v553 = vadd.f32 %v552, %v316
  %v554 = vadd.f32 %v553, %v321
  %v555 = vadd.f32 %v554, %v324
  %v556 = vadd.f32 %v555, %v329
  %v557 = vadd.f32 %v556, %v332
  %v558 = vadd.f32 %v557, %v337
  %v559 = vadd.f32 %v558, %v340
  %v560 = vadd.f32 %v559, %v345
  %v561 = vadd.f32 %v560, %v348
  %v562 = vadd.f32 %v561, %v353
  %v563 = vadd.f32 %v562, %v356
  %v564 = vadd.f32 %v563, %v361
  %v565 = vadd.f32 %v564, %v364
  %v566 = vadd.f32 %v565, %v369
  %v567 = vadd.f32 %v566, %v372
  %v568 = vadd.f32 %v567, %v377
  %v569 = vadd.f32 %v568, %v380
  %v570 = vadd.f32 %v569, %v385
  %v571 = vadd.f32 %v570, %v388
  %v572 = vadd.f32 %v571, %v393
  %v573 = vadd.f32 %v572, %v396
  %v574 = vadd.f32 %v573, %v401
  %v575 = vadd.f32 %v574, %v404
  %v576 = vadd.f32 %v575, %v409
  %v577 = vadd.f32 %v576, %v412
  %v578 = vadd.f32 %v577, %v417
  %v579 = vadd.f32 %v578, %v420
  %v580 = vadd.f32 %v579, %v425
  %v581 = vadd.f32 %v580, %v428
  %v582 = vadd.f32 %v581, %v433
  %v583 = vadd.f32 %v582, %v436
  %v584 = vadd.f32 %v583, %v441
  %v585 = vadd.f32 %v584, %v444
  %v586 = vadd.f32 %v585, %v449
  %v587 = vadd.f32 %v586, %v452
  %v588 = vadd.f32 %v587, %v457
  %v589 = vadd.f32 %v588, %v460
  %v590 = vrot.slane %v589, 4
  %v591 = vadd.f32 %v589, %v590
  %v592 = vrot.slane %v591, 2
  %v593 = vadd.f32 %v591, %v592
  %v594 = vrot.slane %v593, 1
  %v595 = vadd.f32 %v593, %v594
  %596 = vst [vmem:[%s3] sm:$0x1] %v595
  %v597 = vmul.f32 %v209, %v209
  %v598 = vmul.f32 %v212, %v212
  %v599 = vmul.f32 %v217, %v217
  %v600 = vmul.f32 %v220, %v220
  %v601 = vmul.f32 %v225, %v225
  %v602 = vmul.f32 %v228, %v228
  %v603 = vmul.f32 %v233, %v233
  %v604 = vmul.f32 %v236, %v236
  %v605 = vmul.f32 %v241, %v241
  %v606 = vmul.f32 %v244, %v244
  %v607 = vmul.f32 %v249, %v249
  %v608 = vmul.f32 %v252, %v252
  %v609 = vmul.f32 %v257, %v257
  %v610 = vmul.f32 %v260, %v260
  %v611 = vmul.f32 %v265, %v265
  %v612 = vmul.f32 %v268, %v268
  %v613 = vmul.f32 %v273, %v273
  %v614 = vmul.f32 %v276, %v276
  %v615 = vmul.f32 %v281, %v281
  %v616 = vmul.f32 %v284, %v284
  %v617 = vmul.f32 %v289, %v289
  %v618 = vmul.f32 %v292, %v292
  %v619 = vmul.f32 %v297, %v297
  %v620 = vmul.f32 %v300, %v300
  %v621 = vmul.f32 %v305, %v305
  %v622 = vmul.f32 %v308, %v308
  %v623 = vmul.f32 %v313, %v313
  %v624 = vmul.f32 %v316, %v316
  %v625 = vmul.f32 %v321, %v321
  %v626 = vmul.f32 %v324, %v324
  %v627 = vmul.f32 %v329, %v329
  %v628 = vmul.f32 %v332, %v332
  %v629 = vmul.f32 %v337, %v337
  %v630 = vmul.f32 %v340, %v340
  %v631 = vmul.f32 %v345, %v345
  %v632 = vmul.f32 %v348, %v348
  %v633 = vmul.f32 %v353, %v353
  %v634 = vmul.f32 %v356, %v356
  %v635 = vmul.f32 %v361, %v361
  %v636 = vmul.f32 %v364, %v364
  %v637 = vmul.f32 %v369, %v369
  %v638 = vmul.f32 %v372, %v372
  %v639 = vmul.f32 %v377, %v377
  %v640 = vmul.f32 %v380, %v380
  %v641 = vmul.f32 %v385, %v385
  %v642 = vmul.f32 %v388, %v388
  %v643 = vmul.f32 %v393, %v393
  %v644 = vmul.f32 %v396, %v396
  %v645 = vmul.f32 %v401, %v401
  %v646 = vmul.f32 %v404, %v404
  %v647 = vmul.f32 %v409, %v409
  %v648 = vmul.f32 %v412, %v412
  %v649 = vmul.f32 %v417, %v417
  %v650 = vmul.f32 %v420, %v420
  %v651 = vmul.f32 %v425, %v425
  %v652 = vmul.f32 %v428, %v428
  %v653 = vmul.f32 %v433, %v433
  %v654 = vmul.f32 %v436, %v436
  %v655 = vmul.f32 %v441, %v441
  %v656 = vmul.f32 %v444, %v444
  %v657 = vmul.f32 %v449, %v449
  %v658 = vmul.f32 %v452, %v452
  %v659 = vmul.f32 %v457, %v457
  %v660 = vmul.f32 %v460, %v460
  %v661 = vadd.f32 %v597, %v598
  %v662 = vadd.f32 %v661, %v599
  %v663 = vadd.f32 %v662, %v600
  %v664 = vadd.f32 %v663, %v601
  %v665 = vadd.f32 %v664, %v602
  %v666 = vadd.f32 %v665, %v603
  %v667 = vadd.f32 %v666, %v604
  %v668 = vadd.f32 %v667, %v605
  %v669 = vadd.f32 %v668, %v606
  %v670 = vadd.f32 %v669, %v607
  %v671 = vadd.f32 %v670, %v608
  %v672 = vadd.f32 %v671, %v609
  %v673 = vadd.f32 %v672, %v610
  %v674 = vadd.f32 %v673, %v611
  %v675 = vadd.f32 %v674, %v612
  %v676 = vadd.f32 %v675, %v613
  %v677 = vadd.f32 %v676, %v614
  %v678 = vadd.f32 %v677, %v615
  %v679 = vadd.f32 %v678, %v616
  %v680 = vadd.f32 %v679, %v617
  %v681 = vadd.f32 %v680, %v618
  %v682 = vadd.f32 %v681, %v619
  %v683 = vadd.f32 %v682, %v620
  %v684 = vadd.f32 %v683, %v621
  %v685 = vadd.f32 %v684, %v622
  %v686 = vadd.f32 %v685, %v623
  %v687 = vadd.f32 %v686, %v624
  %v688 = vadd.f32 %v687, %v625
  %v689 = vadd.f32 %v688, %v626
  %v690 = vadd.f32 %v689, %v627
  %v691 = vadd.f32 %v690, %v628
  %v692 = vadd.f32 %v691, %v629
  %v693 = vadd.f32 %v692, %v630
  %v694 = vadd.f32 %v693, %v631
  %v695 = vadd.f32 %v694, %v632
  %v696 = vadd.f32 %v695, %v633
  %v697 = vadd.f32 %v696, %v634
  %v698 = vadd.f32 %v697, %v635
  %v699 = vadd.f32 %v698, %v636
  %v700 = vadd.f32 %v699, %v637
  %v701 = vadd.f32 %v700, %v638
  %v702 = vadd.f32 %v701, %v639
  %v703 = vadd.f32 %v702, %v640
  %v704 = vadd.f32 %v703, %v641
  %v705 = vadd.f32 %v704, %v642
  %v706 = vadd.f32 %v705, %v643
  %v707 = vadd.f32 %v706, %v644
  %v708 = vadd.f32 %v707, %v645
  %v709 = vadd.f32 %v708, %v646
  %v710 = vadd.f32 %v709, %v647
  %v711 = vadd.f32 %v710, %v648
  %v712 = vadd.f32 %v711, %v649
  %v713 = vadd.f32 %v712, %v650
  %v714 = vadd.f32 %v713, %v651
  %v715 = vadd.f32 %v714, %v652
  %v716 = vadd.f32 %v715, %v653
  %v717 = vadd.f32 %v716, %v654
  %v718 = vadd.f32 %v717, %v655
  %v719 = vadd.f32 %v718, %v656
  %v720 = vadd.f32 %v719, %v657
  %v721 = vadd.f32 %v720, %v658
  %v722 = vadd.f32 %v721, %v659
  %v723 = vadd.f32 %v722, %v660
  %v724 = vrot.slane %v723, 4
  %v725 = vadd.f32 %v723, %v724
  %v726 = vrot.slane %v725, 2
  %v727 = vadd.f32 %v725, %v726
  %v728 = vrot.slane %v727, 1
  %v729 = vadd.f32 %v727, %v728
  %730 = vst [vmem:[%s3 + $0x1] sm:$0x1] %v729
  // Predicated region
  $region10: #{residual_forward.7} parent=0 // pred_check
    _
  $region11: #{residual_forward.7} parent=0 // pred_check_branch
    %732 = sbr.rel (0) target = $region13
  $region12: #{residual_forward.7} parent=0 // pred_region
    _
  $region13: #{residual_forward.7} parent=0 // pred_fallthru
    _
  // Predicated region
  $region14: #{residual_forward.7} parent=0 // pred_check
    _
  $region15: #{residual_forward.7} parent=0 // pred_check_branch
    %734 = sbr.rel (0) target = $region17
  $region16: #{residual_forward.7} parent=0 // pred_region
    _
  $region17: #{residual_forward.7} parent=0 // pred_fallthru
    _
  // Predicated region
  $region18: #{residual_forward.7} parent=0 // pred_check
    _
  $region19: #{residual_forward.7} parent=0 // pred_check_branch
    %736 = sbr.rel (0) target = $region21
  $region20: #{residual_forward.7} parent=0 // pred_region
    _
  $region21: #{residual_forward.7} parent=0 // pred_fallthru
    _
  // Predicated region
  $region22: #{residual_forward.7} parent=0 // pred_check
    _
  $region23: #{residual_forward.7} parent=0 // pred_check_branch
    %738 = sbr.rel (0) target = $region25
  $region24: #{residual_forward.7} parent=0 // pred_region
    _
  $region25: #{residual_forward.7} parent=0 // pred_fallthru
    _

// kernel: residual_forward.10
$region0: #{residual_forward.10}
  #allocation0 [shape = 'u32[]', space=smem, size = 0x4, offset = 0x4, fixed_abs, tag = 'smem constant byte address 0x4 - core index']
  #allocation1 [shape = 'u32[144,128]{1,0:T(1,128)}', space=vmem, size = 0x12000, scoped, tag = 'internal scratch']
  %s0 = inlined_call_operand.vmem [shape: f32[512,128], index: 0, kind: input, shape index: {}]
  %s1 = inlined_call_operand.vmem [shape: f32[512,128], index: 1, kind: input, shape index: {}]
  %s2 = inlined_call_operand.vmem [shape: f32[1,128], index: 2, kind: input, shape index: {}]
  %s3 = inlined_call_operand.vmem [shape: f32[1,128], index: 3, kind: input, shape index: {}]
  %s4 = inlined_call_operand.vmem [shape: bf16[128,128], index: 4, kind: input, shape index: {}]
  %s5 = inlined_call_operand.vmem [shape: f32[512,128], index: 5, kind: output, shape index: {0}]
  %s6 = inlined_call_operand.vmem [shape: f32[512,128], index: 6, kind: output, shape index: {1}]
  %s7 = inlined_call_operand.vmem [shape: f32[1,2,128], index: 7, kind: output, shape index: {2}]
  %8 = xla_tuple %s5, %s6, %s7
  %s9 = sld [smem:[#allocation0]]
  $region46: #{residual_forward.10} parent=0
    _
  %s11 = ssub.s32 1, %s9
  %s12 = scalar_select 0, %s11, %s9
  // Predicated region
  $region2: #{residual_forward.10} parent=0 // pred_check
    _
  $region3: #{residual_forward.10} parent=0 // pred_check_branch
    %14 = sbr.rel (0) target = $region5
  $region4: #{residual_forward.10} parent=0 // pred_region
    _
  $region5: #{residual_forward.10} parent=0 // pred_fallthru
    _
  // Predicated region
  $region6: #{residual_forward.10} parent=0 // pred_check
    _
  $region7: #{residual_forward.10} parent=0 // pred_check_branch
    %16 = sbr.rel (0) target = $region9
  $region8: #{residual_forward.10} parent=0 // pred_region
    _
  $region9: #{residual_forward.10} parent=0 // pred_fallthru
    _
  // Predicated region
  $region10: #{residual_forward.10} parent=0 // pred_check
    _
  $region11: #{residual_forward.10} parent=0 // pred_check_branch
    %18 = sbr.rel (0) target = $region13
  $region12: #{residual_forward.10} parent=0 // pred_region
    _
  $region13: #{residual_forward.10} parent=0 // pred_fallthru
    _
  // Predicated region
  $region14: #{residual_forward.10} parent=0 // pred_check
    _
  $region15: #{residual_forward.10} parent=0 // pred_check_branch
    %20 = sbr.rel (0) target = $region17
  $region16: #{residual_forward.10} parent=0 // pred_region
    _
  $region17: #{residual_forward.10} parent=0 // pred_fallthru
    _
  // Predicated region
  $region18: #{residual_forward.10} parent=0 // pred_check
    _
  $region19: #{residual_forward.10} parent=0 // pred_check_branch
    %22 = sbr.rel (0) target = $region21
  $region20: #{residual_forward.10} parent=0 // pred_region
    _
  $region21: #{residual_forward.10} parent=0 // pred_fallthru
    _
  %v24 = vld [vmem:[%s1] sm:$0xff]
  %v25 = vld [vmem:[%s1 + $0x8] sm:$0xff]
  %v26 = vld [vmem:[%s1 + $0x10] sm:$0xff]
  %v27 = vld [vmem:[%s1 + $0x18] sm:$0xff]
  %v28 = vld [vmem:[%s1 + $0x20] sm:$0xff]
  %v29 = vld [vmem:[%s1 + $0x28] sm:$0xff]
  %v30 = vld [vmem:[%s1 + $0x30] sm:$0xff]
  %v31 = vld [vmem:[%s1 + $0x38] sm:$0xff]
  %v32 = vld [vmem:[%s1 + $0x40] sm:$0xff]
  %v33 = vld [vmem:[%s1 + $0x48] sm:$0xff]
  %v34 = vld [vmem:[%s1 + $0x50] sm:$0xff]
  %v35 = vld [vmem:[%s1 + $0x58] sm:$0xff]
  %v36 = vld [vmem:[%s1 + $0x60] sm:$0xff]
  %v37 = vld [vmem:[%s1 + $0x68] sm:$0xff]
  %v38 = vld [vmem:[%s1 + $0x70] sm:$0xff]
  %v39 = vld [vmem:[%s1 + $0x78] sm:$0xff]
  %v40 = vld [vmem:[%s1 + $0x80] sm:$0xff]
  %v41 = vld [vmem:[%s1 + $0x88] sm:$0xff]
  %v42 = vld [vmem:[%s1 + $0x90] sm:$0xff]
  %v43 = vld [vmem:[%s1 + $0x98] sm:$0xff]
  %v44 = vld [vmem:[%s1 + $0xa0] sm:$0xff]
  %v45 = vld [vmem:[%s1 + $0xa8] sm:$0xff]
  %v46 = vld [vmem:[%s1 + $0xb0] sm:$0xff]
  %v47 = vld [vmem:[%s1 + $0xb8] sm:$0xff]
  %v48 = vld [vmem:[%s1 + $0xc0] sm:$0xff]
  %v49 = vld [vmem:[%s1 + $0xc8] sm:$0xff]
  %v50 = vld [vmem:[%s1 + $0xd0] sm:$0xff]
  %v51 = vld [vmem:[%s1 + $0xd8] sm:$0xff]
  %v52 = vld [vmem:[%s1 + $0xe0] sm:$0xff]
  %v53 = vld [vmem:[%s1 + $0xe8] sm:$0xff]
  %v54 = vld [vmem:[%s1 + $0xf0] sm:$0xff]
  %v55 = vld [vmem:[%s1 + $0xf8] sm:$0xff]
  %v56 = vld [vmem:[%s1 + $0x100] sm:$0xff]
  %v57 = vld [vmem:[%s1 + $0x108] sm:$0xff]
  %v58 = vld [vmem:[%s1 + $0x110] sm:$0xff]
  %v59 = vld [vmem:[%s1 + $0x118] sm:$0xff]
  %v60 = vld [vmem:[%s1 + $0x120] sm:$0xff]
  %v61 = vld [vmem:[%s1 + $0x128] sm:$0xff]
  %v62 = vld [vmem:[%s1 + $0x130] sm:$0xff]
  %v63 = vld [vmem:[%s1 + $0x138] sm:$0xff]
  %v64 = vld [vmem:[%s1 + $0x140] sm:$0xff]
  %v65 = vld [vmem:[%s1 + $0x148] sm:$0xff]
  %v66 = vld [vmem:[%s1 + $0x150] sm:$0xff]
  %v67 = vld [vmem:[%s1 + $0x158] sm:$0xff]
  %v68 = vld [vmem:[%s1 + $0x160] sm:$0xff]
  %v69 = vld [vmem:[%s1 + $0x168] sm:$0xff]
  %v70 = vld [vmem:[%s1 + $0x170] sm:$0xff]
  %v71 = vld [vmem:[%s1 + $0x178] sm:$0xff]
  %v72 = vld [vmem:[%s1 + $0x180] sm:$0xff]
  %v73 = vld [vmem:[%s1 + $0x188] sm:$0xff]
  %v74 = vld [vmem:[%s1 + $0x190] sm:$0xff]
  %v75 = vld [vmem:[%s1 + $0x198] sm:$0xff]
  %v76 = vld [vmem:[%s1 + $0x1a0] sm:$0xff]
  %v77 = vld [vmem:[%s1 + $0x1a8] sm:$0xff]
  %v78 = vld [vmem:[%s1 + $0x1b0] sm:$0xff]
  %v79 = vld [vmem:[%s1 + $0x1b8] sm:$0xff]
  %v80 = vld [vmem:[%s1 + $0x1c0] sm:$0xff]
  %v81 = vld [vmem:[%s1 + $0x1c8] sm:$0xff]
  %v82 = vld [vmem:[%s1 + $0x1d0] sm:$0xff]
  %v83 = vld [vmem:[%s1 + $0x1d8] sm:$0xff]
  %v84 = vld [vmem:[%s1 + $0x1e0] sm:$0xff]
  %v85 = vld [vmem:[%s1 + $0x1e8] sm:$0xff]
  %v86 = vld [vmem:[%s1 + $0x1f0] sm:$0xff]
  %v87 = vld [vmem:[%s1 + $0x1f8] sm:$0xff]
  %v88 = vld [vmem:[%s0] sm:$0xff]
  %v89 = vld [vmem:[%s0 + $0x8] sm:$0xff]
  %v90 = vld [vmem:[%s0 + $0x10] sm:$0xff]
  %v91 = vld [vmem:[%s0 + $0x18] sm:$0xff]
  %v92 = vld [vmem:[%s0 + $0x20] sm:$0xff]
  %v93 = vld [vmem:[%s0 + $0x28] sm:$0xff]
  %v94 = vld [vmem:[%s0 + $0x30] sm:$0xff]
  %v95 = vld [vmem:[%s0 + $0x38] sm:$0xff]
  %v96 = vld [vmem:[%s0 + $0x40] sm:$0xff]
  %v97 = vld [vmem:[%s0 + $0x48] sm:$0xff]
  %v98 = vld [vmem:[%s0 + $0x50] sm:$0xff]
  %v99 = vld [vmem:[%s0 + $0x58] sm:$0xff]
  %v100 = vld [vmem:[%s0 + $0x60] sm:$0xff]
  %v101 = vld [vmem:[%s0 + $0x68] sm:$0xff]
  %v102 = vld [vmem:[%s0 + $0x70] sm:$0xff]
  %v103 = vld [vmem:[%s0 + $0x78] sm:$0xff]
  %v104 = vld [vmem:[%s0 + $0x80] sm:$0xff]
  %v105 = vld [vmem:[%s0 + $0x88] sm:$0xff]
  %v106 = vld [vmem:[%s0 + $0x90] sm:$0xff]
  %v107 = vld [vmem:[%s0 + $0x98] sm:$0xff]
  %v108 = vld [vmem:[%s0 + $0xa0] sm:$0xff]
  %v109 = vld [vmem:[%s0 + $0xa8] sm:$0xff]
  %v110 = vld [vmem:[%s0 + $0xb0] sm:$0xff]
  %v111 = vld [vmem:[%s0 + $0xb8] sm:$0xff]
  %v112 = vld [vmem:[%s0 + $0xc0] sm:$0xff]
  %v113 = vld [vmem:[%s0 + $0xc8] sm:$0xff]
  %v114 = vld [vmem:[%s0 + $0xd0] sm:$0xff]
  %v115 = vld [vmem:[%s0 + $0xd8] sm:$0xff]
  %v116 = vld [vmem:[%s0 + $0xe0] sm:$0xff]
  %v117 = vld [vmem:[%s0 + $0xe8] sm:$0xff]
  %v118 = vld [vmem:[%s0 + $0xf0] sm:$0xff]
  %v119 = vld [vmem:[%s0 + $0xf8] sm:$0xff]
  %v120 = vld [vmem:[%s0 + $0x100] sm:$0xff]
  %v121 = vld [vmem:[%s0 + $0x108] sm:$0xff]
  %v122 = vld [vmem:[%s0 + $0x110] sm:$0xff]
  %v123 = vld [vmem:[%s0 + $0x118] sm:$0xff]
  %v124 = vld [vmem:[%s0 + $0x120] sm:$0xff]
  %v125 = vld [vmem:[%s0 + $0x128] sm:$0xff]
  %v126 = vld [vmem:[%s0 + $0x130] sm:$0xff]
  %v127 = vld [vmem:[%s0 + $0x138] sm:$0xff]
  %v128 = vld [vmem:[%s0 + $0x140] sm:$0xff]
  %v129 = vld [vmem:[%s0 + $0x148] sm:$0xff]
  %v130 = vld [vmem:[%s0 + $0x150] sm:$0xff]
  %v131 = vld [vmem:[%s0 + $0x158] sm:$0xff]
  %v132 = vld [vmem:[%s0 + $0x160] sm:$0xff]
  %v133 = vld [vmem:[%s0 + $0x168] sm:$0xff]
  %v134 = vld [vmem:[%s0 + $0x170] sm:$0xff]
  %v135 = vld [vmem:[%s0 + $0x178] sm:$0xff]
  %v136 = vld [vmem:[%s0 + $0x180] sm:$0xff]
  %v137 = vld [vmem:[%s0 + $0x188] sm:$0xff]
  %v138 = vld [vmem:[%s0 + $0x190] sm:$0xff]
  %v139 = vld [vmem:[%s0 + $0x198] sm:$0xff]
  %v140 = vld [vmem:[%s0 + $0x1a0] sm:$0xff]
  %v141 = vld [vmem:[%s0 + $0x1a8] sm:$0xff]
  %v142 = vld [vmem:[%s0 + $0x1b0] sm:$0xff]
  %v143 = vld [vmem:[%s0 + $0x1b8] sm:$0xff]
  %v144 = vld [vmem:[%s0 + $0x1c0] sm:$0xff]
  %v145 = vld [vmem:[%s0 + $0x1c8] sm:$0xff]
  %v146 = vld [vmem:[%s0 + $0x1d0] sm:$0xff]
  %v147 = vld [vmem:[%s0 + $0x1d8] sm:$0xff]
  %v148 = vld [vmem:[%s0 + $0x1e0] sm:$0xff]
  %v149 = vld [vmem:[%s0 + $0x1e8] sm:$0xff]
  %v150 = vld [vmem:[%s0 + $0x1f0] sm:$0xff]
  %v151 = vld [vmem:[%s0 + $0x1f8] sm:$0xff]
  %v152 = vld [vmem:[%s2] sm:$0x1]
  %v154 = vlaneseq
  %v155 = vshrl.u32 %v154, 7
  %v156 = vsub.s32 0, %v155
  %v157 = vrot.slane %v152, %v156
  %v159 = vmul.f32 %v88, %v157
  %v160 = vmul.f32 %v89, %v157
  %v161 = vmul.f32 %v90, %v157
  %v162 = vmul.f32 %v91, %v157
  %v163 = vmul.f32 %v92, %v157
  %v164 = vmul.f32 %v93, %v157
  %v165 = vmul.f32 %v94, %v157
  %v166 = vmul.f32 %v95, %v157
  %v167 = vmul.f32 %v96, %v157
  %v168 = vmul.f32 %v97, %v157
  %v169 = vmul.f32 %v98, %v157
  %v170 = vmul.f32 %v99, %v157
  %v171 = vmul.f32 %v100, %v157
  %v172 = vmul.f32 %v101, %v157
  %v173 = vmul.f32 %v102, %v157
  %v174 = vmul.f32 %v103, %v157
  %v175 = vmul.f32 %v104, %v157
  %v176 = vmul.f32 %v105, %v157
  %v177 = vmul.f32 %v106, %v157
  %v178 = vmul.f32 %v107, %v157
  %v179 = vmul.f32 %v108, %v157
  %v180 = vmul.f32 %v109, %v157
  %v181 = vmul.f32 %v110, %v157
  %v182 = vmul.f32 %v111, %v157
  %v183 = vmul.f32 %v112, %v157
  %v184 = vmul.f32 %v113, %v157
  %v185 = vmul.f32 %v114, %v157
  %v186 = vmul.f32 %v115, %v157
  %v187 = vmul.f32 %v116, %v157
  %v188 = vmul.f32 %v117, %v157
  %v189 = vmul.f32 %v118, %v157
  %v190 = vmul.f32 %v119, %v157
  %v191 = vmul.f32 %v120, %v157
  %v192 = vmul.f32 %v121, %v157
  %v193 = vmul.f32 %v122, %v157
  %v194 = vmul.f32 %v123, %v157
  %v195 = vmul.f32 %v124, %v157
  %v196 = vmul.f32 %v125, %v157
  %v197 = vmul.f32 %v126, %v157
  %v198 = vmul.f32 %v127, %v157
  %v199 = vmul.f32 %v128, %v157
  %v200 = vmul.f32 %v129, %v157
  %v201 = vmul.f32 %v130, %v157
  %v202 = vmul.f32 %v131, %v157
  %v203 = vmul.f32 %v132, %v157
  %v204 = vmul.f32 %v133, %v157
  %v205 = vmul.f32 %v134, %v157
  %v206 = vmul.f32 %v135, %v157
  %v207 = vmul.f32 %v136, %v157
  %v208 = vmul.f32 %v137, %v157
  %v209 = vmul.f32 %v138, %v157
  %v210 = vmul.f32 %v139, %v157
  %v211 = vmul.f32 %v140, %v157
  %v212 = vmul.f32 %v141, %v157
  %v213 = vmul.f32 %v142, %v157
  %v214 = vmul.f32 %v143, %v157
  %v215 = vmul.f32 %v144, %v157
  %v216 = vmul.f32 %v145, %v157
  %v217 = vmul.f32 %v146, %v157
  %v218 = vmul.f32 %v147, %v157
  %v219 = vmul.f32 %v148, %v157
  %v220 = vmul.f32 %v149, %v157
  %v221 = vmul.f32 %v150, %v157
  %v222 = vmul.f32 %v151, %v157
  %v223 = vadd.f32 %v24, %v159
  %v224 = vadd.f32 %v25, %v160
  %v225 = vadd.f32 %v26, %v161
  %v226 = vadd.f32 %v27, %v162
  %v227 = vadd.f32 %v28, %v163
  %v228 = vadd.f32 %v29, %v164
  %v229 = vadd.f32 %v30, %v165
  %v230 = vadd.f32 %v31, %v166
  %v231 = vadd.f32 %v32, %v167
  %v232 = vadd.f32 %v33, %v168
  %v233 = vadd.f32 %v34, %v169
  %v234 = vadd.f32 %v35, %v170
  %v235 = vadd.f32 %v36, %v171
  %v236 = vadd.f32 %v37, %v172
  %v237 = vadd.f32 %v38, %v173
  %v238 = vadd.f32 %v39, %v174
  %v239 = vadd.f32 %v40, %v175
  %v240 = vadd.f32 %v41, %v176
  %v241 = vadd.f32 %v42, %v177
  %v242 = vadd.f32 %v43, %v178
  %v243 = vadd.f32 %v44, %v179
  %v244 = vadd.f32 %v45, %v180
  %v245 = vadd.f32 %v46, %v181
  %v246 = vadd.f32 %v47, %v182
  %v247 = vadd.f32 %v48, %v183
  %v248 = vadd.f32 %v49, %v184
  %v249 = vadd.f32 %v50, %v185
  %v250 = vadd.f32 %v51, %v186
  %v251 = vadd.f32 %v52, %v187
  %v252 = vadd.f32 %v53, %v188
  %v253 = vadd.f32 %v54, %v189
  %v254 = vadd.f32 %v55, %v190
  %v255 = vadd.f32 %v56, %v191
  %v256 = vadd.f32 %v57, %v192
  %v257 = vadd.f32 %v58, %v193
  %v258 = vadd.f32 %v59, %v194
  %v259 = vadd.f32 %v60, %v195
  %v260 = vadd.f32 %v61, %v196
  %v261 = vadd.f32 %v62, %v197
  %v262 = vadd.f32 %v63, %v198
  %v263 = vadd.f32 %v64, %v199
  %v264 = vadd.f32 %v65, %v200
  %v265 = vadd.f32 %v66, %v201
  %v266 = vadd.f32 %v67, %v202
  %v267 = vadd.f32 %v68, %v203
  %v268 = vadd.f32 %v69, %v204
  %v269 = vadd.f32 %v70, %v205
  %v270 = vadd.f32 %v71, %v206
  %v271 = vadd.f32 %v72, %v207
  %v272 = vadd.f32 %v73, %v208
  %v273 = vadd.f32 %v74, %v209
  %v274 = vadd.f32 %v75, %v210
  %v275 = vadd.f32 %v76, %v211
  %v276 = vadd.f32 %v77, %v212
  %v277 = vadd.f32 %v78, %v213
  %v278 = vadd.f32 %v79, %v214
  %v279 = vadd.f32 %v80, %v215
  %v280 = vadd.f32 %v81, %v216
  %v281 = vadd.f32 %v82, %v217
  %v282 = vadd.f32 %v83, %v218
  %v283 = vadd.f32 %v84, %v219
  %v284 = vadd.f32 %v85, %v220
  %v285 = vadd.f32 %v86, %v221
  %v286 = vadd.f32 %v87, %v222
  %v287 = vld [vmem:[%s3] sm:$0x1]
  %v289 = vlaneseq
  %v290 = vshrl.u32 %v289, 7
  %v291 = vsub.s32 0, %v290
  %v292 = vrot.slane %v287, %v291
  %v294 = vadd.f32 %v223, %v292
  %v295 = vadd.f32 %v224, %v292
  %v296 = vadd.f32 %v225, %v292
  %v297 = vadd.f32 %v226, %v292
  %v298 = vadd.f32 %v227, %v292
  %v299 = vadd.f32 %v228, %v292
  %v300 = vadd.f32 %v229, %v292
  %v301 = vadd.f32 %v230, %v292
  %v302 = vadd.f32 %v231, %v292
  %v303 = vadd.f32 %v232, %v292
  %v304 = vadd.f32 %v233, %v292
  %v305 = vadd.f32 %v234, %v292
  %v306 = vadd.f32 %v235, %v292
  %v307 = vadd.f32 %v236, %v292
  %v308 = vadd.f32 %v237, %v292
  %v309 = vadd.f32 %v238, %v292
  %v310 = vadd.f32 %v239, %v292
  %v311 = vadd.f32 %v240, %v292
  %v312 = vadd.f32 %v241, %v292
  %v313 = vadd.f32 %v242, %v292
  %v314 = vadd.f32 %v243, %v292
  %v315 = vadd.f32 %v244, %v292
  %v316 = vadd.f32 %v245, %v292
  %v317 = vadd.f32 %v246, %v292
  %v318 = vadd.f32 %v247, %v292
  %v319 = vadd.f32 %v248, %v292
  %v320 = vadd.f32 %v249, %v292
  %v321 = vadd.f32 %v250, %v292
  %v322 = vadd.f32 %v251, %v292
  %v323 = vadd.f32 %v252, %v292
  %v324 = vadd.f32 %v253, %v292
  %v325 = vadd.f32 %v254, %v292
  %v326 = vadd.f32 %v255, %v292
  %v327 = vadd.f32 %v256, %v292
  %v328 = vadd.f32 %v257, %v292
  %v329 = vadd.f32 %v258, %v292
  %v330 = vadd.f32 %v259, %v292
  %v331 = vadd.f32 %v260, %v292
  %v332 = vadd.f32 %v261, %v292
  %v333 = vadd.f32 %v262, %v292
  %v334 = vadd.f32 %v263, %v292
  %v335 = vadd.f32 %v264, %v292
  %v336 = vadd.f32 %v265, %v292
  %v337 = vadd.f32 %v266, %v292
  %v338 = vadd.f32 %v267, %v292
  %v339 = vadd.f32 %v268, %v292
  %v340 = vadd.f32 %v269, %v292
  %v341 = vadd.f32 %v270, %v292
  %v342 = vadd.f32 %v271, %v292
  %v343 = vadd.f32 %v272, %v292
  %v344 = vadd.f32 %v273, %v292
  %v345 = vadd.f32 %v274, %v292
  %v346 = vadd.f32 %v275, %v292
  %v347 = vadd.f32 %v276, %v292
  %v348 = vadd.f32 %v277, %v292
  %v349 = vadd.f32 %v278, %v292
  %v350 = vadd.f32 %v279, %v292
  %v351 = vadd.f32 %v280, %v292
  %v352 = vadd.f32 %v281, %v292
  %v353 = vadd.f32 %v282, %v292
  %v354 = vadd.f32 %v283, %v292
  %v355 = vadd.f32 %v284, %v292
  %v356 = vadd.f32 %v285, %v292
  %v357 = vadd.f32 %v286, %v292
  %358 = vst [vmem:[%s5] sm:$0xff] %v294
  %359 = vst [vmem:[%s5 + $0x8] sm:$0xff] %v295
  %360 = vst [vmem:[%s5 + $0x10] sm:$0xff] %v296
  %361 = vst [vmem:[%s5 + $0x18] sm:$0xff] %v297
  %362 = vst [vmem:[%s5 + $0x20] sm:$0xff] %v298
  %363 = vst [vmem:[%s5 + $0x28] sm:$0xff] %v299
  %364 = vst [vmem:[%s5 + $0x30] sm:$0xff] %v300
  %365 = vst [vmem:[%s5 + $0x38] sm:$0xff] %v301
  %366 = vst [vmem:[%s5 + $0x40] sm:$0xff] %v302
  %367 = vst [vmem:[%s5 + $0x48] sm:$0xff] %v303
  %368 = vst [vmem:[%s5 + $0x50] sm:$0xff] %v304
  %369 = vst [vmem:[%s5 + $0x58] sm:$0xff] %v305
  %370 = vst [vmem:[%s5 + $0x60] sm:$0xff] %v306
  %371 = vst [vmem:[%s5 + $0x68] sm:$0xff] %v307
  %372 = vst [vmem:[%s5 + $0x70] sm:$0xff] %v308
  %373 = vst [vmem:[%s5 + $0x78] sm:$0xff] %v309
  %374 = vst [vmem:[%s5 + $0x80] sm:$0xff] %v310
  %375 = vst [vmem:[%s5 + $0x88] sm:$0xff] %v311
  %376 = vst [vmem:[%s5 + $0x90] sm:$0xff] %v312
  %377 = vst [vmem:[%s5 + $0x98] sm:$0xff] %v313
  %378 = vst [vmem:[%s5 + $0xa0] sm:$0xff] %v314
  %379 = vst [vmem:[%s5 + $0xa8] sm:$0xff] %v315
  %380 = vst [vmem:[%s5 + $0xb0] sm:$0xff] %v316
  %381 = vst [vmem:[%s5 + $0xb8] sm:$0xff] %v317
  %382 = vst [vmem:[%s5 + $0xc0] sm:$0xff] %v318
  %383 = vst [vmem:[%s5 + $0xc8] sm:$0xff] %v319
  %384 = vst [vmem:[%s5 + $0xd0] sm:$0xff] %v320
  %385 = vst [vmem:[%s5 + $0xd8] sm:$0xff] %v321
  %386 = vst [vmem:[%s5 + $0xe0] sm:$0xff] %v322
  %387 = vst [vmem:[%s5 + $0xe8] sm:$0xff] %v323
  %388 = vst [vmem:[%s5 + $0xf0] sm:$0xff] %v324
  %389 = vst [vmem:[%s5 + $0xf8] sm:$0xff] %v325
  %390 = vst [vmem:[%s5 + $0x100] sm:$0xff] %v326
  %391 = vst [vmem:[%s5 + $0x108] sm:$0xff] %v327
  %392 = vst [vmem:[%s5 + $0x110] sm:$0xff] %v328
  %393 = vst [vmem:[%s5 + $0x118] sm:$0xff] %v329
  %394 = vst [vmem:[%s5 + $0x120] sm:$0xff] %v330
  %395 = vst [vmem:[%s5 + $0x128] sm:$0xff] %v331
  %396 = vst [vmem:[%s5 + $0x130] sm:$0xff] %v332
  %397 = vst [vmem:[%s5 + $0x138] sm:$0xff] %v333
  %398 = vst [vmem:[%s5 + $0x140] sm:$0xff] %v334
  %399 = vst [vmem:[%s5 + $0x148] sm:$0xff] %v335
  %400 = vst [vmem:[%s5 + $0x150] sm:$0xff] %v336
  %401 = vst [vmem:[%s5 + $0x158] sm:$0xff] %v337
  %402 = vst [vmem:[%s5 + $0x160] sm:$0xff] %v338
  %403 = vst [vmem:[%s5 + $0x168] sm:$0xff] %v339
  %404 = vst [vmem:[%s5 + $0x170] sm:$0xff] %v340
  %405 = vst [vmem:[%s5 + $0x178] sm:$0xff] %v341
  %406 = vst [vmem:[%s5 + $0x180] sm:$0xff] %v342
  %407 = vst [vmem:[%s5 + $0x188] sm:$0xff] %v343
  %408 = vst [vmem:[%s5 + $0x190] sm:$0xff] %v344
  %409 = vst [vmem:[%s5 + $0x198] sm:$0xff] %v345
  %410 = vst [vmem:[%s5 + $0x1a0] sm:$0xff] %v346
  %411 = vst [vmem:[%s5 + $0x1a8] sm:$0xff] %v347
  %412 = vst [vmem:[%s5 + $0x1b0] sm:$0xff] %v348
  %413 = vst [vmem:[%s5 + $0x1b8] sm:$0xff] %v349
  %414 = vst [vmem:[%s5 + $0x1c0] sm:$0xff] %v350
  %415 = vst [vmem:[%s5 + $0x1c8] sm:$0xff] %v351
  %416 = vst [vmem:[%s5 + $0x1d0] sm:$0xff] %v352
  %417 = vst [vmem:[%s5 + $0x1d8] sm:$0xff] %v353
  %418 = vst [vmem:[%s5 + $0x1e0] sm:$0xff] %v354
  %419 = vst [vmem:[%s5 + $0x1e8] sm:$0xff] %v355
  %420 = vst [vmem:[%s5 + $0x1f0] sm:$0xff] %v356
  %421 = vst [vmem:[%s5 + $0x1f8] sm:$0xff] %v357
  %v422 = vpack.c.bf16 %v295, %v294
  %v423 = vpack.c.bf16 %v297, %v296
  %v424 = vpack.c.bf16 %v299, %v298
  %v425 = vpack.c.bf16 %v301, %v300
  %v426 = vpack.c.bf16 %v303, %v302
  %v427 = vpack.c.bf16 %v305, %v304
  %v428 = vpack.c.bf16 %v307, %v306
  %v429 = vpack.c.bf16 %v309, %v308
  %v430 = vpack.c.bf16 %v311, %v310
  %v431 = vpack.c.bf16 %v313, %v312
  %v432 = vpack.c.bf16 %v315, %v314
  %v433 = vpack.c.bf16 %v317, %v316
  %v434 = vpack.c.bf16 %v319, %v318
  %v435 = vpack.c.bf16 %v321, %v320
  %v436 = vpack.c.bf16 %v323, %v322
  %v437 = vpack.c.bf16 %v325, %v324
  %v438 = vpack.c.bf16 %v327, %v326
  %v439 = vpack.c.bf16 %v329, %v328
  %v440 = vpack.c.bf16 %v331, %v330
  %v441 = vpack.c.bf16 %v333, %v332
  %v442 = vpack.c.bf16 %v335, %v334
  %v443 = vpack.c.bf16 %v337, %v336
  %v444 = vpack.c.bf16 %v339, %v338
  %v445 = vpack.c.bf16 %v341, %v340
  %v446 = vpack.c.bf16 %v343, %v342
  %v447 = vpack.c.bf16 %v345, %v344
  %v448 = vpack.c.bf16 %v347, %v346
  %v449 = vpack.c.bf16 %v349, %v348
  %v450 = vpack.c.bf16 %v351, %v350
  %v451 = vpack.c.bf16 %v353, %v352
  %v452 = vpack.c.bf16 %v355, %v354
  %v453 = vpack.c.bf16 %v357, %v356
  %v454 = vld [vmem:[%s4] sm:$0xf]
  %v455 = vld [vmem:[%s4 + $0x4] sm:$0xf]
  %v456 = vld [vmem:[%s4 + $0x8] sm:$0xf]
  %v457 = vld [vmem:[%s4 + $0xc] sm:$0xf]
  %v458 = vld [vmem:[%s4 + $0x10] sm:$0xf]
  %v459 = vld [vmem:[%s4 + $0x14] sm:$0xf]
  %v460 = vld [vmem:[%s4 + $0x18] sm:$0xf]
  %v461 = vld [vmem:[%s4 + $0x1c] sm:$0xf]
  %v462 = vld [vmem:[%s4 + $0x20] sm:$0xf]
  %v463 = vld [vmem:[%s4 + $0x24] sm:$0xf]
  %v464 = vld [vmem:[%s4 + $0x28] sm:$0xf]
  %v465 = vld [vmem:[%s4 + $0x2c] sm:$0xf]
  %v466 = vld [vmem:[%s4 + $0x30] sm:$0xf]
  %v467 = vld [vmem:[%s4 + $0x34] sm:$0xf]
  %v468 = vld [vmem:[%s4 + $0x38] sm:$0xf]
  %v469 = vld [vmem:[%s4 + $0x3c] sm:$0xf]
  %v486 = vunpack.c.l.b16 %v454
  %v487 = vunpack.c.l.b16 %v455
  %v488 = vunpack.c.l.b16 %v456
  %v489 = vunpack.c.l.b16 %v457
  %v490 = vunpack.c.l.b16 %v458
  %v491 = vunpack.c.l.b16 %v459
  %v492 = vunpack.c.l.b16 %v460
  %v493 = vunpack.c.l.b16 %v461
  %v494 = vunpack.c.l.b16 %v462
  %v495 = vunpack.c.l.b16 %v463
  %v496 = vunpack.c.l.b16 %v464
  %v497 = vunpack.c.l.b16 %v465
  %v498 = vunpack.c.l.b16 %v466
  %v499 = vunpack.c.l.b16 %v467
  %v500 = vunpack.c.l.b16 %v468
  %v501 = vunpack.c.l.b16 %v469
  %v502 = vpack.c.b16 %v487, %v486
  %v503 = vpack.c.b16 %v489, %v488
  %v504 = vpack.c.b16 %v491, %v490
  %v505 = vpack.c.b16 %v493, %v492
  %v506 = vpack.c.b16 %v495, %v494
  %v507 = vpack.c.b16 %v497, %v496
  %v508 = vpack.c.b16 %v499, %v498
  %v509 = vpack.c.b16 %v501, %v500
  %518 = vmatprep.subr.bf16.mxu0 0
  %519 = vmatpush1.bf16.msra.mxu0 %v502
  %520 = vmatprep.subr.bf16.mxu0 0
  %521 = vmatpush1.bf16.msra.mxu0 %v503
  %522 = vmatprep.subr.bf16.mxu0 0
  %523 = vmatpush1.bf16.msra.mxu0 %v504
  %524 = vmatprep.subr.bf16.mxu0 0
  %525 = vmatpush1.bf16.msra.mxu0 %v505
  %526 = vmatprep.subr.bf16.mxu0 0
  %527 = vmatpush1.bf16.msra.mxu0 %v506
  %528 = vmatprep.subr.bf16.mxu0 0
  %529 = vmatpush1.bf16.msra.mxu0 %v507
  %530 = vmatprep.subr.bf16.mxu0 0
  %531 = vmatpush1.bf16.msra.mxu0 %v508
  %532 = vmatprep.subr.bf16.mxu0 0
  %533 = vmatpush1.bf16.msra.mxu0 %v509
  %534 = vmatprep.subr.bf16.mxu0 0
  %535 = vmatpush1.bf16.msra.mxu0 0
  %536 = vmatprep.subr.bf16.mxu0 0
  %537 = vmatpush1.bf16.msra.mxu0 0
  %538 = vmatprep.subr.bf16.mxu0 0
  %539 = vmatpush1.bf16.msra.mxu0 0
  %540 = vmatprep.subr.bf16.mxu0 0
  %541 = vmatpush1.bf16.msra.mxu0 0
  %542 = vmatprep.subr.bf16.mxu0 0
  %543 = vmatpush1.bf16.msra.mxu0 0
  %544 = vmatprep.subr.bf16.mxu0 0
  %545 = vmatpush1.bf16.msra.mxu0 0
  %546 = vmatprep.subr.bf16.mxu0 0
  %547 = vmatpush1.bf16.msra.mxu0 0
  %548 = vmatprep.subr.bf16.mxu0 0
  %549 = vmatpush1.bf16.msra.mxu0 0
  %550 = vmatprep.mubr.bf16.mxu0 0
  %551 = vmatmul.mubr.bf16.gmra.mrb[0].mxu0 %v422
  %v552 = vpop.f32.mrb[0].mxu0
  %v553 = vadd.f32 0.0, %v552
  %v554 = vpop.f32.mrb[0].mxu0
  %v555 = vpop.f32.mrb[0].mxu0
  %v556 = vadd.f32 0.0, %v555
  %v557 = vpop.f32.mrb[0].mxu0
  %558 = vmatprep.mubr.bf16.mxu0 0
  %559 = vmatmul.mubr.bf16.gmra.mrb[0].mxu0 %v423
  %v560 = vpop.f32.mrb[0].mxu0
  %v561 = vadd.f32 0.0, %v560
  %v562 = vpop.f32.mrb[0].mxu0
  %v563 = vpop.f32.mrb[0].mxu0
  %v564 = vadd.f32 0.0, %v563
  %v565 = vpop.f32.mrb[0].mxu0
  %566 = vmatprep.mubr.bf16.mxu0 0
  %567 = vmatmul.mubr.bf16.gmra.mrb[0].mxu0 %v424
  %v568 = vpop.f32.mrb[0].mxu0
  %v569 = vadd.f32 0.0, %v568
  %v570 = vpop.f32.mrb[0].mxu0
  %v571 = vpop.f32.mrb[0].mxu0
  %v572 = vadd.f32 0.0, %v571
  %v573 = vpop.f32.mrb[0].mxu0
  %574 = vmatprep.mubr.bf16.mxu0 0
  %575 = vmatmul.mubr.bf16.gmra.mrb[0].mxu0 %v425
  %v576 = vpop.f32.mrb[0].mxu0
  %v577 = vadd.f32 0.0, %v576
  %v578 = vpop.f32.mrb[0].mxu0
  %v579 = vpop.f32.mrb[0].mxu0
  %v580 = vadd.f32 0.0, %v579
  %v581 = vpop.f32.mrb[0].mxu0
  %582 = vmatprep.mubr.bf16.mxu0 0
  %583 = vmatmul.mubr.bf16.gmra.mrb[0].mxu0 %v426
  %v584 = vpop.f32.mrb[0].mxu0
  %v585 = vadd.f32 0.0, %v584
  %v586 = vpop.f32.mrb[0].mxu0
  %v587 = vpop.f32.mrb[0].mxu0
  %v588 = vadd.f32 0.0, %v587
  %v589 = vpop.f32.mrb[0].mxu0
  %590 = vmatprep.mubr.bf16.mxu0 0
  %591 = vmatmul.mubr.bf16.gmra.mrb[0].mxu0 %v427
  %v592 = vpop.f32.mrb[0].mxu0
  %v593 = vadd.f32 0.0, %v592
  %v594 = vpop.f32.mrb[0].mxu0
  %v595 = vpop.f32.mrb[0].mxu0
  %v596 = vadd.f32 0.0, %v595
  %v597 = vpop.f32.mrb[0].mxu0
  %598 = vmatprep.mubr.bf16.mxu0 0
  %599 = vmatmul.mubr.bf16.gmra.mrb[0].mxu0 %v428
  %v600 = vpop.f32.mrb[0].mxu0
  %v601 = vadd.f32 0.0, %v600
  %v602 = vpop.f32.mrb[0].mxu0
  %v603 = vpop.f32.mrb[0].mxu0
  %v604 = vadd.f32 0.0, %v603
  %v605 = vpop.f32.mrb[0].mxu0
  %606 = vmatprep.mubr.bf16.mxu0 0
  %607 = vmatmul.mubr.bf16.gmra.mrb[0].mxu0 %v429
  %v608 = vpop.f32.mrb[0].mxu0
  %v609 = vadd.f32 0.0, %v608
  %v610 = vpop.f32.mrb[0].mxu0
  %v611 = vpop.f32.mrb[0].mxu0
  %v612 = vadd.f32 0.0, %v611
  %v613 = vpop.f32.mrb[0].mxu0
  %614 = vmatprep.mubr.bf16.mxu0 0
  %615 = vmatmul.mubr.bf16.gmra.mrb[0].mxu0 %v430
  %v616 = vpop.f32.mrb[0].mxu0
  %v617 = vadd.f32 0.0, %v616
  %v618 = vpop.f32.mrb[0].mxu0
  %v619 = vpop.f32.mrb[0].mxu0
  %v620 = vadd.f32 0.0, %v619
  %v621 = vpop.f32.mrb[0].mxu0
  %622 = vmatprep.mubr.bf16.mxu0 0
  %623 = vmatmul.mubr.bf16.gmra.mrb[0].mxu0 %v431
  %v624 = vpop.f32.mrb[0].mxu0
  %v625 = vadd.f32 0.0, %v624
  %v626 = vpop.f32.mrb[0].mxu0
  %v627 = vpop.f32.mrb[0].mxu0
  %v628 = vadd.f32 0.0, %v627
  %v629 = vpop.f32.mrb[0].mxu0
  %630 = vmatprep.mubr.bf16.mxu0 0
  %631 = vmatmul.mubr.bf16.gmra.mrb[0].mxu0 %v432
  %v632 = vpop.f32.mrb[0].mxu0
  %v633 = vadd.f32 0.0, %v632
  %v634 = vpop.f32.mrb[0].mxu0
  %v635 = vpop.f32.mrb[0].mxu0
  %v636 = vadd.f32 0.0, %v635
  %v637 = vpop.f32.mrb[0].mxu0
  %638 = vmatprep.mubr.bf16.mxu0 0
  %639 = vmatmul.mubr.bf16.gmra.mrb[0].mxu0 %v433
  %v640 = vpop.f32.mrb[0].mxu0
  %v641 = vadd.f32 0.0, %v640
  %v642 = vpop.f32.mrb[0].mxu0
  %v643 = vpop.f32.mrb[0].mxu0
  %v644 = vadd.f32 0.0, %v643
  %v645 = vpop.f32.mrb[0].mxu0
  %646 = vmatprep.mubr.bf16.mxu0 0
  %647 = vmatmul.mubr.bf16.gmra.mrb[0].mxu0 %v434
  %v648 = vpop.f32.mrb[0].mxu0
  %v649 = vadd.f32 0.0, %v648
  %v650 = vpop.f32.mrb[0].mxu0
  %v651 = vpop.f32.mrb[0].mxu0
  %v652 = vadd.f32 0.0, %v651
  %v653 = vpop.f32.mrb[0].mxu0
  %654 = vmatprep.mubr.bf16.mxu0 0
  %655 = vmatmul.mubr.bf16.gmra.mrb[0].mxu0 %v435
  %v656 = vpop.f32.mrb[0].mxu0
  %v657 = vadd.f32 0.0, %v656
  %v658 = vpop.f32.mrb[0].mxu0
  %v659 = vpop.f32.mrb[0].mxu0
  %v660 = vadd.f32 0.0, %v659
  %v661 = vpop.f32.mrb[0].mxu0
  %662 = vmatprep.mubr.bf16.mxu0 0
  %663 = vmatmul.mubr.bf16.gmra.mrb[0].mxu0 %v436
  %v664 = vpop.f32.mrb[0].mxu0
  %v665 = vadd.f32 0.0, %v664
  %v666 = vpop.f32.mrb[0].mxu0
  %v667 = vpop.f32.mrb[0].mxu0
  %v668 = vadd.f32 0.0, %v667
  %v669 = vpop.f32.mrb[0].mxu0
  %670 = vmatprep.mubr.bf16.mxu0 0
  %671 = vmatmul.mubr.bf16.gmra.mrb[0].mxu0 %v437
  %v672 = vpop.f32.mrb[0].mxu0
  %v673 = vadd.f32 0.0, %v672
  %v674 = vpop.f32.mrb[0].mxu0
  %v675 = vpop.f32.mrb[0].mxu0
  %v676 = vadd.f32 0.0, %v675
  %v677 = vpop.f32.mrb[0].mxu0
  %678 = vmatprep.mubr.bf16.mxu0 0
  %679 = vmatmul.mubr.bf16.gmra.mrb[0].mxu0 %v438
  %v680 = vpop.f32.mrb[0].mxu0
  %v681 = vadd.f32 0.0, %v680
  %v682 = vpop.f32.mrb[0].mxu0
  %v683 = vpop.f32.mrb[0].mxu0
  %v684 = vadd.f32 0.0, %v683
  %v685 = vpop.f32.mrb[0].mxu0
  %686 = vmatprep.mubr.bf16.mxu0 0
  %687 = vmatmul.mubr.bf16.gmra.mrb[0].mxu0 %v439
  %v688 = vpop.f32.mrb[0].mxu0
  %v689 = vadd.f32 0.0, %v688
  %v690 = vpop.f32.mrb[0].mxu0
  %v691 = vpop.f32.mrb[0].mxu0
  %v692 = vadd.f32 0.0, %v691
  %v693 = vpop.f32.mrb[0].mxu0
  %694 = vmatprep.mubr.bf16.mxu0 0
  %695 = vmatmul.mubr.bf16.gmra.mrb[0].mxu0 %v440
  %v696 = vpop.f32.mrb[0].mxu0
  %v697 = vadd.f32 0.0, %v696
  %v698 = vpop.f32.mrb[0].mxu0
  %v699 = vpop.f32.mrb[0].mxu0
  %v700 = vadd.f32 0.0, %v699
  %v701 = vpop.f32.mrb[0].mxu0
  %702 = vmatprep.mubr.bf16.mxu0 0
  %703 = vmatmul.mubr.bf16.gmra.mrb[0].mxu0 %v441
  %v704 = vpop.f32.mrb[0].mxu0
  %v705 = vadd.f32 0.0, %v704
  %v706 = vpop.f32.mrb[0].mxu0
  %v707 = vpop.f32.mrb[0].mxu0
  %v708 = vadd.f32 0.0, %v707
  %v709 = vpop.f32.mrb[0].mxu0
  %710 = vmatprep.mubr.bf16.mxu0 0
  %711 = vmatmul.mubr.bf16.gmra.mrb[0].mxu0 %v442
  %v712 = vpop.f32.mrb[0].mxu0
  %v713 = vadd.f32 0.0, %v712
  %v714 = vpop.f32.mrb[0].mxu0
  %v715 = vpop.f32.mrb[0].mxu0
  %v716 = vadd.f32 0.0, %v715
  %v717 = vpop.f32.mrb[0].mxu0
  %718 = vmatprep.mubr.bf16.mxu0 0
  %719 = vmatmul.mubr.bf16.gmra.mrb[0].mxu0 %v443
  %v720 = vpop.f32.mrb[0].mxu0
  %v721 = vadd.f32 0.0, %v720
  %v722 = vpop.f32.mrb[0].mxu0
  %v723 = vpop.f32.mrb[0].mxu0
  %v724 = vadd.f32 0.0, %v723
  %v725 = vpop.f32.mrb[0].mxu0
  %726 = vmatprep.mubr.bf16.mxu0 0
  %727 = vmatmul.mubr.bf16.gmra.mrb[0].mxu0 %v444
  %v728 = vpop.f32.mrb[0].mxu0
  %v729 = vadd.f32 0.0, %v728
  %v730 = vpop.f32.mrb[0].mxu0
  %v731 = vpop.f32.mrb[0].mxu0
  %v732 = vadd.f32 0.0, %v731
  %v733 = vpop.f32.mrb[0].mxu0
  %734 = vmatprep.mubr.bf16.mxu0 0
  %735 = vmatmul.mubr.bf16.gmra.mrb[0].mxu0 %v445
  %v736 = vpop.f32.mrb[0].mxu0
  %v737 = vadd.f32 0.0, %v736
  %v738 = vpop.f32.mrb[0].mxu0
  %v739 = vpop.f32.mrb[0].mxu0
  %v740 = vadd.f32 0.0, %v739
  %v741 = vpop.f32.mrb[0].mxu0
  %742 = vmatprep.mubr.bf16.mxu0 0
  %743 = vmatmul.mubr.bf16.gmra.mrb[0].mxu0 %v446
  %v744 = vpop.f32.mrb[0].mxu0
  %v745 = vadd.f32 0.0, %v744
  %v746 = vpop.f32.mrb[0].mxu0
  %v747 = vpop.f32.mrb[0].mxu0
  %v748 = vadd.f32 0.0, %v747
  %v749 = vpop.f32.mrb[0].mxu0
  %750 = vmatprep.mubr.bf16.mxu0 0
  %751 = vmatmul.mubr.bf16.gmra.mrb[0].mxu0 %v447
  %v752 = vpop.f32.mrb[0].mxu0
  %v753 = vadd.f32 0.0, %v752
  %v754 = vpop.f32.mrb[0].mxu0
  %v755 = vpop.f32.mrb[0].mxu0
  %v756 = vadd.f32 0.0, %v755
  %v757 = vpop.f32.mrb[0].mxu0
  %758 = vmatprep.mubr.bf16.mxu0 0
  %759 = vmatmul.mubr.bf16.gmra.mrb[0].mxu0 %v448
  %v760 = vpop.f32.mrb[0].mxu0
  %v761 = vadd.f32 0.0, %v760
  %v762 = vpop.f32.mrb[0].mxu0
  %v763 = vpop.f32.mrb[0].mxu0
  %v764 = vadd.f32 0.0, %v763
  %v765 = vpop.f32.mrb[0].mxu0
  %766 = vmatprep.mubr.bf16.mxu0 0
  %767 = vmatmul.mubr.bf16.gmra.mrb[0].mxu0 %v449
  %v768 = vpop.f32.mrb[0].mxu0
  %v769 = vadd.f32 0.0, %v768
  %v770 = vpop.f32.mrb[0].mxu0
  %v771 = vpop.f32.mrb[0].mxu0
  %v772 = vadd.f32 0.0, %v771
  %v773 = vpop.f32.mrb[0].mxu0
  %774 = vmatprep.mubr.bf16.mxu0 0
  %775 = vmatmul.mubr.bf16.gmra.mrb[0].mxu0 %v450
  %v776 = vpop.f32.mrb[0].mxu0
  %v777 = vadd.f32 0.0, %v776
  %v778 = vpop.f32.mrb[0].mxu0
  %v779 = vpop.f32.mrb[0].mxu0
  %v780 = vadd.f32 0.0, %v779
  %v781 = vpop.f32.mrb[0].mxu0
  %782 = vmatprep.mubr.bf16.mxu0 0
  %783 = vmatmul.mubr.bf16.gmra.mrb[0].mxu0 %v451
  %v784 = vpop.f32.mrb[0].mxu0
  %v785 = vadd.f32 0.0, %v784
  %v786 = vpop.f32.mrb[0].mxu0
  %v787 = vpop.f32.mrb[0].mxu0
  %v788 = vadd.f32 0.0, %v787
  %v789 = vpop.f32.mrb[0].mxu0
  %790 = vmatprep.mubr.bf16.mxu0 0
  %791 = vmatmul.mubr.bf16.gmra.mrb[0].mxu0 %v452
  %v792 = vpop.f32.mrb[0].mxu0
  %v793 = vadd.f32 0.0, %v792
  %v794 = vpop.f32.mrb[0].mxu0
  %v795 = vpop.f32.mrb[0].mxu0
  %v796 = vadd.f32 0.0, %v795
  %v797 = vpop.f32.mrb[0].mxu0
  %798 = vmatprep.mubr.bf16.mxu0 0
  %799 = vmatmul.mubr.bf16.gmra.mrb[0].mxu0 %v453
  %v800 = vpop.f32.mrb[0].mxu0
  %v801 = vadd.f32 0.0, %v800
  %v802 = vpop.f32.mrb[0].mxu0
  %v803 = vpop.f32.mrb[0].mxu0
  %v804 = vadd.f32 0.0, %v803
  %v805 = vpop.f32.mrb[0].mxu0
  %806 = vdwg.mxu0
  %807 = vst [vmem:[%s6] sm:$0xff] %v553
  %808 = vst [vmem:[%s6 + $0x8] sm:$0xff] %v556
  %809 = vst [vmem:[%s6 + $0x10] sm:$0xff] %v561
  %810 = vst [vmem:[%s6 + $0x18] sm:$0xff] %v564
  %811 = vst [vmem:[%s6 + $0x20] sm:$0xff] %v569
  %812 = vst [vmem:[%s6 + $0x28] sm:$0xff] %v572
  %813 = vst [vmem:[%s6 + $0x30] sm:$0xff] %v577
  %814 = vst [vmem:[%s6 + $0x38] sm:$0xff] %v580
  %815 = vst [vmem:[%s6 + $0x40] sm:$0xff] %v585
  %816 = vst [vmem:[%s6 + $0x48] sm:$0xff] %v588
  %817 = vst [vmem:[%s6 + $0x50] sm:$0xff] %v593
  %818 = vst [vmem:[%s6 + $0x58] sm:$0xff] %v596
  %819 = vst [vmem:[%s6 + $0x60] sm:$0xff] %v601
  %820 = vst [vmem:[%s6 + $0x68] sm:$0xff] %v604
  %821 = vst [vmem:[%s6 + $0x70] sm:$0xff] %v609
  %822 = vst [vmem:[%s6 + $0x78] sm:$0xff] %v612
  %823 = vst [vmem:[%s6 + $0x80] sm:$0xff] %v617
  %824 = vst [vmem:[%s6 + $0x88] sm:$0xff] %v620
  %825 = vst [vmem:[%s6 + $0x90] sm:$0xff] %v625
  %826 = vst [vmem:[%s6 + $0x98] sm:$0xff] %v628
  %827 = vst [vmem:[%s6 + $0xa0] sm:$0xff] %v633
  %828 = vst [vmem:[%s6 + $0xa8] sm:$0xff] %v636
  %829 = vst [vmem:[%s6 + $0xb0] sm:$0xff] %v641
  %830 = vst [vmem:[%s6 + $0xb8] sm:$0xff] %v644
  %831 = vst [vmem:[%s6 + $0xc0] sm:$0xff] %v649
  %832 = vst [vmem:[%s6 + $0xc8] sm:$0xff] %v652
  %833 = vst [vmem:[%s6 + $0xd0] sm:$0xff] %v657
  %834 = vst [vmem:[%s6 + $0xd8] sm:$0xff] %v660
  %835 = vst [vmem:[%s6 + $0xe0] sm:$0xff] %v665
  %836 = vst [vmem:[%s6 + $0xe8] sm:$0xff] %v668
  %837 = vst [vmem:[%s6 + $0xf0] sm:$0xff] %v673
  %838 = vst [vmem:[%s6 + $0xf8] sm:$0xff] %v676
  %839 = vst [vmem:[%s6 + $0x100] sm:$0xff] %v681
  %840 = vst [vmem:[%s6 + $0x108] sm:$0xff] %v684
  %841 = vst [vmem:[%s6 + $0x110] sm:$0xff] %v689
  %842 = vst [vmem:[%s6 + $0x118] sm:$0xff] %v692
  %843 = vst [vmem:[%s6 + $0x120] sm:$0xff] %v697
  %844 = vst [vmem:[%s6 + $0x128] sm:$0xff] %v700
  %845 = vst [vmem:[%s6 + $0x130] sm:$0xff] %v705
  %846 = vst [vmem:[%s6 + $0x138] sm:$0xff] %v708
  %847 = vst [vmem:[%s6 + $0x140] sm:$0xff] %v713
  %848 = vst [vmem:[%s6 + $0x148] sm:$0xff] %v716
  %849 = vst [vmem:[%s6 + $0x150] sm:$0xff] %v721
  %850 = vst [vmem:[%s6 + $0x158] sm:$0xff] %v724
  %851 = vst [vmem:[%s6 + $0x160] sm:$0xff] %v729
  %852 = vst [vmem:[%s6 + $0x168] sm:$0xff] %v732
  %853 = vst [vmem:[%s6 + $0x170] sm:$0xff] %v737
  %854 = vst [vmem:[%s6 + $0x178] sm:$0xff] %v740
  %855 = vst [vmem:[%s6 + $0x180] sm:$0xff] %v745
  %856 = vst [vmem:[%s6 + $0x188] sm:$0xff] %v748
  %857 = vst [vmem:[%s6 + $0x190] sm:$0xff] %v753
  %858 = vst [vmem:[%s6 + $0x198] sm:$0xff] %v756
  %859 = vst [vmem:[%s6 + $0x1a0] sm:$0xff] %v761
  %860 = vst [vmem:[%s6 + $0x1a8] sm:$0xff] %v764
  %861 = vst [vmem:[%s6 + $0x1b0] sm:$0xff] %v769
  %862 = vst [vmem:[%s6 + $0x1b8] sm:$0xff] %v772
  %863 = vst [vmem:[%s6 + $0x1c0] sm:$0xff] %v777
  %864 = vst [vmem:[%s6 + $0x1c8] sm:$0xff] %v780
  %865 = vst [vmem:[%s6 + $0x1d0] sm:$0xff] %v785
  %866 = vst [vmem:[%s6 + $0x1d8] sm:$0xff] %v788
  %867 = vst [vmem:[%s6 + $0x1e0] sm:$0xff] %v793
  %868 = vst [vmem:[%s6 + $0x1e8] sm:$0xff] %v796
  %869 = vst [vmem:[%s6 + $0x1f0] sm:$0xff] %v801
  %870 = vst [vmem:[%s6 + $0x1f8] sm:$0xff] %v804
  %v871 = vadd.f32 %v553, %v556
  %v872 = vadd.f32 %v871, %v561
  %v873 = vadd.f32 %v872, %v564
  %v874 = vadd.f32 %v873, %v569
  %v875 = vadd.f32 %v874, %v572
  %v876 = vadd.f32 %v875, %v577
  %v877 = vadd.f32 %v876, %v580
  %v878 = vadd.f32 %v877, %v585
  %v879 = vadd.f32 %v878, %v588
  %v880 = vadd.f32 %v879, %v593
  %v881 = vadd.f32 %v880, %v596
  %v882 = vadd.f32 %v881, %v601
  %v883 = vadd.f32 %v882, %v604
  %v884 = vadd.f32 %v883, %v609
  %v885 = vadd.f32 %v884, %v612
  %v886 = vadd.f32 %v885, %v617
  %v887 = vadd.f32 %v886, %v620
  %v888 = vadd.f32 %v887, %v625
  %v889 = vadd.f32 %v888, %v628
  %v890 = vadd.f32 %v889, %v633
  %v891 = vadd.f32 %v890, %v636
  %v892 = vadd.f32 %v891, %v641
  %v893 = vadd.f32 %v892, %v644
  %v894 = vadd.f32 %v893, %v649
  %v895 = vadd.f32 %v894, %v652
  %v896 = vadd.f32 %v895, %v657
  %v897 = vadd.f32 %v896, %v660
  %v898 = vadd.f32 %v897, %v665
  %v899 = vadd.f32 %v898, %v668
  %v900 = vadd.f32 %v899, %v673
  %v901 = vadd.f32 %v900, %v676
  %v902 = vadd.f32 %v901, %v681
  %v903 = vadd.f32 %v902, %v684
  %v904 = vadd.f32 %v903, %v689
  %v905 = vadd.f32 %v904, %v692
  %v906 = vadd.f32 %v905, %v697
  %v907 = vadd.f32 %v906, %v700
  %v908 = vadd.f32 %v907, %v705
  %v909 = vadd.f32 %v908, %v708
  %v910 = vadd.f32 %v909, %v713
  %v911 = vadd.f32 %v910, %v716
  %v912 = vadd.f32 %v911, %v721
  %v913 = vadd.f32 %v912, %v724
  %v914 = vadd.f32 %v913, %v729
  %v915 = vadd.f32 %v914, %v732
  %v916 = vadd.f32 %v915, %v737
  %v917 = vadd.f32 %v916, %v740
  %v918 = vadd.f32 %v917, %v745
  %v919 = vadd.f32 %v918, %v748
  %v920 = vadd.f32 %v919, %v753
  %v921 = vadd.f32 %v920, %v756
  %v922 = vadd.f32 %v921, %v761
  %v923 = vadd.f32 %v922, %v764
  %v924 = vadd.f32 %v923, %v769
  %v925 = vadd.f32 %v924, %v772
  %v926 = vadd.f32 %v925, %v777
  %v927 = vadd.f32 %v926, %v780
  %v928 = vadd.f32 %v927, %v785
  %v929 = vadd.f32 %v928, %v788
  %v930 = vadd.f32 %v929, %v793
  %v931 = vadd.f32 %v930, %v796
  %v932 = vadd.f32 %v931, %v801
  %v933 = vadd.f32 %v932, %v804
  %v934 = vrot.slane %v933, 4
  %v935 = vadd.f32 %v933, %v934
  %v936 = vrot.slane %v935, 2
  %v937 = vadd.f32 %v935, %v936
  %v938 = vrot.slane %v937, 1
  %v939 = vadd.f32 %v937, %v938
  %940 = vst [vmem:[%s7] sm:$0x1] %v939
  %v941 = vmul.f32 %v553, %v553
  %v942 = vmul.f32 %v556, %v556
  %v943 = vmul.f32 %v561, %v561
  %v944 = vmul.f32 %v564, %v564
  %v945 = vmul.f32 %v569, %v569
  %v946 = vmul.f32 %v572, %v572
  %v947 = vmul.f32 %v577, %v577
  %v948 = vmul.f32 %v580, %v580
  %v949 = vmul.f32 %v585, %v585
  %v950 = vmul.f32 %v588, %v588
  %v951 = vmul.f32 %v593, %v593
  %v952 = vmul.f32 %v596, %v596
  %v953 = vmul.f32 %v601, %v601
  %v954 = vmul.f32 %v604, %v604
  %v955 = vmul.f32 %v609, %v609
  %v956 = vmul.f32 %v612, %v612
  %v957 = vmul.f32 %v617, %v617
  %v958 = vmul.f32 %v620, %v620
  %v959 = vmul.f32 %v625, %v625
  %v960 = vmul.f32 %v628, %v628
  %v961 = vmul.f32 %v633, %v633
  %v962 = vmul.f32 %v636, %v636
  %v963 = vmul.f32 %v641, %v641
  %v964 = vmul.f32 %v644, %v644
  %v965 = vmul.f32 %v649, %v649
  %v966 = vmul.f32 %v652, %v652
  %v967 = vmul.f32 %v657, %v657
  %v968 = vmul.f32 %v660, %v660
  %v969 = vmul.f32 %v665, %v665
  %v970 = vmul.f32 %v668, %v668
  %v971 = vmul.f32 %v673, %v673
  %v972 = vmul.f32 %v676, %v676
  %v973 = vmul.f32 %v681, %v681
  %v974 = vmul.f32 %v684, %v684
  %v975 = vmul.f32 %v689, %v689
  %v976 = vmul.f32 %v692, %v692
  %v977 = vmul.f32 %v697, %v697
  %v978 = vmul.f32 %v700, %v700
  %v979 = vmul.f32 %v705, %v705
  %v980 = vmul.f32 %v708, %v708
  %v981 = vmul.f32 %v713, %v713
  %v982 = vmul.f32 %v716, %v716
  %v983 = vmul.f32 %v721, %v721
  %v984 = vmul.f32 %v724, %v724
  %v985 = vmul.f32 %v729, %v729
  %v986 = vmul.f32 %v732, %v732
  %v987 = vmul.f32 %v737, %v737
  %v988 = vmul.f32 %v740, %v740
  %v989 = vmul.f32 %v745, %v745
  %v990 = vmul.f32 %v748, %v748
  %v991 = vmul.f32 %v753, %v753
  %v992 = vmul.f32 %v756, %v756
  %v993 = vmul.f32 %v761, %v761
  %v994 = vmul.f32 %v764, %v764
  %v995 = vmul.f32 %v769, %v769
  %v996 = vmul.f32 %v772, %v772
  %v997 = vmul.f32 %v777, %v777
  %v998 = vmul.f32 %v780, %v780
  %v999 = vmul.f32 %v785, %v785
  %v1000 = vmul.f32 %v788, %v788
  %v1001 = vmul.f32 %v793, %v793
  %v1002 = vmul.f32 %v796, %v796
  %v1003 = vmul.f32 %v801, %v801
  %v1004 = vmul.f32 %v804, %v804
  %v1005 = vadd.f32 %v941, %v942
  %v1006 = vadd.f32 %v1005, %v943
  %v1007 = vadd.f32 %v1006, %v944
  %v1008 = vadd.f32 %v1007, %v945
  %v1009 = vadd.f32 %v1008, %v946
  %v1010 = vadd.f32 %v1009, %v947
  %v1011 = vadd.f32 %v1010, %v948
  %v1012 = vadd.f32 %v1011, %v949
  %v1013 = vadd.f32 %v1012, %v950
  %v1014 = vadd.f32 %v1013, %v951
  %v1015 = vadd.f32 %v1014, %v952
  %v1016 = vadd.f32 %v1015, %v953
  %v1017 = vadd.f32 %v1016, %v954
  %v1018 = vadd.f32 %v1017, %v955
  %v1019 = vadd.f32 %v1018, %v956
  %v1020 = vadd.f32 %v1019, %v957
  %v1021 = vadd.f32 %v1020, %v958
  %v1022 = vadd.f32 %v1021, %v959
  %v1023 = vadd.f32 %v1022, %v960
  %v1024 = vadd.f32 %v1023, %v961
  %v1025 = vadd.f32 %v1024, %v962
  %v1026 = vadd.f32 %v1025, %v963
  %v1027 = vadd.f32 %v1026, %v964
  %v1028 = vadd.f32 %v1027, %v965
  %v1029 = vadd.f32 %v1028, %v966
  %v1030 = vadd.f32 %v1029, %v967
  %v1031 = vadd.f32 %v1030, %v968
  %v1032 = vadd.f32 %v1031, %v969
  %v1033 = vadd.f32 %v1032, %v970
  %v1034 = vadd.f32 %v1033, %v971
  %v1035 = vadd.f32 %v1034, %v972
  %v1036 = vadd.f32 %v1035, %v973
  %v1037 = vadd.f32 %v1036, %v974
  %v1038 = vadd.f32 %v1037, %v975
  %v1039 = vadd.f32 %v1038, %v976
  %v1040 = vadd.f32 %v1039, %v977
  %v1041 = vadd.f32 %v1040, %v978
  %v1042 = vadd.f32 %v1041, %v979
  %v1043 = vadd.f32 %v1042, %v980
  %v1044 = vadd.f32 %v1043, %v981
  %v1045 = vadd.f32 %v1044, %v982
  %v1046 = vadd.f32 %v1045, %v983
  %v1047 = vadd.f32 %v1046, %v984
  %v1048 = vadd.f32 %v1047, %v985
  %v1049 = vadd.f32 %v1048, %v986
  %v1050 = vadd.f32 %v1049, %v987
  %v1051 = vadd.f32 %v1050, %v988
  %v1052 = vadd.f32 %v1051, %v989
  %v1053 = vadd.f32 %v1052, %v990
  %v1054 = vadd.f32 %v1053, %v991
  %v1055 = vadd.f32 %v1054, %v992
  %v1056 = vadd.f32 %v1055, %v993
  %v1057 = vadd.f32 %v1056, %v994
  %v1058 = vadd.f32 %v1057, %v995
  %v1059 = vadd.f32 %v1058, %v996
  %v1060 = vadd.f32 %v1059, %v997
  %v1061 = vadd.f32 %v1060, %v998
  %v1062 = vadd.f32 %v1061, %v999
  %v1063 = vadd.f32 %v1062, %v1000
  %v1064 = vadd.f32 %v1063, %v1001
  %v1065 = vadd.f32 %v1064, %v1002
  %v1066 = vadd.f32 %v1065, %v1003
  %v1067 = vadd.f32 %v1066, %v1004
  %v1068 = vrot.slane %v1067, 4
  %v1069 = vadd.f32 %v1067, %v1068
  %v1070 = vrot.slane %v1069, 2
  %v1071 = vadd.f32 %v1069, %v1070
  %v1072 = vrot.slane %v1071, 1
  %v1073 = vadd.f32 %v1071, %v1072
  %1074 = vst [vmem:[%s7 + $0x1] sm:$0x1] %v1073
  // Predicated region
  $region22: #{residual_forward.10} parent=0 // pred_check
    _
  $region23: #{residual_forward.10} parent=0 // pred_check_branch
    %1076 = sbr.rel (0) target = $region25
  $region24: #{residual_forward.10} parent=0 // pred_region
    _
  $region25: #{residual_forward.10} parent=0 // pred_fallthru
    _
  // Predicated region
  $region26: #{residual_forward.10} parent=0 // pred_check
    _
  $region27: #{residual_forward.10} parent=0 // pred_check_branch
    %1078 = sbr.rel (0) target = $region29
  $region28: #{residual_forward.10} parent=0 // pred_region
    _
  $region29: #{residual_forward.10} parent=0 // pred_fallthru
    _
  // Predicated region
  $region30: #{residual_forward.10} parent=0 // pred_check
    _
  $region31: #{residual_forward.10} parent=0 // pred_check_branch
    %1080 = sbr.rel (0) target = $region33
  $region32: #{residual_forward.10} parent=0 // pred_region
    _
  $region33: #{residual_forward.10} parent=0 // pred_fallthru
    _
  // Predicated region
  $region34: #{residual_forward.10} parent=0 // pred_check
    _
  $region35: #{residual_forward.10} parent=0 // pred_check_branch
    %1082 = sbr.rel (0) target = $region37
  $region36: #{residual_forward.10} parent=0 // pred_region
    _
  $region37: #{residual_forward.10} parent=0 // pred_fallthru
    _
  // Predicated region
  $region38: #{residual_forward.10} parent=0 // pred_check
    _
  $region39: #{residual_forward.10} parent=0 // pred_check_branch
    %1084 = sbr.rel (0) target = $region41
  $region40: #{residual_forward.10} parent=0 // pred_region
    _
  $region41: #{residual_forward.10} parent=0 // pred_fallthru
    _
  // Predicated region
  $region42: #{residual_forward.10} parent=0 // pred_check
    _
  $region43: #{residual_forward.10} parent=0 // pred_check_branch
    %1086 = sbr.rel (0) target = $region45
  $region44: #{residual_forward.10} parent=0 // pred_region
    _
  $region45: #{residual_forward.10} parent=0 // pred_fallthru
    _

// kernel: residual_forward.9
$region0: #{residual_forward.9}
  #allocation0 [shape = 'u32[]', space=smem, size = 0x4, offset = 0x4, fixed_abs, tag = 'smem constant byte address 0x4 - core index']
  #allocation1 [shape = 'u32[144,128]{1,0:T(1,128)}', space=vmem, size = 0x12000, scoped, tag = 'internal scratch']
  %s0 = inlined_call_operand.vmem [shape: f32[512,128], index: 0, kind: input, shape index: {}]
  %s1 = inlined_call_operand.vmem [shape: f32[1,128], index: 1, kind: input, shape index: {}]
  %s2 = inlined_call_operand.vmem [shape: f32[1,128], index: 2, kind: input, shape index: {}]
  %s3 = inlined_call_operand.vmem [shape: f32[1,128], index: 3, kind: input, shape index: {}]
  %s4 = inlined_call_operand.vmem [shape: bf16[128,128], index: 4, kind: input, shape index: {}]
  %s5 = inlined_call_operand.vmem [shape: f32[512,128], index: 5, kind: output, shape index: {0}]
  %s6 = inlined_call_operand.vmem [shape: f32[1,2,128], index: 6, kind: output, shape index: {1}]
  %7 = xla_tuple %s5, %s6
  %s8 = sld [smem:[#allocation0]]
  $region38: #{residual_forward.9} parent=0
    _
  %s10 = ssub.s32 1, %s8
  %s11 = scalar_select 0, %s10, %s8
  // Predicated region
  $region2: #{residual_forward.9} parent=0 // pred_check
    _
  $region3: #{residual_forward.9} parent=0 // pred_check_branch
    %13 = sbr.rel (0) target = $region5
  $region4: #{residual_forward.9} parent=0 // pred_region
    _
  $region5: #{residual_forward.9} parent=0 // pred_fallthru
    _
  // Predicated region
  $region6: #{residual_forward.9} parent=0 // pred_check
    _
  $region7: #{residual_forward.9} parent=0 // pred_check_branch
    %15 = sbr.rel (0) target = $region9
  $region8: #{residual_forward.9} parent=0 // pred_region
    _
  $region9: #{residual_forward.9} parent=0 // pred_fallthru
    _
  // Predicated region
  $region10: #{residual_forward.9} parent=0 // pred_check
    _
  $region11: #{residual_forward.9} parent=0 // pred_check_branch
    %17 = sbr.rel (0) target = $region13
  $region12: #{residual_forward.9} parent=0 // pred_region
    _
  $region13: #{residual_forward.9} parent=0 // pred_fallthru
    _
  // Predicated region
  $region14: #{residual_forward.9} parent=0 // pred_check
    _
  $region15: #{residual_forward.9} parent=0 // pred_check_branch
    %19 = sbr.rel (0) target = $region17
  $region16: #{residual_forward.9} parent=0 // pred_region
    _
  $region17: #{residual_forward.9} parent=0 // pred_fallthru
    _
  // Predicated region
  $region18: #{residual_forward.9} parent=0 // pred_check
    _
  $region19: #{residual_forward.9} parent=0 // pred_check_branch
    %21 = sbr.rel (0) target = $region21
  $region20: #{residual_forward.9} parent=0 // pred_region
    _
  $region21: #{residual_forward.9} parent=0 // pred_fallthru
    _
  %v23 = vld [vmem:[%s0] sm:$0xff]
  %v24 = vld [vmem:[%s0 + $0x8] sm:$0xff]
  %v25 = vld [vmem:[%s0 + $0x10] sm:$0xff]
  %v26 = vld [vmem:[%s0 + $0x18] sm:$0xff]
  %v27 = vld [vmem:[%s0 + $0x20] sm:$0xff]
  %v28 = vld [vmem:[%s0 + $0x28] sm:$0xff]
  %v29 = vld [vmem:[%s0 + $0x30] sm:$0xff]
  %v30 = vld [vmem:[%s0 + $0x38] sm:$0xff]
  %v31 = vld [vmem:[%s0 + $0x40] sm:$0xff]
  %v32 = vld [vmem:[%s0 + $0x48] sm:$0xff]
  %v33 = vld [vmem:[%s0 + $0x50] sm:$0xff]
  %v34 = vld [vmem:[%s0 + $0x58] sm:$0xff]
  %v35 = vld [vmem:[%s0 + $0x60] sm:$0xff]
  %v36 = vld [vmem:[%s0 + $0x68] sm:$0xff]
  %v37 = vld [vmem:[%s0 + $0x70] sm:$0xff]
  %v38 = vld [vmem:[%s0 + $0x78] sm:$0xff]
  %v39 = vld [vmem:[%s0 + $0x80] sm:$0xff]
  %v40 = vld [vmem:[%s0 + $0x88] sm:$0xff]
  %v41 = vld [vmem:[%s0 + $0x90] sm:$0xff]
  %v42 = vld [vmem:[%s0 + $0x98] sm:$0xff]
  %v43 = vld [vmem:[%s0 + $0xa0] sm:$0xff]
  %v44 = vld [vmem:[%s0 + $0xa8] sm:$0xff]
  %v45 = vld [vmem:[%s0 + $0xb0] sm:$0xff]
  %v46 = vld [vmem:[%s0 + $0xb8] sm:$0xff]
  %v47 = vld [vmem:[%s0 + $0xc0] sm:$0xff]
  %v48 = vld [vmem:[%s0 + $0xc8] sm:$0xff]
  %v49 = vld [vmem:[%s0 + $0xd0] sm:$0xff]
  %v50 = vld [vmem:[%s0 + $0xd8] sm:$0xff]
  %v51 = vld [vmem:[%s0 + $0xe0] sm:$0xff]
  %v52 = vld [vmem:[%s0 + $0xe8] sm:$0xff]
  %v53 = vld [vmem:[%s0 + $0xf0] sm:$0xff]
  %v54 = vld [vmem:[%s0 + $0xf8] sm:$0xff]
  %v55 = vld [vmem:[%s0 + $0x100] sm:$0xff]
  %v56 = vld [vmem:[%s0 + $0x108] sm:$0xff]
  %v57 = vld [vmem:[%s0 + $0x110] sm:$0xff]
  %v58 = vld [vmem:[%s0 + $0x118] sm:$0xff]
  %v59 = vld [vmem:[%s0 + $0x120] sm:$0xff]
  %v60 = vld [vmem:[%s0 + $0x128] sm:$0xff]
  %v61 = vld [vmem:[%s0 + $0x130] sm:$0xff]
  %v62 = vld [vmem:[%s0 + $0x138] sm:$0xff]
  %v63 = vld [vmem:[%s0 + $0x140] sm:$0xff]
  %v64 = vld [vmem:[%s0 + $0x148] sm:$0xff]
  %v65 = vld [vmem:[%s0 + $0x150] sm:$0xff]
  %v66 = vld [vmem:[%s0 + $0x158] sm:$0xff]
  %v67 = vld [vmem:[%s0 + $0x160] sm:$0xff]
  %v68 = vld [vmem:[%s0 + $0x168] sm:$0xff]
  %v69 = vld [vmem:[%s0 + $0x170] sm:$0xff]
  %v70 = vld [vmem:[%s0 + $0x178] sm:$0xff]
  %v71 = vld [vmem:[%s0 + $0x180] sm:$0xff]
  %v72 = vld [vmem:[%s0 + $0x188] sm:$0xff]
  %v73 = vld [vmem:[%s0 + $0x190] sm:$0xff]
  %v74 = vld [vmem:[%s0 + $0x198] sm:$0xff]
  %v75 = vld [vmem:[%s0 + $0x1a0] sm:$0xff]
  %v76 = vld [vmem:[%s0 + $0x1a8] sm:$0xff]
  %v77 = vld [vmem:[%s0 + $0x1b0] sm:$0xff]
  %v78 = vld [vmem:[%s0 + $0x1b8] sm:$0xff]
  %v79 = vld [vmem:[%s0 + $0x1c0] sm:$0xff]
  %v80 = vld [vmem:[%s0 + $0x1c8] sm:$0xff]
  %v81 = vld [vmem:[%s0 + $0x1d0] sm:$0xff]
  %v82 = vld [vmem:[%s0 + $0x1d8] sm:$0xff]
  %v83 = vld [vmem:[%s0 + $0x1e0] sm:$0xff]
  %v84 = vld [vmem:[%s0 + $0x1e8] sm:$0xff]
  %v85 = vld [vmem:[%s0 + $0x1f0] sm:$0xff]
  %v86 = vld [vmem:[%s0 + $0x1f8] sm:$0xff]
  %v87 = vld [vmem:[%s1] sm:$0x1]
  %v89 = vlaneseq
  %v90 = vshrl.u32 %v89, 7
  %v91 = vsub.s32 0, %v90
  %v92 = vrot.slane %v87, %v91
  %v94 = vmul.f32 %v23, %v92
  %v95 = vmul.f32 %v24, %v92
  %v96 = vmul.f32 %v25, %v92
  %v97 = vmul.f32 %v26, %v92
  %v98 = vmul.f32 %v27, %v92
  %v99 = vmul.f32 %v28, %v92
  %v100 = vmul.f32 %v29, %v92
  %v101 = vmul.f32 %v30, %v92
  %v102 = vmul.f32 %v31, %v92
  %v103 = vmul.f32 %v32, %v92
  %v104 = vmul.f32 %v33, %v92
  %v105 = vmul.f32 %v34, %v92
  %v106 = vmul.f32 %v35, %v92
  %v107 = vmul.f32 %v36, %v92
  %v108 = vmul.f32 %v37, %v92
  %v109 = vmul.f32 %v38, %v92
  %v110 = vmul.f32 %v39, %v92
  %v111 = vmul.f32 %v40, %v92
  %v112 = vmul.f32 %v41, %v92
  %v113 = vmul.f32 %v42, %v92
  %v114 = vmul.f32 %v43, %v92
  %v115 = vmul.f32 %v44, %v92
  %v116 = vmul.f32 %v45, %v92
  %v117 = vmul.f32 %v46, %v92
  %v118 = vmul.f32 %v47, %v92
  %v119 = vmul.f32 %v48, %v92
  %v120 = vmul.f32 %v49, %v92
  %v121 = vmul.f32 %v50, %v92
  %v122 = vmul.f32 %v51, %v92
  %v123 = vmul.f32 %v52, %v92
  %v124 = vmul.f32 %v53, %v92
  %v125 = vmul.f32 %v54, %v92
  %v126 = vmul.f32 %v55, %v92
  %v127 = vmul.f32 %v56, %v92
  %v128 = vmul.f32 %v57, %v92
  %v129 = vmul.f32 %v58, %v92
  %v130 = vmul.f32 %v59, %v92
  %v131 = vmul.f32 %v60, %v92
  %v132 = vmul.f32 %v61, %v92
  %v133 = vmul.f32 %v62, %v92
  %v134 = vmul.f32 %v63, %v92
  %v135 = vmul.f32 %v64, %v92
  %v136 = vmul.f32 %v65, %v92
  %v137 = vmul.f32 %v66, %v92
  %v138 = vmul.f32 %v67, %v92
  %v139 = vmul.f32 %v68, %v92
  %v140 = vmul.f32 %v69, %v92
  %v141 = vmul.f32 %v70, %v92
  %v142 = vmul.f32 %v71, %v92
  %v143 = vmul.f32 %v72, %v92
  %v144 = vmul.f32 %v73, %v92
  %v145 = vmul.f32 %v74, %v92
  %v146 = vmul.f32 %v75, %v92
  %v147 = vmul.f32 %v76, %v92
  %v148 = vmul.f32 %v77, %v92
  %v149 = vmul.f32 %v78, %v92
  %v150 = vmul.f32 %v79, %v92
  %v151 = vmul.f32 %v80, %v92
  %v152 = vmul.f32 %v81, %v92
  %v153 = vmul.f32 %v82, %v92
  %v154 = vmul.f32 %v83, %v92
  %v155 = vmul.f32 %v84, %v92
  %v156 = vmul.f32 %v85, %v92
  %v157 = vmul.f32 %v86, %v92
  %v158 = vld [vmem:[%s2] sm:$0x1]
  %v160 = vlaneseq
  %v161 = vshrl.u32 %v160, 7
  %v162 = vsub.s32 0, %v161
  %v163 = vrot.slane %v158, %v162
  %v165 = vadd.f32 %v94, %v163
  %v166 = vadd.f32 %v95, %v163
  %v167 = vadd.f32 %v96, %v163
  %v168 = vadd.f32 %v97, %v163
  %v169 = vadd.f32 %v98, %v163
  %v170 = vadd.f32 %v99, %v163
  %v171 = vadd.f32 %v100, %v163
  %v172 = vadd.f32 %v101, %v163
  %v173 = vadd.f32 %v102, %v163
  %v174 = vadd.f32 %v103, %v163
  %v175 = vadd.f32 %v104, %v163
  %v176 = vadd.f32 %v105, %v163
  %v177 = vadd.f32 %v106, %v163
  %v178 = vadd.f32 %v107, %v163
  %v179 = vadd.f32 %v108, %v163
  %v180 = vadd.f32 %v109, %v163
  %v181 = vadd.f32 %v110, %v163
  %v182 = vadd.f32 %v111, %v163
  %v183 = vadd.f32 %v112, %v163
  %v184 = vadd.f32 %v113, %v163
  %v185 = vadd.f32 %v114, %v163
  %v186 = vadd.f32 %v115, %v163
  %v187 = vadd.f32 %v116, %v163
  %v188 = vadd.f32 %v117, %v163
  %v189 = vadd.f32 %v118, %v163
  %v190 = vadd.f32 %v119, %v163
  %v191 = vadd.f32 %v120, %v163
  %v192 = vadd.f32 %v121, %v163
  %v193 = vadd.f32 %v122, %v163
  %v194 = vadd.f32 %v123, %v163
  %v195 = vadd.f32 %v124, %v163
  %v196 = vadd.f32 %v125, %v163
  %v197 = vadd.f32 %v126, %v163
  %v198 = vadd.f32 %v127, %v163
  %v199 = vadd.f32 %v128, %v163
  %v200 = vadd.f32 %v129, %v163
  %v201 = vadd.f32 %v130, %v163
  %v202 = vadd.f32 %v131, %v163
  %v203 = vadd.f32 %v132, %v163
  %v204 = vadd.f32 %v133, %v163
  %v205 = vadd.f32 %v134, %v163
  %v206 = vadd.f32 %v135, %v163
  %v207 = vadd.f32 %v136, %v163
  %v208 = vadd.f32 %v137, %v163
  %v209 = vadd.f32 %v138, %v163
  %v210 = vadd.f32 %v139, %v163
  %v211 = vadd.f32 %v140, %v163
  %v212 = vadd.f32 %v141, %v163
  %v213 = vadd.f32 %v142, %v163
  %v214 = vadd.f32 %v143, %v163
  %v215 = vadd.f32 %v144, %v163
  %v216 = vadd.f32 %v145, %v163
  %v217 = vadd.f32 %v146, %v163
  %v218 = vadd.f32 %v147, %v163
  %v219 = vadd.f32 %v148, %v163
  %v220 = vadd.f32 %v149, %v163
  %v221 = vadd.f32 %v150, %v163
  %v222 = vadd.f32 %v151, %v163
  %v223 = vadd.f32 %v152, %v163
  %v224 = vadd.f32 %v153, %v163
  %v225 = vadd.f32 %v154, %v163
  %v226 = vadd.f32 %v155, %v163
  %v227 = vadd.f32 %v156, %v163
  %v228 = vadd.f32 %v157, %v163
  %vm229 = vcmp.ge.f32.partialorder %v165, 0.0
  %vm230 = vcmp.ge.f32.partialorder %v166, 0.0
  %vm231 = vcmp.ge.f32.partialorder %v167, 0.0
  %vm232 = vcmp.ge.f32.partialorder %v168, 0.0
  %vm233 = vcmp.ge.f32.partialorder %v169, 0.0
  %vm234 = vcmp.ge.f32.partialorder %v170, 0.0
  %vm235 = vcmp.ge.f32.partialorder %v171, 0.0
  %vm236 = vcmp.ge.f32.partialorder %v172, 0.0
  %vm237 = vcmp.ge.f32.partialorder %v173, 0.0
  %vm238 = vcmp.ge.f32.partialorder %v174, 0.0
  %vm239 = vcmp.ge.f32.partialorder %v175, 0.0
  %vm240 = vcmp.ge.f32.partialorder %v176, 0.0
  %vm241 = vcmp.ge.f32.partialorder %v177, 0.0
  %vm242 = vcmp.ge.f32.partialorder %v178, 0.0
  %vm243 = vcmp.ge.f32.partialorder %v179, 0.0
  %vm244 = vcmp.ge.f32.partialorder %v180, 0.0
  %vm245 = vcmp.ge.f32.partialorder %v181, 0.0
  %vm246 = vcmp.ge.f32.partialorder %v182, 0.0
  %vm247 = vcmp.ge.f32.partialorder %v183, 0.0
  %vm248 = vcmp.ge.f32.partialorder %v184, 0.0
  %vm249 = vcmp.ge.f32.partialorder %v185, 0.0
  %vm250 = vcmp.ge.f32.partialorder %v186, 0.0
  %vm251 = vcmp.ge.f32.partialorder %v187, 0.0
  %vm252 = vcmp.ge.f32.partialorder %v188, 0.0
  %vm253 = vcmp.ge.f32.partialorder %v189, 0.0
  %vm254 = vcmp.ge.f32.partialorder %v190, 0.0
  %vm255 = vcmp.ge.f32.partialorder %v191, 0.0
  %vm256 = vcmp.ge.f32.partialorder %v192, 0.0
  %vm257 = vcmp.ge.f32.partialorder %v193, 0.0
  %vm258 = vcmp.ge.f32.partialorder %v194, 0.0
  %vm259 = vcmp.ge.f32.partialorder %v195, 0.0
  %vm260 = vcmp.ge.f32.partialorder %v196, 0.0
  %vm261 = vcmp.ge.f32.partialorder %v197, 0.0
  %vm262 = vcmp.ge.f32.partialorder %v198, 0.0
  %vm263 = vcmp.ge.f32.partialorder %v199, 0.0
  %vm264 = vcmp.ge.f32.partialorder %v200, 0.0
  %vm265 = vcmp.ge.f32.partialorder %v201, 0.0
  %vm266 = vcmp.ge.f32.partialorder %v202, 0.0
  %vm267 = vcmp.ge.f32.partialorder %v203, 0.0
  %vm268 = vcmp.ge.f32.partialorder %v204, 0.0
  %vm269 = vcmp.ge.f32.partialorder %v205, 0.0
  %vm270 = vcmp.ge.f32.partialorder %v206, 0.0
  %vm271 = vcmp.ge.f32.partialorder %v207, 0.0
  %vm272 = vcmp.ge.f32.partialorder %v208, 0.0
  %vm273 = vcmp.ge.f32.partialorder %v209, 0.0
  %vm274 = vcmp.ge.f32.partialorder %v210, 0.0
  %vm275 = vcmp.ge.f32.partialorder %v211, 0.0
  %vm276 = vcmp.ge.f32.partialorder %v212, 0.0
  %vm277 = vcmp.ge.f32.partialorder %v213, 0.0
  %vm278 = vcmp.ge.f32.partialorder %v214, 0.0
  %vm279 = vcmp.ge.f32.partialorder %v215, 0.0
  %vm280 = vcmp.ge.f32.partialorder %v216, 0.0
  %vm281 = vcmp.ge.f32.partialorder %v217, 0.0
  %vm282 = vcmp.ge.f32.partialorder %v218, 0.0
  %vm283 = vcmp.ge.f32.partialorder %v219, 0.0
  %vm284 = vcmp.ge.f32.partialorder %v220, 0.0
  %vm285 = vcmp.ge.f32.partialorder %v221, 0.0
  %vm286 = vcmp.ge.f32.partialorder %v222, 0.0
  %vm287 = vcmp.ge.f32.partialorder %v223, 0.0
  %vm288 = vcmp.ge.f32.partialorder %v224, 0.0
  %vm289 = vcmp.ge.f32.partialorder %v225, 0.0
  %vm290 = vcmp.ge.f32.partialorder %v226, 0.0
  %vm291 = vcmp.ge.f32.partialorder %v227, 0.0
  %vm292 = vcmp.ge.f32.partialorder %v228, 0.0
  %v293 = vld [vmem:[%s3] sm:$0x1]
  %v295 = vlaneseq
  %v296 = vshrl.u32 %v295, 7
  %v297 = vsub.s32 0, %v296
  %v298 = vrot.slane %v293, %v297
  %v300 = vmul.f32 %v298, %v165
  %v301 = vmul.f32 %v298, %v166
  %v302 = vmul.f32 %v298, %v167
  %v303 = vmul.f32 %v298, %v168
  %v304 = vmul.f32 %v298, %v169
  %v305 = vmul.f32 %v298, %v170
  %v306 = vmul.f32 %v298, %v171
  %v307 = vmul.f32 %v298, %v172
  %v308 = vmul.f32 %v298, %v173
  %v309 = vmul.f32 %v298, %v174
  %v310 = vmul.f32 %v298, %v175
  %v311 = vmul.f32 %v298, %v176
  %v312 = vmul.f32 %v298, %v177
  %v313 = vmul.f32 %v298, %v178
  %v314 = vmul.f32 %v298, %v179
  %v315 = vmul.f32 %v298, %v180
  %v316 = vmul.f32 %v298, %v181
  %v317 = vmul.f32 %v298, %v182
  %v318 = vmul.f32 %v298, %v183
  %v319 = vmul.f32 %v298, %v184
  %v320 = vmul.f32 %v298, %v185
  %v321 = vmul.f32 %v298, %v186
  %v322 = vmul.f32 %v298, %v187
  %v323 = vmul.f32 %v298, %v188
  %v324 = vmul.f32 %v298, %v189
  %v325 = vmul.f32 %v298, %v190
  %v326 = vmul.f32 %v298, %v191
  %v327 = vmul.f32 %v298, %v192
  %v328 = vmul.f32 %v298, %v193
  %v329 = vmul.f32 %v298, %v194
  %v330 = vmul.f32 %v298, %v195
  %v331 = vmul.f32 %v298, %v196
  %v332 = vmul.f32 %v298, %v197
  %v333 = vmul.f32 %v298, %v198
  %v334 = vmul.f32 %v298, %v199
  %v335 = vmul.f32 %v298, %v200
  %v336 = vmul.f32 %v298, %v201
  %v337 = vmul.f32 %v298, %v202
  %v338 = vmul.f32 %v298, %v203
  %v339 = vmul.f32 %v298, %v204
  %v340 = vmul.f32 %v298, %v205
  %v341 = vmul.f32 %v298, %v206
  %v342 = vmul.f32 %v298, %v207
  %v343 = vmul.f32 %v298, %v208
  %v344 = vmul.f32 %v298, %v209
  %v345 = vmul.f32 %v298, %v210
  %v346 = vmul.f32 %v298, %v211
  %v347 = vmul.f32 %v298, %v212
  %v348 = vmul.f32 %v298, %v213
  %v349 = vmul.f32 %v298, %v214
  %v350 = vmul.f32 %v298, %v215
  %v351 = vmul.f32 %v298, %v216
  %v352 = vmul.f32 %v298, %v217
  %v353 = vmul.f32 %v298, %v218
  %v354 = vmul.f32 %v298, %v219
  %v355 = vmul.f32 %v298, %v220
  %v356 = vmul.f32 %v298, %v221
  %v357 = vmul.f32 %v298, %v222
  %v358 = vmul.f32 %v298, %v223
  %v359 = vmul.f32 %v298, %v224
  %v360 = vmul.f32 %v298, %v225
  %v361 = vmul.f32 %v298, %v226
  %v362 = vmul.f32 %v298, %v227
  %v363 = vmul.f32 %v298, %v228
  %v364 = vsel %vm229, %v165, %v300
  %v365 = vsel %vm230, %v166, %v301
  %v366 = vsel %vm231, %v167, %v302
  %v367 = vsel %vm232, %v168, %v303
  %v368 = vsel %vm233, %v169, %v304
  %v369 = vsel %vm234, %v170, %v305
  %v370 = vsel %vm235, %v171, %v306
  %v371 = vsel %vm236, %v172, %v307
  %v372 = vsel %vm237, %v173, %v308
  %v373 = vsel %vm238, %v174, %v309
  %v374 = vsel %vm239, %v175, %v310
  %v375 = vsel %vm240, %v176, %v311
  %v376 = vsel %vm241, %v177, %v312
  %v377 = vsel %vm242, %v178, %v313
  %v378 = vsel %vm243, %v179, %v314
  %v379 = vsel %vm244, %v180, %v315
  %v380 = vsel %vm245, %v181, %v316
  %v381 = vsel %vm246, %v182, %v317
  %v382 = vsel %vm247, %v183, %v318
  %v383 = vsel %vm248, %v184, %v319
  %v384 = vsel %vm249, %v185, %v320
  %v385 = vsel %vm250, %v186, %v321
  %v386 = vsel %vm251, %v187, %v322
  %v387 = vsel %vm252, %v188, %v323
  %v388 = vsel %vm253, %v189, %v324
  %v389 = vsel %vm254, %v190, %v325
  %v390 = vsel %vm255, %v191, %v326
  %v391 = vsel %vm256, %v192, %v327
  %v392 = vsel %vm257, %v193, %v328
  %v393 = vsel %vm258, %v194, %v329
  %v394 = vsel %vm259, %v195, %v330
  %v395 = vsel %vm260, %v196, %v331
  %v396 = vsel %vm261, %v197, %v332
  %v397 = vsel %vm262, %v198, %v333
  %v398 = vsel %vm263, %v199, %v334
  %v399 = vsel %vm264, %v200, %v335
  %v400 = vsel %vm265, %v201, %v336
  %v401 = vsel %vm266, %v202, %v337
  %v402 = vsel %vm267, %v203, %v338
  %v403 = vsel %vm268, %v204, %v339
  %v404 = vsel %vm269, %v205, %v340
  %v405 = vsel %vm270, %v206, %v341
  %v406 = vsel %vm271, %v207, %v342
  %v407 = vsel %vm272, %v208, %v343
  %v408 = vsel %vm273, %v209, %v344
  %v409 = vsel %vm274, %v210, %v345
  %v410 = vsel %vm275, %v211, %v346
  %v411 = vsel %vm276, %v212, %v347
  %v412 = vsel %vm277, %v213, %v348
  %v413 = vsel %vm278, %v214, %v349
  %v414 = vsel %vm279, %v215, %v350
  %v415 = vsel %vm280, %v216, %v351
  %v416 = vsel %vm281, %v217, %v352
  %v417 = vsel %vm282, %v218, %v353
  %v418 = vsel %vm283, %v219, %v354
  %v419 = vsel %vm284, %v220, %v355
  %v420 = vsel %vm285, %v221, %v356
  %v421 = vsel %vm286, %v222, %v357
  %v422 = vsel %vm287, %v223, %v358
  %v423 = vsel %vm288, %v224, %v359
  %v424 = vsel %vm289, %v225, %v360
  %v425 = vsel %vm290, %v226, %v361
  %v426 = vsel %vm291, %v227, %v362
  %v427 = vsel %vm292, %v228, %v363
  %v428 = vpack.c.bf16 %v365, %v364
  %v429 = vpack.c.bf16 %v367, %v366
  %v430 = vpack.c.bf16 %v369, %v368
  %v431 = vpack.c.bf16 %v371, %v370
  %v432 = vpack.c.bf16 %v373, %v372
  %v433 = vpack.c.bf16 %v375, %v374
  %v434 = vpack.c.bf16 %v377, %v376
  %v435 = vpack.c.bf16 %v379, %v378
  %v436 = vpack.c.bf16 %v381, %v380
  %v437 = vpack.c.bf16 %v383, %v382
  %v438 = vpack.c.bf16 %v385, %v384
  %v439 = vpack.c.bf16 %v387, %v386
  %v440 = vpack.c.bf16 %v389, %v388
  %v441 = vpack.c.bf16 %v391, %v390
  %v442 = vpack.c.bf16 %v393, %v392
  %v443 = vpack.c.bf16 %v395, %v394
  %v444 = vpack.c.bf16 %v397, %v396
  %v445 = vpack.c.bf16 %v399, %v398
  %v446 = vpack.c.bf16 %v401, %v400
  %v447 = vpack.c.bf16 %v403, %v402
  %v448 = vpack.c.bf16 %v405, %v404
  %v449 = vpack.c.bf16 %v407, %v406
  %v450 = vpack.c.bf16 %v409, %v408
  %v451 = vpack.c.bf16 %v411, %v410
  %v452 = vpack.c.bf16 %v413, %v412
  %v453 = vpack.c.bf16 %v415, %v414
  %v454 = vpack.c.bf16 %v417, %v416
  %v455 = vpack.c.bf16 %v419, %v418
  %v456 = vpack.c.bf16 %v421, %v420
  %v457 = vpack.c.bf16 %v423, %v422
  %v458 = vpack.c.bf16 %v425, %v424
  %v459 = vpack.c.bf16 %v427, %v426
  %v460 = vld [vmem:[%s4] sm:$0xf]
  %v461 = vld [vmem:[%s4 + $0x4] sm:$0xf]
  %v462 = vld [vmem:[%s4 + $0x8] sm:$0xf]
  %v463 = vld [vmem:[%s4 + $0xc] sm:$0xf]
  %v464 = vld [vmem:[%s4 + $0x10] sm:$0xf]
  %v465 = vld [vmem:[%s4 + $0x14] sm:$0xf]
  %v466 = vld [vmem:[%s4 + $0x18] sm:$0xf]
  %v467 = vld [vmem:[%s4 + $0x1c] sm:$0xf]
  %v468 = vld [vmem:[%s4 + $0x20] sm:$0xf]
  %v469 = vld [vmem:[%s4 + $0x24] sm:$0xf]
  %v470 = vld [vmem:[%s4 + $0x28] sm:$0xf]
  %v471 = vld [vmem:[%s4 + $0x2c] sm:$0xf]
  %v472 = vld [vmem:[%s4 + $0x30] sm:$0xf]
  %v473 = vld [vmem:[%s4 + $0x34] sm:$0xf]
  %v474 = vld [vmem:[%s4 + $0x38] sm:$0xf]
  %v475 = vld [vmem:[%s4 + $0x3c] sm:$0xf]
  %v492 = vunpack.c.l.b16 %v460
  %v493 = vunpack.c.l.b16 %v461
  %v494 = vunpack.c.l.b16 %v462
  %v495 = vunpack.c.l.b16 %v463
  %v496 = vunpack.c.l.b16 %v464
  %v497 = vunpack.c.l.b16 %v465
  %v498 = vunpack.c.l.b16 %v466
  %v499 = vunpack.c.l.b16 %v467
  %v500 = vunpack.c.l.b16 %v468
  %v501 = vunpack.c.l.b16 %v469
  %v502 = vunpack.c.l.b16 %v470
  %v503 = vunpack.c.l.b16 %v471
  %v504 = vunpack.c.l.b16 %v472
  %v505 = vunpack.c.l.b16 %v473
  %v506 = vunpack.c.l.b16 %v474
  %v507 = vunpack.c.l.b16 %v475
  %v508 = vpack.c.b16 %v493, %v492
  %v509 = vpack.c.b16 %v495, %v494
  %v510 = vpack.c.b16 %v497, %v496
  %v511 = vpack.c.b16 %v499, %v498
  %v512 = vpack.c.b16 %v501, %v500
  %v513 = vpack.c.b16 %v503, %v502
  %v514 = vpack.c.b16 %v505, %v504
  %v515 = vpack.c.b16 %v507, %v506
  %524 = vmatprep.subr.bf16.mxu0 0
  %525 = vmatpush1.bf16.msra.mxu0 %v508
  %526 = vmatprep.subr.bf16.mxu0 0
  %527 = vmatpush1.bf16.msra.mxu0 %v509
  %528 = vmatprep.subr.bf16.mxu0 0
  %529 = vmatpush1.bf16.msra.mxu0 %v510
  %530 = vmatprep.subr.bf16.mxu0 0
  %531 = vmatpush1.bf16.msra.mxu0 %v511
  %532 = vmatprep.subr.bf16.mxu0 0
  %533 = vmatpush1.bf16.msra.mxu0 %v512
  %534 = vmatprep.subr.bf16.mxu0 0
  %535 = vmatpush1.bf16.msra.mxu0 %v513
  %536 = vmatprep.subr.bf16.mxu0 0
  %537 = vmatpush1.bf16.msra.mxu0 %v514
  %538 = vmatprep.subr.bf16.mxu0 0
  %539 = vmatpush1.bf16.msra.mxu0 %v515
  %540 = vmatprep.subr.bf16.mxu0 0
  %541 = vmatpush1.bf16.msra.mxu0 0
  %542 = vmatprep.subr.bf16.mxu0 0
  %543 = vmatpush1.bf16.msra.mxu0 0
  %544 = vmatprep.subr.bf16.mxu0 0
  %545 = vmatpush1.bf16.msra.mxu0 0
  %546 = vmatprep.subr.bf16.mxu0 0
  %547 = vmatpush1.bf16.msra.mxu0 0
  %548 = vmatprep.subr.bf16.mxu0 0
  %549 = vmatpush1.bf16.msra.mxu0 0
  %550 = vmatprep.subr.bf16.mxu0 0
  %551 = vmatpush1.bf16.msra.mxu0 0
  %552 = vmatprep.subr.bf16.mxu0 0
  %553 = vmatpush1.bf16.msra.mxu0 0
  %554 = vmatprep.subr.bf16.mxu0 0
  %555 = vmatpush1.bf16.msra.mxu0 0
  %556 = vmatprep.mubr.bf16.mxu0 0
  %557 = vmatmul.mubr.bf16.gmra.mrb[0].mxu0 %v428
  %v558 = vpop.f32.mrb[0].mxu0
  %v559 = vadd.f32 0.0, %v558
  %v560 = vpop.f32.mrb[0].mxu0
  %v561 = vpop.f32.mrb[0].mxu0
  %v562 = vadd.f32 0.0, %v561
  %v563 = vpop.f32.mrb[0].mxu0
  %564 = vmatprep.mubr.bf16.mxu0 0
  %565 = vmatmul.mubr.bf16.gmra.mrb[0].mxu0 %v429
  %v566 = vpop.f32.mrb[0].mxu0
  %v567 = vadd.f32 0.0, %v566
  %v568 = vpop.f32.mrb[0].mxu0
  %v569 = vpop.f32.mrb[0].mxu0
  %v570 = vadd.f32 0.0, %v569
  %v571 = vpop.f32.mrb[0].mxu0
  %572 = vmatprep.mubr.bf16.mxu0 0
  %573 = vmatmul.mubr.bf16.gmra.mrb[0].mxu0 %v430
  %v574 = vpop.f32.mrb[0].mxu0
  %v575 = vadd.f32 0.0, %v574
  %v576 = vpop.f32.mrb[0].mxu0
  %v577 = vpop.f32.mrb[0].mxu0
  %v578 = vadd.f32 0.0, %v577
  %v579 = vpop.f32.mrb[0].mxu0
  %580 = vmatprep.mubr.bf16.mxu0 0
  %581 = vmatmul.mubr.bf16.gmra.mrb[0].mxu0 %v431
  %v582 = vpop.f32.mrb[0].mxu0
  %v583 = vadd.f32 0.0, %v582
  %v584 = vpop.f32.mrb[0].mxu0
  %v585 = vpop.f32.mrb[0].mxu0
  %v586 = vadd.f32 0.0, %v585
  %v587 = vpop.f32.mrb[0].mxu0
  %588 = vmatprep.mubr.bf16.mxu0 0
  %589 = vmatmul.mubr.bf16.gmra.mrb[0].mxu0 %v432
  %v590 = vpop.f32.mrb[0].mxu0
  %v591 = vadd.f32 0.0, %v590
  %v592 = vpop.f32.mrb[0].mxu0
  %v593 = vpop.f32.mrb[0].mxu0
  %v594 = vadd.f32 0.0, %v593
  %v595 = vpop.f32.mrb[0].mxu0
  %596 = vmatprep.mubr.bf16.mxu0 0
  %597 = vmatmul.mubr.bf16.gmra.mrb[0].mxu0 %v433
  %v598 = vpop.f32.mrb[0].mxu0
  %v599 = vadd.f32 0.0, %v598
  %v600 = vpop.f32.mrb[0].mxu0
  %v601 = vpop.f32.mrb[0].mxu0
  %v602 = vadd.f32 0.0, %v601
  %v603 = vpop.f32.mrb[0].mxu0
  %604 = vmatprep.mubr.bf16.mxu0 0
  %605 = vmatmul.mubr.bf16.gmra.mrb[0].mxu0 %v434
  %v606 = vpop.f32.mrb[0].mxu0
  %v607 = vadd.f32 0.0, %v606
  %v608 = vpop.f32.mrb[0].mxu0
  %v609 = vpop.f32.mrb[0].mxu0
  %v610 = vadd.f32 0.0, %v609
  %v611 = vpop.f32.mrb[0].mxu0
  %612 = vmatprep.mubr.bf16.mxu0 0
  %613 = vmatmul.mubr.bf16.gmra.mrb[0].mxu0 %v435
  %v614 = vpop.f32.mrb[0].mxu0
  %v615 = vadd.f32 0.0, %v614
  %v616 = vpop.f32.mrb[0].mxu0
  %v617 = vpop.f32.mrb[0].mxu0
  %v618 = vadd.f32 0.0, %v617
  %v619 = vpop.f32.mrb[0].mxu0
  %620 = vmatprep.mubr.bf16.mxu0 0
  %621 = vmatmul.mubr.bf16.gmra.mrb[0].mxu0 %v436
  %v622 = vpop.f32.mrb[0].mxu0
  %v623 = vadd.f32 0.0, %v622
  %v624 = vpop.f32.mrb[0].mxu0
  %v625 = vpop.f32.mrb[0].mxu0
  %v626 = vadd.f32 0.0, %v625
  %v627 = vpop.f32.mrb[0].mxu0
  %628 = vmatprep.mubr.bf16.mxu0 0
  %629 = vmatmul.mubr.bf16.gmra.mrb[0].mxu0 %v437
  %v630 = vpop.f32.mrb[0].mxu0
  %v631 = vadd.f32 0.0, %v630
  %v632 = vpop.f32.mrb[0].mxu0
  %v633 = vpop.f32.mrb[0].mxu0
  %v634 = vadd.f32 0.0, %v633
  %v635 = vpop.f32.mrb[0].mxu0
  %636 = vmatprep.mubr.bf16.mxu0 0
  %637 = vmatmul.mubr.bf16.gmra.mrb[0].mxu0 %v438
  %v638 = vpop.f32.mrb[0].mxu0
  %v639 = vadd.f32 0.0, %v638
  %v640 = vpop.f32.mrb[0].mxu0
  %v641 = vpop.f32.mrb[0].mxu0
  %v642 = vadd.f32 0.0, %v641
  %v643 = vpop.f32.mrb[0].mxu0
  %644 = vmatprep.mubr.bf16.mxu0 0
  %645 = vmatmul.mubr.bf16.gmra.mrb[0].mxu0 %v439
  %v646 = vpop.f32.mrb[0].mxu0
  %v647 = vadd.f32 0.0, %v646
  %v648 = vpop.f32.mrb[0].mxu0
  %v649 = vpop.f32.mrb[0].mxu0
  %v650 = vadd.f32 0.0, %v649
  %v651 = vpop.f32.mrb[0].mxu0
  %652 = vmatprep.mubr.bf16.mxu0 0
  %653 = vmatmul.mubr.bf16.gmra.mrb[0].mxu0 %v440
  %v654 = vpop.f32.mrb[0].mxu0
  %v655 = vadd.f32 0.0, %v654
  %v656 = vpop.f32.mrb[0].mxu0
  %v657 = vpop.f32.mrb[0].mxu0
  %v658 = vadd.f32 0.0, %v657
  %v659 = vpop.f32.mrb[0].mxu0
  %660 = vmatprep.mubr.bf16.mxu0 0
  %661 = vmatmul.mubr.bf16.gmra.mrb[0].mxu0 %v441
  %v662 = vpop.f32.mrb[0].mxu0
  %v663 = vadd.f32 0.0, %v662
  %v664 = vpop.f32.mrb[0].mxu0
  %v665 = vpop.f32.mrb[0].mxu0
  %v666 = vadd.f32 0.0, %v665
  %v667 = vpop.f32.mrb[0].mxu0
  %668 = vmatprep.mubr.bf16.mxu0 0
  %669 = vmatmul.mubr.bf16.gmra.mrb[0].mxu0 %v442
  %v670 = vpop.f32.mrb[0].mxu0
  %v671 = vadd.f32 0.0, %v670
  %v672 = vpop.f32.mrb[0].mxu0
  %v673 = vpop.f32.mrb[0].mxu0
  %v674 = vadd.f32 0.0, %v673
  %v675 = vpop.f32.mrb[0].mxu0
  %676 = vmatprep.mubr.bf16.mxu0 0
  %677 = vmatmul.mubr.bf16.gmra.mrb[0].mxu0 %v443
  %v678 = vpop.f32.mrb[0].mxu0
  %v679 = vadd.f32 0.0, %v678
  %v680 = vpop.f32.mrb[0].mxu0
  %v681 = vpop.f32.mrb[0].mxu0
  %v682 = vadd.f32 0.0, %v681
  %v683 = vpop.f32.mrb[0].mxu0
  %684 = vmatprep.mubr.bf16.mxu0 0
  %685 = vmatmul.mubr.bf16.gmra.mrb[0].mxu0 %v444
  %v686 = vpop.f32.mrb[0].mxu0
  %v687 = vadd.f32 0.0, %v686
  %v688 = vpop.f32.mrb[0].mxu0
  %v689 = vpop.f32.mrb[0].mxu0
  %v690 = vadd.f32 0.0, %v689
  %v691 = vpop.f32.mrb[0].mxu0
  %692 = vmatprep.mubr.bf16.mxu0 0
  %693 = vmatmul.mubr.bf16.gmra.mrb[0].mxu0 %v445
  %v694 = vpop.f32.mrb[0].mxu0
  %v695 = vadd.f32 0.0, %v694
  %v696 = vpop.f32.mrb[0].mxu0
  %v697 = vpop.f32.mrb[0].mxu0
  %v698 = vadd.f32 0.0, %v697
  %v699 = vpop.f32.mrb[0].mxu0
  %700 = vmatprep.mubr.bf16.mxu0 0
  %701 = vmatmul.mubr.bf16.gmra.mrb[0].mxu0 %v446
  %v702 = vpop.f32.mrb[0].mxu0
  %v703 = vadd.f32 0.0, %v702
  %v704 = vpop.f32.mrb[0].mxu0
  %v705 = vpop.f32.mrb[0].mxu0
  %v706 = vadd.f32 0.0, %v705
  %v707 = vpop.f32.mrb[0].mxu0
  %708 = vmatprep.mubr.bf16.mxu0 0
  %709 = vmatmul.mubr.bf16.gmra.mrb[0].mxu0 %v447
  %v710 = vpop.f32.mrb[0].mxu0
  %v711 = vadd.f32 0.0, %v710
  %v712 = vpop.f32.mrb[0].mxu0
  %v713 = vpop.f32.mrb[0].mxu0
  %v714 = vadd.f32 0.0, %v713
  %v715 = vpop.f32.mrb[0].mxu0
  %716 = vmatprep.mubr.bf16.mxu0 0
  %717 = vmatmul.mubr.bf16.gmra.mrb[0].mxu0 %v448
  %v718 = vpop.f32.mrb[0].mxu0
  %v719 = vadd.f32 0.0, %v718
  %v720 = vpop.f32.mrb[0].mxu0
  %v721 = vpop.f32.mrb[0].mxu0
  %v722 = vadd.f32 0.0, %v721
  %v723 = vpop.f32.mrb[0].mxu0
  %724 = vmatprep.mubr.bf16.mxu0 0
  %725 = vmatmul.mubr.bf16.gmra.mrb[0].mxu0 %v449
  %v726 = vpop.f32.mrb[0].mxu0
  %v727 = vadd.f32 0.0, %v726
  %v728 = vpop.f32.mrb[0].mxu0
  %v729 = vpop.f32.mrb[0].mxu0
  %v730 = vadd.f32 0.0, %v729
  %v731 = vpop.f32.mrb[0].mxu0
  %732 = vmatprep.mubr.bf16.mxu0 0
  %733 = vmatmul.mubr.bf16.gmra.mrb[0].mxu0 %v450
  %v734 = vpop.f32.mrb[0].mxu0
  %v735 = vadd.f32 0.0, %v734
  %v736 = vpop.f32.mrb[0].mxu0
  %v737 = vpop.f32.mrb[0].mxu0
  %v738 = vadd.f32 0.0, %v737
  %v739 = vpop.f32.mrb[0].mxu0
  %740 = vmatprep.mubr.bf16.mxu0 0
  %741 = vmatmul.mubr.bf16.gmra.mrb[0].mxu0 %v451
  %v742 = vpop.f32.mrb[0].mxu0
  %v743 = vadd.f32 0.0, %v742
  %v744 = vpop.f32.mrb[0].mxu0
  %v745 = vpop.f32.mrb[0].mxu0
  %v746 = vadd.f32 0.0, %v745
  %v747 = vpop.f32.mrb[0].mxu0
  %748 = vmatprep.mubr.bf16.mxu0 0
  %749 = vmatmul.mubr.bf16.gmra.mrb[0].mxu0 %v452
  %v750 = vpop.f32.mrb[0].mxu0
  %v751 = vadd.f32 0.0, %v750
  %v752 = vpop.f32.mrb[0].mxu0
  %v753 = vpop.f32.mrb[0].mxu0
  %v754 = vadd.f32 0.0, %v753
  %v755 = vpop.f32.mrb[0].mxu0
  %756 = vmatprep.mubr.bf16.mxu0 0
  %757 = vmatmul.mubr.bf16.gmra.mrb[0].mxu0 %v453
  %v758 = vpop.f32.mrb[0].mxu0
  %v759 = vadd.f32 0.0, %v758
  %v760 = vpop.f32.mrb[0].mxu0
  %v761 = vpop.f32.mrb[0].mxu0
  %v762 = vadd.f32 0.0, %v761
  %v763 = vpop.f32.mrb[0].mxu0
  %764 = vmatprep.mubr.bf16.mxu0 0
  %765 = vmatmul.mubr.bf16.gmra.mrb[0].mxu0 %v454
  %v766 = vpop.f32.mrb[0].mxu0
  %v767 = vadd.f32 0.0, %v766
  %v768 = vpop.f32.mrb[0].mxu0
  %v769 = vpop.f32.mrb[0].mxu0
  %v770 = vadd.f32 0.0, %v769
  %v771 = vpop.f32.mrb[0].mxu0
  %772 = vmatprep.mubr.bf16.mxu0 0
  %773 = vmatmul.mubr.bf16.gmra.mrb[0].mxu0 %v455
  %v774 = vpop.f32.mrb[0].mxu0
  %v775 = vadd.f32 0.0, %v774
  %v776 = vpop.f32.mrb[0].mxu0
  %v777 = vpop.f32.mrb[0].mxu0
  %v778 = vadd.f32 0.0, %v777
  %v779 = vpop.f32.mrb[0].mxu0
  %780 = vmatprep.mubr.bf16.mxu0 0
  %781 = vmatmul.mubr.bf16.gmra.mrb[0].mxu0 %v456
  %v782 = vpop.f32.mrb[0].mxu0
  %v783 = vadd.f32 0.0, %v782
  %v784 = vpop.f32.mrb[0].mxu0
  %v785 = vpop.f32.mrb[0].mxu0
  %v786 = vadd.f32 0.0, %v785
  %v787 = vpop.f32.mrb[0].mxu0
  %788 = vmatprep.mubr.bf16.mxu0 0
  %789 = vmatmul.mubr.bf16.gmra.mrb[0].mxu0 %v457
  %v790 = vpop.f32.mrb[0].mxu0
  %v791 = vadd.f32 0.0, %v790
  %v792 = vpop.f32.mrb[0].mxu0
  %v793 = vpop.f32.mrb[0].mxu0
  %v794 = vadd.f32 0.0, %v793
  %v795 = vpop.f32.mrb[0].mxu0
  %796 = vmatprep.mubr.bf16.mxu0 0
  %797 = vmatmul.mubr.bf16.gmra.mrb[0].mxu0 %v458
  %v798 = vpop.f32.mrb[0].mxu0
  %v799 = vadd.f32 0.0, %v798
  %v800 = vpop.f32.mrb[0].mxu0
  %v801 = vpop.f32.mrb[0].mxu0
  %v802 = vadd.f32 0.0, %v801
  %v803 = vpop.f32.mrb[0].mxu0
  %804 = vmatprep.mubr.bf16.mxu0 0
  %805 = vmatmul.mubr.bf16.gmra.mrb[0].mxu0 %v459
  %v806 = vpop.f32.mrb[0].mxu0
  %v807 = vadd.f32 0.0, %v806
  %v808 = vpop.f32.mrb[0].mxu0
  %v809 = vpop.f32.mrb[0].mxu0
  %v810 = vadd.f32 0.0, %v809
  %v811 = vpop.f32.mrb[0].mxu0
  %812 = vdwg.mxu0
  %813 = vst [vmem:[%s5] sm:$0xff] %v559
  %814 = vst [vmem:[%s5 + $0x8] sm:$0xff] %v562
  %815 = vst [vmem:[%s5 + $0x10] sm:$0xff] %v567
  %816 = vst [vmem:[%s5 + $0x18] sm:$0xff] %v570
  %817 = vst [vmem:[%s5 + $0x20] sm:$0xff] %v575
  %818 = vst [vmem:[%s5 + $0x28] sm:$0xff] %v578
  %819 = vst [vmem:[%s5 + $0x30] sm:$0xff] %v583
  %820 = vst [vmem:[%s5 + $0x38] sm:$0xff] %v586
  %821 = vst [vmem:[%s5 + $0x40] sm:$0xff] %v591
  %822 = vst [vmem:[%s5 + $0x48] sm:$0xff] %v594
  %823 = vst [vmem:[%s5 + $0x50] sm:$0xff] %v599
  %824 = vst [vmem:[%s5 + $0x58] sm:$0xff] %v602
  %825 = vst [vmem:[%s5 + $0x60] sm:$0xff] %v607
  %826 = vst [vmem:[%s5 + $0x68] sm:$0xff] %v610
  %827 = vst [vmem:[%s5 + $0x70] sm:$0xff] %v615
  %828 = vst [vmem:[%s5 + $0x78] sm:$0xff] %v618
  %829 = vst [vmem:[%s5 + $0x80] sm:$0xff] %v623
  %830 = vst [vmem:[%s5 + $0x88] sm:$0xff] %v626
  %831 = vst [vmem:[%s5 + $0x90] sm:$0xff] %v631
  %832 = vst [vmem:[%s5 + $0x98] sm:$0xff] %v634
  %833 = vst [vmem:[%s5 + $0xa0] sm:$0xff] %v639
  %834 = vst [vmem:[%s5 + $0xa8] sm:$0xff] %v642
  %835 = vst [vmem:[%s5 + $0xb0] sm:$0xff] %v647
  %836 = vst [vmem:[%s5 + $0xb8] sm:$0xff] %v650
  %837 = vst [vmem:[%s5 + $0xc0] sm:$0xff] %v655
  %838 = vst [vmem:[%s5 + $0xc8] sm:$0xff] %v658
  %839 = vst [vmem:[%s5 + $0xd0] sm:$0xff] %v663
  %840 = vst [vmem:[%s5 + $0xd8] sm:$0xff] %v666
  %841 = vst [vmem:[%s5 + $0xe0] sm:$0xff] %v671
  %842 = vst [vmem:[%s5 + $0xe8] sm:$0xff] %v674
  %843 = vst [vmem:[%s5 + $0xf0] sm:$0xff] %v679
  %844 = vst [vmem:[%s5 + $0xf8] sm:$0xff] %v682
  %845 = vst [vmem:[%s5 + $0x100] sm:$0xff] %v687
  %846 = vst [vmem:[%s5 + $0x108] sm:$0xff] %v690
  %847 = vst [vmem:[%s5 + $0x110] sm:$0xff] %v695
  %848 = vst [vmem:[%s5 + $0x118] sm:$0xff] %v698
  %849 = vst [vmem:[%s5 + $0x120] sm:$0xff] %v703
  %850 = vst [vmem:[%s5 + $0x128] sm:$0xff] %v706
  %851 = vst [vmem:[%s5 + $0x130] sm:$0xff] %v711
  %852 = vst [vmem:[%s5 + $0x138] sm:$0xff] %v714
  %853 = vst [vmem:[%s5 + $0x140] sm:$0xff] %v719
  %854 = vst [vmem:[%s5 + $0x148] sm:$0xff] %v722
  %855 = vst [vmem:[%s5 + $0x150] sm:$0xff] %v727
  %856 = vst [vmem:[%s5 + $0x158] sm:$0xff] %v730
  %857 = vst [vmem:[%s5 + $0x160] sm:$0xff] %v735
  %858 = vst [vmem:[%s5 + $0x168] sm:$0xff] %v738
  %859 = vst [vmem:[%s5 + $0x170] sm:$0xff] %v743
  %860 = vst [vmem:[%s5 + $0x178] sm:$0xff] %v746
  %861 = vst [vmem:[%s5 + $0x180] sm:$0xff] %v751
  %862 = vst [vmem:[%s5 + $0x188] sm:$0xff] %v754
  %863 = vst [vmem:[%s5 + $0x190] sm:$0xff] %v759
  %864 = vst [vmem:[%s5 + $0x198] sm:$0xff] %v762
  %865 = vst [vmem:[%s5 + $0x1a0] sm:$0xff] %v767
  %866 = vst [vmem:[%s5 + $0x1a8] sm:$0xff] %v770
  %867 = vst [vmem:[%s5 + $0x1b0] sm:$0xff] %v775
  %868 = vst [vmem:[%s5 + $0x1b8] sm:$0xff] %v778
  %869 = vst [vmem:[%s5 + $0x1c0] sm:$0xff] %v783
  %870 = vst [vmem:[%s5 + $0x1c8] sm:$0xff] %v786
  %871 = vst [vmem:[%s5 + $0x1d0] sm:$0xff] %v791
  %872 = vst [vmem:[%s5 + $0x1d8] sm:$0xff] %v794
  %873 = vst [vmem:[%s5 + $0x1e0] sm:$0xff] %v799
  %874 = vst [vmem:[%s5 + $0x1e8] sm:$0xff] %v802
  %875 = vst [vmem:[%s5 + $0x1f0] sm:$0xff] %v807
  %876 = vst [vmem:[%s5 + $0x1f8] sm:$0xff] %v810
  %v877 = vadd.f32 %v559, %v562
  %v878 = vadd.f32 %v877, %v567
  %v879 = vadd.f32 %v878, %v570
  %v880 = vadd.f32 %v879, %v575
  %v881 = vadd.f32 %v880, %v578
  %v882 = vadd.f32 %v881, %v583
  %v883 = vadd.f32 %v882, %v586
  %v884 = vadd.f32 %v883, %v591
  %v885 = vadd.f32 %v884, %v594
  %v886 = vadd.f32 %v885, %v599
  %v887 = vadd.f32 %v886, %v602
  %v888 = vadd.f32 %v887, %v607
  %v889 = vadd.f32 %v888, %v610
  %v890 = vadd.f32 %v889, %v615
  %v891 = vadd.f32 %v890, %v618
  %v892 = vadd.f32 %v891, %v623
  %v893 = vadd.f32 %v892, %v626
  %v894 = vadd.f32 %v893, %v631
  %v895 = vadd.f32 %v894, %v634
  %v896 = vadd.f32 %v895, %v639
  %v897 = vadd.f32 %v896, %v642
  %v898 = vadd.f32 %v897, %v647
  %v899 = vadd.f32 %v898, %v650
  %v900 = vadd.f32 %v899, %v655
  %v901 = vadd.f32 %v900, %v658
  %v902 = vadd.f32 %v901, %v663
  %v903 = vadd.f32 %v902, %v666
  %v904 = vadd.f32 %v903, %v671
  %v905 = vadd.f32 %v904, %v674
  %v906 = vadd.f32 %v905, %v679
  %v907 = vadd.f32 %v906, %v682
  %v908 = vadd.f32 %v907, %v687
  %v909 = vadd.f32 %v908, %v690
  %v910 = vadd.f32 %v909, %v695
  %v911 = vadd.f32 %v910, %v698
  %v912 = vadd.f32 %v911, %v703
  %v913 = vadd.f32 %v912, %v706
  %v914 = vadd.f32 %v913, %v711
  %v915 = vadd.f32 %v914, %v714
  %v916 = vadd.f32 %v915, %v719
  %v917 = vadd.f32 %v916, %v722
  %v918 = vadd.f32 %v917, %v727
  %v919 = vadd.f32 %v918, %v730
  %v920 = vadd.f32 %v919, %v735
  %v921 = vadd.f32 %v920, %v738
  %v922 = vadd.f32 %v921, %v743
  %v923 = vadd.f32 %v922, %v746
  %v924 = vadd.f32 %v923, %v751
  %v925 = vadd.f32 %v924, %v754
  %v926 = vadd.f32 %v925, %v759
  %v927 = vadd.f32 %v926, %v762
  %v928 = vadd.f32 %v927, %v767
  %v929 = vadd.f32 %v928, %v770
  %v930 = vadd.f32 %v929, %v775
  %v931 = vadd.f32 %v930, %v778
  %v932 = vadd.f32 %v931, %v783
  %v933 = vadd.f32 %v932, %v786
  %v934 = vadd.f32 %v933, %v791
  %v935 = vadd.f32 %v934, %v794
  %v936 = vadd.f32 %v935, %v799
  %v937 = vadd.f32 %v936, %v802
  %v938 = vadd.f32 %v937, %v807
  %v939 = vadd.f32 %v938, %v810
  %v940 = vrot.slane %v939, 4
  %v941 = vadd.f32 %v939, %v940
  %v942 = vrot.slane %v941, 2
  %v943 = vadd.f32 %v941, %v942
  %v944 = vrot.slane %v943, 1
  %v945 = vadd.f32 %v943, %v944
  %946 = vst [vmem:[%s6] sm:$0x1] %v945
  %v947 = vmul.f32 %v559, %v559
  %v948 = vmul.f32 %v562, %v562
  %v949 = vmul.f32 %v567, %v567
  %v950 = vmul.f32 %v570, %v570
  %v951 = vmul.f32 %v575, %v575
  %v952 = vmul.f32 %v578, %v578
  %v953 = vmul.f32 %v583, %v583
  %v954 = vmul.f32 %v586, %v586
  %v955 = vmul.f32 %v591, %v591
  %v956 = vmul.f32 %v594, %v594
  %v957 = vmul.f32 %v599, %v599
  %v958 = vmul.f32 %v602, %v602
  %v959 = vmul.f32 %v607, %v607
  %v960 = vmul.f32 %v610, %v610
  %v961 = vmul.f32 %v615, %v615
  %v962 = vmul.f32 %v618, %v618
  %v963 = vmul.f32 %v623, %v623
  %v964 = vmul.f32 %v626, %v626
  %v965 = vmul.f32 %v631, %v631
  %v966 = vmul.f32 %v634, %v634
  %v967 = vmul.f32 %v639, %v639
  %v968 = vmul.f32 %v642, %v642
  %v969 = vmul.f32 %v647, %v647
  %v970 = vmul.f32 %v650, %v650
  %v971 = vmul.f32 %v655, %v655
  %v972 = vmul.f32 %v658, %v658
  %v973 = vmul.f32 %v663, %v663
  %v974 = vmul.f32 %v666, %v666
  %v975 = vmul.f32 %v671, %v671
  %v976 = vmul.f32 %v674, %v674
  %v977 = vmul.f32 %v679, %v679
  %v978 = vmul.f32 %v682, %v682
  %v979 = vmul.f32 %v687, %v687
  %v980 = vmul.f32 %v690, %v690
  %v981 = vmul.f32 %v695, %v695
  %v982 = vmul.f32 %v698, %v698
  %v983 = vmul.f32 %v703, %v703
  %v984 = vmul.f32 %v706, %v706
  %v985 = vmul.f32 %v711, %v711
  %v986 = vmul.f32 %v714, %v714
  %v987 = vmul.f32 %v719, %v719
  %v988 = vmul.f32 %v722, %v722
  %v989 = vmul.f32 %v727, %v727
  %v990 = vmul.f32 %v730, %v730
  %v991 = vmul.f32 %v735, %v735
  %v992 = vmul.f32 %v738, %v738
  %v993 = vmul.f32 %v743, %v743
  %v994 = vmul.f32 %v746, %v746
  %v995 = vmul.f32 %v751, %v751
  %v996 = vmul.f32 %v754, %v754
  %v997 = vmul.f32 %v759, %v759
  %v998 = vmul.f32 %v762, %v762
  %v999 = vmul.f32 %v767, %v767
  %v1000 = vmul.f32 %v770, %v770
  %v1001 = vmul.f32 %v775, %v775
  %v1002 = vmul.f32 %v778, %v778
  %v1003 = vmul.f32 %v783, %v783
  %v1004 = vmul.f32 %v786, %v786
  %v1005 = vmul.f32 %v791, %v791
  %v1006 = vmul.f32 %v794, %v794
  %v1007 = vmul.f32 %v799, %v799
  %v1008 = vmul.f32 %v802, %v802
  %v1009 = vmul.f32 %v807, %v807
  %v1010 = vmul.f32 %v810, %v810
  %v1011 = vadd.f32 %v947, %v948
  %v1012 = vadd.f32 %v1011, %v949
  %v1013 = vadd.f32 %v1012, %v950
  %v1014 = vadd.f32 %v1013, %v951
  %v1015 = vadd.f32 %v1014, %v952
  %v1016 = vadd.f32 %v1015, %v953
  %v1017 = vadd.f32 %v1016, %v954
  %v1018 = vadd.f32 %v1017, %v955
  %v1019 = vadd.f32 %v1018, %v956
  %v1020 = vadd.f32 %v1019, %v957
  %v1021 = vadd.f32 %v1020, %v958
  %v1022 = vadd.f32 %v1021, %v959
  %v1023 = vadd.f32 %v1022, %v960
  %v1024 = vadd.f32 %v1023, %v961
  %v1025 = vadd.f32 %v1024, %v962
  %v1026 = vadd.f32 %v1025, %v963
  %v1027 = vadd.f32 %v1026, %v964
  %v1028 = vadd.f32 %v1027, %v965
  %v1029 = vadd.f32 %v1028, %v966
  %v1030 = vadd.f32 %v1029, %v967
  %v1031 = vadd.f32 %v1030, %v968
  %v1032 = vadd.f32 %v1031, %v969
  %v1033 = vadd.f32 %v1032, %v970
  %v1034 = vadd.f32 %v1033, %v971
  %v1035 = vadd.f32 %v1034, %v972
  %v1036 = vadd.f32 %v1035, %v973
  %v1037 = vadd.f32 %v1036, %v974
  %v1038 = vadd.f32 %v1037, %v975
  %v1039 = vadd.f32 %v1038, %v976
  %v1040 = vadd.f32 %v1039, %v977
  %v1041 = vadd.f32 %v1040, %v978
  %v1042 = vadd.f32 %v1041, %v979
  %v1043 = vadd.f32 %v1042, %v980
  %v1044 = vadd.f32 %v1043, %v981
  %v1045 = vadd.f32 %v1044, %v982
  %v1046 = vadd.f32 %v1045, %v983
  %v1047 = vadd.f32 %v1046, %v984
  %v1048 = vadd.f32 %v1047, %v985
  %v1049 = vadd.f32 %v1048, %v986
  %v1050 = vadd.f32 %v1049, %v987
  %v1051 = vadd.f32 %v1050, %v988
  %v1052 = vadd.f32 %v1051, %v989
  %v1053 = vadd.f32 %v1052, %v990
  %v1054 = vadd.f32 %v1053, %v991
  %v1055 = vadd.f32 %v1054, %v992
  %v1056 = vadd.f32 %v1055, %v993
  %v1057 = vadd.f32 %v1056, %v994
  %v1058 = vadd.f32 %v1057, %v995
  %v1059 = vadd.f32 %v1058, %v996
  %v1060 = vadd.f32 %v1059, %v997
  %v1061 = vadd.f32 %v1060, %v998
  %v1062 = vadd.f32 %v1061, %v999
  %v1063 = vadd.f32 %v1062, %v1000
  %v1064 = vadd.f32 %v1063, %v1001
  %v1065 = vadd.f32 %v1064, %v1002
  %v1066 = vadd.f32 %v1065, %v1003
  %v1067 = vadd.f32 %v1066, %v1004
  %v1068 = vadd.f32 %v1067, %v1005
  %v1069 = vadd.f32 %v1068, %v1006
  %v1070 = vadd.f32 %v1069, %v1007
  %v1071 = vadd.f32 %v1070, %v1008
  %v1072 = vadd.f32 %v1071, %v1009
  %v1073 = vadd.f32 %v1072, %v1010
  %v1074 = vrot.slane %v1073, 4
  %v1075 = vadd.f32 %v1073, %v1074
  %v1076 = vrot.slane %v1075, 2
  %v1077 = vadd.f32 %v1075, %v1076
  %v1078 = vrot.slane %v1077, 1
  %v1079 = vadd.f32 %v1077, %v1078
  %1080 = vst [vmem:[%s6 + $0x1] sm:$0x1] %v1079
  // Predicated region
  $region22: #{residual_forward.9} parent=0 // pred_check
    _
  $region23: #{residual_forward.9} parent=0 // pred_check_branch
    %1082 = sbr.rel (0) target = $region25
  $region24: #{residual_forward.9} parent=0 // pred_region
    _
  $region25: #{residual_forward.9} parent=0 // pred_fallthru
    _
  // Predicated region
  $region26: #{residual_forward.9} parent=0 // pred_check
    _
  $region27: #{residual_forward.9} parent=0 // pred_check_branch
    %1084 = sbr.rel (0) target = $region29
  $region28: #{residual_forward.9} parent=0 // pred_region
    _
  $region29: #{residual_forward.9} parent=0 // pred_fallthru
    _
  // Predicated region
  $region30: #{residual_forward.9} parent=0 // pred_check
    _
  $region31: #{residual_forward.9} parent=0 // pred_check_branch
    %1086 = sbr.rel (0) target = $region33
  $region32: #{residual_forward.9} parent=0 // pred_region
    _
  $region33: #{residual_forward.9} parent=0 // pred_fallthru
    _
  // Predicated region
  $region34: #{residual_forward.9} parent=0 // pred_check
    _
  $region35: #{residual_forward.9} parent=0 // pred_check_branch
    %1088 = sbr.rel (0) target = $region37
  $region36: #{residual_forward.9} parent=0 // pred_region
    _
  $region37: #{residual_forward.9} parent=0 // pred_fallthru
    _

// kernel: residual_forward.8
$region0: #{residual_forward.8}
  #allocation0 [shape = 'u32[]', space=smem, size = 0x4, offset = 0x4, fixed_abs, tag = 'smem constant byte address 0x4 - core index']
  #allocation1 [shape = 'u32[144,128]{1,0:T(1,128)}', space=vmem, size = 0x12000, scoped, tag = 'internal scratch']
  #allocation2 [shape = 'f32[18,18,128]{2,1,0:T(8,128)}', space=vmem, size = 0x36000, scoped, tag = 'scratch operand']
  %s0 = inlined_call_operand.vmem [shape: f32[2,16,16,128], index: 0, kind: input, shape index: {}]
  %s1 = inlined_call_operand.vmem [shape: f32[1,128], index: 1, kind: input, shape index: {}]
  %s2 = inlined_call_operand.vmem [shape: f32[1,128], index: 2, kind: input, shape index: {}]
  %s3 = inlined_call_operand.vmem [shape: f32[1,128], index: 3, kind: input, shape index: {}]
  %s4 = inlined_call_operand.vmem [shape: f32[9,128], index: 4, kind: input, shape index: {}]
  %s5 = inlined_call_operand.vmem [shape: f32[2,16,16,128], index: 5, kind: output, shape index: {0}]
  %s6 = inlined_call_operand.vmem [shape: f32[2,2,128], index: 6, kind: output, shape index: {1}]
  %7 = xla_tuple %s5, %s6
  %s8 = sld [smem:[#allocation0]]
  $region68: #{residual_forward.8} parent=0
    _
  %s10 = ssub.s32 1, %s8
  %s11 = scalar_select 0, %s10, %s8
  loop: start=0, step=1, limit=4
  $region2: #{residual_forward.8} parent=0 // loop_pre_header
    _
  $region3: #{residual_forward.8} parent=0 // loop_header
    %s13 = sphi 0, %s17
    %p14 = scmp.ge.s32.totalorder %s13, 4
    %s23 = sphi 0, %s25
    %s26 = sphi 0, %s23
    %s27 = sphi 0, %s26
    %s43 = sphi 0, %s27
    %s47 = sphi 0, %s47
    %s49 = sphi 0, %s47
    %s50 = sphi 0, %s49
    %s64 = sphi 0, %s50
    %s68 = sphi 0, %s68
    %s70 = sphi 0, %s68
    %s71 = sphi 0, %s70
    %s85 = sphi 0, %s71
    %s89 = sphi 0, %s89
    %s91 = sphi 0, %s89
    %s92 = sphi 0, %s91
    %s106 = sphi 0, %s92
    %s110 = sphi 0, %s110
    %s112 = sphi 0, %s110
    %s113 = sphi 0, %s112
    %s127 = sphi 0, %s113
    %s133 = sphi 0, %s135
    %s136 = sphi 0, %s133
    %s137 = sphi 0, %s136
    %s153 = sphi 0, %s137
    %s159 = sphi 0, %s161
    %s162 = sphi 0, %s159
    %s163 = sphi 0, %s162
    %s179 = sphi 0, %s163
  $region4: #{residual_forward.8} parent=0 // loop_header_branch
    %16 = sbr.rel (%p14) target = $region8
  $region5: #{residual_forward.8} parent=0 // loop_body
    %s18 = ssub.s32 %s13, 1
    %s19 = ssub.s32 %s13, 2
    %s20 = sadd.s32 %s13, 1
    %s21 = ssub.s32 %s13, %s20
    %p22 = scmp.eq.s32.totalorder %s21, 0
    %s24 = sadd.s32 %s23, 1
    %s25 = scalar_select %p22, %s23, %s24
    %p28 = pneg %p22
    %p29 = scmp.eq.s32.totalorder %s13, 1
    %p30 = por %p28, %p29
    %p31 = scmp.ne.s32.totalorder %s23, %s26
    %p32 = scmp.eq.s32.totalorder %s13, 0
    %p33 = por %p31, %p32
    %p34 = scmp.ne.s32.totalorder %s23, %s26
    %p35 = scmp.eq.s32.totalorder %s18, 1
    %p36 = por %p34, %p35
    %p37 = scmp.ne.s32.totalorder %s26, %s27
    %p38 = scmp.eq.s32.totalorder %s18, 0
    %p39 = por %p37, %p38
    %p40 = scmp.ne.s32.totalorder %s26, %s27
    %p41 = scmp.eq.s32.totalorder %s19, 1
    %p42 = por %p40, %p41
    %p44 = scmp.ne.s32.totalorder %s27, %s43
    %p45 = scmp.eq.s32.totalorder %s19, 0
    %p46 = por %p44, %p45
    %s48 = sadd.s32 %s47, 1
    %p51 = scmp.eq.s32.totalorder %s13, 1
    %p52 = scmp.ne.s32.totalorder %s47, %s49
    %p53 = scmp.eq.s32.totalorder %s13, 0
    %p54 = por %p52, %p53
    %p55 = scmp.ne.s32.totalorder %s47, %s49
    %p56 = scmp.eq.s32.totalorder %s18, 1
    %p57 = por %p55, %p56
    %p58 = scmp.ne.s32.totalorder %s49, %s50
    %p59 = scmp.eq.s32.totalorder %s18, 0
    %p60 = por %p58, %p59
    %p61 = scmp.ne.s32.totalorder %s49, %s50
    %p62 = scmp.eq.s32.totalorder %s19, 1
    %p63 = por %p61, %p62
    %p65 = scmp.ne.s32.totalorder %s50, %s64
    %p66 = scmp.eq.s32.totalorder %s19, 0
    %p67 = por %p65, %p66
    %s69 = sadd.s32 %s68, 1
    %p72 = scmp.eq.s32.totalorder %s13, 1
    %p73 = scmp.ne.s32.totalorder %s68, %s70
    %p74 = scmp.eq.s32.totalorder %s13, 0
    %p75 = por %p73, %p74
    %p76 = scmp.ne.s32.totalorder %s68, %s70
    %p77 = scmp.eq.s32.totalorder %s18, 1
    %p78 = por %p76, %p77
    %p79 = scmp.ne.s32.totalorder %s70, %s71
    %p80 = scmp.eq.s32.totalorder %s18, 0
    %p81 = por %p79, %p80
    %p82 = scmp.ne.s32.totalorder %s70, %s71
    %p83 = scmp.eq.s32.totalorder %s19, 1
    %p84 = por %p82, %p83
    %p86 = scmp.ne.s32.totalorder %s71, %s85
    %p87 = scmp.eq.s32.totalorder %s19, 0
    %p88 = por %p86, %p87
    %s90 = sadd.s32 %s89, 1
    %p93 = scmp.eq.s32.totalorder %s13, 1
    %p94 = scmp.ne.s32.totalorder %s89, %s91
    %p95 = scmp.eq.s32.totalorder %s13, 0
    %p96 = por %p94, %p95
    %p97 = scmp.ne.s32.totalorder %s89, %s91
    %p98 = scmp.eq.s32.totalorder %s18, 1
    %p99 = por %p97, %p98
    %p100 = scmp.ne.s32.totalorder %s91, %s92
    %p101 = scmp.eq.s32.totalorder %s18, 0
    %p102 = por %p100, %p101
    %p103 = scmp.ne.s32.totalorder %s91, %s92
    %p104 = scmp.eq.s32.totalorder %s19, 1
    %p105 = por %p103, %p104
    %p107 = scmp.ne.s32.totalorder %s92, %s106
    %p108 = scmp.eq.s32.totalorder %s19, 0
    %p109 = por %p107, %p108
    %s111 = sadd.s32 %s110, 1
    %p114 = scmp.eq.s32.totalorder %s13, 1
    %p115 = scmp.ne.s32.totalorder %s110, %s112
    %p116 = scmp.eq.s32.totalorder %s13, 0
    %p117 = por %p115, %p116
    %p118 = scmp.ne.s32.totalorder %s110, %s112
    %p119 = scmp.eq.s32.totalorder %s18, 1
    %p120 = por %p118, %p119
    %p121 = scmp.ne.s32.totalorder %s112, %s113
    %p122 = scmp.eq.s32.totalorder %s18, 0
    %p123 = por %p121, %p122
    %p124 = scmp.ne.s32.totalorder %s112, %s113
    %p125 = scmp.eq.s32.totalorder %s19, 1
    %p126 = por %p124, %p125
    %p128 = scmp.ne.s32.totalorder %s113, %s127
    %p129 = scmp.eq.s32.totalorder %s19, 0
    %p130 = por %p128, %p129
    %s131 = ssub.s32 %s13, %s20
    %p132 = scmp.eq.s32.totalorder %s131, 0
    %s134 = sadd.s32 %s133, 1
    %s135 = scalar_select %p132, %s133, %s134
    %p138 = pneg %p132
    %p139 = scmp.eq.s32.totalorder %s13, 1
    %p140 = por %p138, %p139
    %p141 = scmp.ne.s32.totalorder %s133, %s136
    %p142 = scmp.eq.s32.totalorder %s13, 0
    %p143 = por %p141, %p142
    %p144 = scmp.ne.s32.totalorder %s133, %s136
    %p145 = scmp.eq.s32.totalorder %s18, 1
    %p146 = por %p144, %p145
    %p147 = scmp.ne.s32.totalorder %s136, %s137
    %p148 = scmp.eq.s32.totalorder %s18, 0
    %p149 = por %p147, %p148
    %p150 = scmp.ne.s32.totalorder %s136, %s137
    %p151 = scmp.eq.s32.totalorder %s19, 1
    %p152 = por %p150, %p151
    %p154 = scmp.ne.s32.totalorder %s137, %s153
    %p155 = scmp.eq.s32.totalorder %s19, 0
    %p156 = por %p154, %p155
    %s157 = ssub.s32 %s13, %s20
    %p158 = scmp.eq.s32.totalorder %s157, 0
    %s160 = sadd.s32 %s159, 1
    %s161 = scalar_select %p158, %s159, %s160
    %p164 = pneg %p158
    %p165 = scmp.eq.s32.totalorder %s13, 1
    %p166 = por %p164, %p165
    %p167 = scmp.ne.s32.totalorder %s159, %s162
    %p168 = scmp.eq.s32.totalorder %s13, 0
    %p169 = por %p167, %p168
    %p170 = scmp.ne.s32.totalorder %s159, %s162
    %p171 = scmp.eq.s32.totalorder %s18, 1
    %p172 = por %p170, %p171
    %p173 = scmp.ne.s32.totalorder %s162, %s163
    %p174 = scmp.eq.s32.totalorder %s18, 0
    %p175 = por %p173, %p174
    %p176 = scmp.ne.s32.totalorder %s162, %s163
    %p177 = scmp.eq.s32.totalorder %s19, 1
    %p178 = por %p176, %p177
    %p180 = scmp.ne.s32.totalorder %s163, %s179
    %p181 = scmp.eq.s32.totalorder %s19, 0
    %p182 = por %p180, %p181
    %p183 = scmp.le.s32.totalorder 1, %s13
    %p184 = scmp.lt.s32.totalorder %s13, 3
    %p185 = pnand %p183, %p184
    %p186 = pneg %p185
    // Predicated region
    $region9: #{residual_forward.8} parent=5 // pred_check
      _
    $region10: #{residual_forward.8} parent=5 // pred_check_branch
      %188 = sbr.rel (%p185) target = $region12
    $region11: #{residual_forward.8} parent=5 // pred_region
      %s189 = ssub.s32 %s13, 1
      // Predicated region
      $region13: #{residual_forward.8} parent=11 // pred_check
        %p190 = pneg %p60
      $region14: #{residual_forward.8} parent=11 // pred_check_branch
        %192 = sbr.rel (%p190) target = $region16
      $region15: #{residual_forward.8} parent=11 // pred_region
        _
      $region16: #{residual_forward.8} parent=11 // pred_fallthru
        _
      // Predicated region
      $region17: #{residual_forward.8} parent=11 // pred_check
        %p193 = pneg %p81
      $region18: #{residual_forward.8} parent=11 // pred_check_branch
        %195 = sbr.rel (%p193) target = $region20
      $region19: #{residual_forward.8} parent=11 // pred_region
        _
      $region20: #{residual_forward.8} parent=11 // pred_fallthru
        _
      // Predicated region
      $region21: #{residual_forward.8} parent=11 // pred_check
        %p196 = pneg %p102
      $region22: #{residual_forward.8} parent=11 // pred_check_branch
        %198 = sbr.rel (%p196) target = $region24
      $region23: #{residual_forward.8} parent=11 // pred_region
        _
      $region24: #{residual_forward.8} parent=11 // pred_fallthru
        _
      // Predicated region
      $region25: #{residual_forward.8} parent=11 // pred_check
        %p199 = pneg %p123
      $region26: #{residual_forward.8} parent=11 // pred_check_branch
        %201 = sbr.rel (%p199) target = $region28
      $region27: #{residual_forward.8} parent=11 // pred_region
        _
      $region28: #{residual_forward.8} parent=11 // pred_fallthru
        _
    $region12: #{residual_forward.8} parent=5 // pred_fallthru
      _
    %p202 = scmp.lt.s32.totalorder %s13, 2
    // Predicated region
    $region29: #{residual_forward.8} parent=5 // pred_check
      %p203 = pneg %p202
    $region30: #{residual_forward.8} parent=5 // pred_check_branch
      %205 = sbr.rel (%p203) target = $region32
    $region31: #{residual_forward.8} parent=5 // pred_region
      // Predicated region
      $region33: #{residual_forward.8} parent=31 // pred_check
        %p206 = pneg %p33
      $region34: #{residual_forward.8} parent=31 // pred_check_branch
        %208 = sbr.rel (%p206) target = $region36
      $region35: #{residual_forward.8} parent=31 // pred_region
        %p209 = scmp.lt.s32.totalorder %s13, 1
        %s210 = scalar_select %p209, %s13, 1
        %s211 = smul.addr %s210, 32
        %s212 = smul.addr %s211, 8
        %s213 = scalar_lea.vmem %s0, %s212
      $region36: #{residual_forward.8} parent=31 // pred_fallthru
        _
    $region32: #{residual_forward.8} parent=5 // pred_fallthru
      _
    %p214 = scmp.le.s32.totalorder 1, %s13
    %p215 = scmp.lt.s32.totalorder %s13, 3
    %p216 = pnand %p214, %p215
    %p217 = pneg %p216
    // Predicated region
    $region37: #{residual_forward.8} parent=5 // pred_check
      _
    $region38: #{residual_forward.8} parent=5 // pred_check_branch
      %219 = sbr.rel (%p216) target = $region40
    $region39: #{residual_forward.8} parent=5 // pred_region
      %s220 = ssub.s32 %s13, 1
      %p221 = scmp.lt.s32.totalorder %s18, 1
      %s222 = scalar_select %p221, %s18, 1
      %s223 = smul.addr %s222, 32
      %s224 = smul.addr %s223, 8
      %s225 = scalar_lea.vmem %s0, %s224
      %p226 = pneg %p39
      %p227 = pneg %p36
      %p228 = pneg %p60
      %p229 = pneg %p57
      %p230 = pneg %p81
      %p231 = pneg %p78
      %p232 = pneg %p102
      %p233 = pneg %p99
      %p234 = pneg %p123
      %p235 = pneg %p120
      %p236 = pneg %p149
      %p237 = pneg %p146
      %p238 = scmp.lt.s32.totalorder %s18, 1
      %s239 = scalar_select %p238, %s18, 1
      %s240 = smul.addr %s239, 32
      %s241 = smul.addr %s240, 8
      %s242 = scalar_lea.vmem %s5, %s241
      %p243 = pneg %p175
      %p244 = pneg %p172
      %p245 = scmp.lt.s32.totalorder %s18, 1
      %s246 = scalar_select %p245, %s18, 1
      %s247 = smul.addr %s246, 2
      %s248 = scalar_lea.vmem %s6, %s247
      %p249 = scmp.lt.s32.totalorder %s18, 1
      %s250 = scalar_select %p249, %s18, 1
      %s251 = smul.addr %s250, 32
      %s252 = smul.addr %s251, 8
      %s253 = scalar_lea.vmem %s0, %s252
      %p254 = scmp.lt.s32.totalorder %s18, 1
      %s255 = scalar_select %p254, %s18, 1
      %s256 = smul.addr %s255, 32
      %s257 = smul.addr %s256, 8
      %s258 = scalar_lea.vmem %s5, %s257
      %p259 = scmp.lt.s32.totalorder %s18, 1
      %s260 = scalar_select %p259, %s18, 1
      %s261 = smul.addr %s260, 2
      %s262 = scalar_lea.vmem %s6, %s261
      %v263 = vld [vmem:[%s253] sm:$0xff]
      %v264 = vld [vmem:[%s253 + $0x8] sm:$0xff]
      %v265 = vld [vmem:[%s253 + $0x10] sm:$0xff]
      %v266 = vld [vmem:[%s253 + $0x18] sm:$0xff]
      %v267 = vld [vmem:[%s253 + $0x20] sm:$0xff]
      %v268 = vld [vmem:[%s253 + $0x28] sm:$0xff]
      %v269 = vld [vmem:[%s253 + $0x30] sm:$0xff]
      %v270 = vld [vmem:[%s253 + $0x38] sm:$0xff]
      %v271 = vld [vmem:[%s253 + $0x40] sm:$0xff]
      %v272 = vld [vmem:[%s253 + $0x48] sm:$0xff]
      %v273 = vld [vmem:[%s253 + $0x50] sm:$0xff]
      %v274 = vld [vmem:[%s253 + $0x58] sm:$0xff]
      %v275 = vld [vmem:[%s253 + $0x60] sm:$0xff]
      %v276 = vld [vmem:[%s253 + $0x68] sm:$0xff]
      %v277 = vld [vmem:[%s253 + $0x70] sm:$0xff]
      %v278 = vld [vmem:[%s253 + $0x78] sm:$0xff]
      %v279 = vld [vmem:[%s253 + $0x80] sm:$0xff]
      %v280 = vld [vmem:[%s253 + $0x88] sm:$0xff]
      %v281 = vld [vmem:[%s253 + $0x90] sm:$0xff]
      %v282 = vld [vmem:[%s253 + $0x98] sm:$0xff]
      %v283 = vld [vmem:[%s253 + $0xa0] sm:$0xff]
      %v284 = vld [vmem:[%s253 + $0xa8] sm:$0xff]
      %v285 = vld [vmem:[%s253 + $0xb0] sm:$0xff]
      %v286 = vld [vmem:[%s253 + $0xb8] sm:$0xff]
      %v287 = vld [vmem:[%s253 + $0xc0] sm:$0xff]
      %v288 = vld [vmem:[%s253 + $0xc8] sm:$0xff]
      %v289 = vld [vmem:[%s253 + $0xd0] sm:$0xff]
      %v290 = vld [vmem:[%s253 + $0xd8] sm:$0xff]
      %v291 = vld [vmem:[%s253 + $0xe0] sm:$0xff]
      %v292 = vld [vmem:[%s253 + $0xe8] sm:$0xff]
      %v293 = vld [vmem:[%s253 + $0xf0] sm:$0xff]
      %v294 = vld [vmem:[%s253 + $0xf8] sm:$0xff]
      %v295 = vld [vmem:[%s1] sm:$0x1]
      %v297 = vlaneseq
      %v298 = vshrl.u32 %v297, 7
      %v299 = vsub.s32 0, %v298
      %v300 = vrot.slane %v295, %v299
      %v302 = vmul.f32 %v263, %v300
      %v303 = vmul.f32 %v264, %v300
      %v304 = vmul.f32 %v265, %v300
      %v305 = vmul.f32 %v266, %v300
      %v306 = vmul.f32 %v267, %v300
      %v307 = vmul.f32 %v268, %v300
      %v308 = vmul.f32 %v269, %v300
      %v309 = vmul.f32 %v270, %v300
      %v310 = vmul.f32 %v271, %v300
      %v311 = vmul.f32 %v272, %v300
      %v312 = vmul.f32 %v273, %v300
      %v313 = vmul.f32 %v274, %v300
      %v314 = vmul.f32 %v275, %v300
      %v315 = vmul.f32 %v276, %v300
      %v316 = vmul.f32 %v277, %v300
      %v317 = vmul.f32 %v278, %v300
      %v318 = vmul.f32 %v279, %v300
      %v319 = vmul.f32 %v280, %v300
      %v320 = vmul.f32 %v281, %v300
      %v321 = vmul.f32 %v282, %v300
      %v322 = vmul.f32 %v283, %v300
      %v323 = vmul.f32 %v284, %v300
      %v324 = vmul.f32 %v285, %v300
      %v325 = vmul.f32 %v286, %v300
      %v326 = vmul.f32 %v287, %v300
      %v327 = vmul.f32 %v288, %v300
      %v328 = vmul.f32 %v289, %v300
      %v329 = vmul.f32 %v290, %v300
      %v330 = vmul.f32 %v291, %v300
      %v331 = vmul.f32 %v292, %v300
      %v332 = vmul.f32 %v293, %v300
      %v333 = vmul.f32 %v294, %v300
      %v334 = vld [vmem:[%s2] sm:$0x1]
      %v336 = vlaneseq
      %v337 = vshrl.u32 %v336, 7
      %v338 = vsub.s32 0, %v337
      %v339 = vrot.slane %v334, %v338
      %v341 = vadd.f32 %v302, %v339
      %v342 = vadd.f32 %v303, %v339
      %v343 = vadd.f32 %v304, %v339
      %v344 = vadd.f32 %v305, %v339
      %v345 = vadd.f32 %v306, %v339
      %v346 = vadd.f32 %v307, %v339
      %v347 = vadd.f32 %v308, %v339
      %v348 = vadd.f32 %v309, %v339
      %v349 = vadd.f32 %v310, %v339
      %v350 = vadd.f32 %v311, %v339
      %v351 = vadd.f32 %v312, %v339
      %v352 = vadd.f32 %v313, %v339
      %v353 = vadd.f32 %v314, %v339
      %v354 = vadd.f32 %v315, %v339
      %v355 = vadd.f32 %v316, %v339
      %v356 = vadd.f32 %v317, %v339
      %v357 = vadd.f32 %v318, %v339
      %v358 = vadd.f32 %v319, %v339
      %v359 = vadd.f32 %v320, %v339
      %v360 = vadd.f32 %v321, %v339
      %v361 = vadd.f32 %v322, %v339
      %v362 = vadd.f32 %v323, %v339
      %v363 = vadd.f32 %v324, %v339
      %v364 = vadd.f32 %v325, %v339
      %v365 = vadd.f32 %v326, %v339
      %v366 = vadd.f32 %v327, %v339
      %v367 = vadd.f32 %v328, %v339
      %v368 = vadd.f32 %v329, %v339
      %v369 = vadd.f32 %v330, %v339
      %v370 = vadd.f32 %v331, %v339
      %v371 = vadd.f32 %v332, %v339
      %v372 = vadd.f32 %v333, %v339
      %vm373 = vcmp.ge.f32.partialorder %v341, 0.0
      %vm374 = vcmp.ge.f32.partialorder %v342, 0.0
      %vm375 = vcmp.ge.f32.partialorder %v343, 0.0
      %vm376 = vcmp.ge.f32.partialorder %v344, 0.0
      %vm377 = vcmp.ge.f32.partialorder %v345, 0.0
      %vm378 = vcmp.ge.f32.partialorder %v346, 0.0
      %vm379 = vcmp.ge.f32.partialorder %v347, 0.0
      %vm380 = vcmp.ge.f32.partialorder %v348, 0.0
      %vm381 = vcmp.ge.f32.partialorder %v349, 0.0
      %vm382 = vcmp.ge.f32.partialorder %v350, 0.0
      %vm383 = vcmp.ge.f32.partialorder %v351, 0.0
      %vm384 = vcmp.ge.f32.partialorder %v352, 0.0
      %vm385 = vcmp.ge.f32.partialorder %v353, 0.0
      %vm386 = vcmp.ge.f32.partialorder %v354, 0.0
      %vm387 = vcmp.ge.f32.partialorder %v355, 0.0
      %vm388 = vcmp.ge.f32.partialorder %v356, 0.0
      %vm389 = vcmp.ge.f32.partialorder %v357, 0.0
      %vm390 = vcmp.ge.f32.partialorder %v358, 0.0
      %vm391 = vcmp.ge.f32.partialorder %v359, 0.0
      %vm392 = vcmp.ge.f32.partialorder %v360, 0.0
      %vm393 = vcmp.ge.f32.partialorder %v361, 0.0
      %vm394 = vcmp.ge.f32.partialorder %v362, 0.0
      %vm395 = vcmp.ge.f32.partialorder %v363, 0.0
      %vm396 = vcmp.ge.f32.partialorder %v364, 0.0
      %vm397 = vcmp.ge.f32.partialorder %v365, 0.0
      %vm398 = vcmp.ge.f32.partialorder %v366, 0.0
      %vm399 = vcmp.ge.f32.partialorder %v367, 0.0
      %vm400 = vcmp.ge.f32.partialorder %v368, 0.0
      %vm401 = vcmp.ge.f32.partialorder %v369, 0.0
      %vm402 = vcmp.ge.f32.partialorder %v370, 0.0
      %vm403 = vcmp.ge.f32.partialorder %v371, 0.0
      %vm404 = vcmp.ge.f32.partialorder %v372, 0.0
      %v405 = vld [vmem:[%s3] sm:$0x1]
      %v407 = vlaneseq
      %v408 = vshrl.u32 %v407, 7
      %v409 = vsub.s32 0, %v408
      %v410 = vrot.slane %v405, %v409
      %v412 = vmul.f32 %v410, %v341
      %v413 = vmul.f32 %v410, %v342
      %v414 = vmul.f32 %v410, %v343
      %v415 = vmul.f32 %v410, %v344
      %v416 = vmul.f32 %v410, %v345
      %v417 = vmul.f32 %v410, %v346
      %v418 = vmul.f32 %v410, %v347
      %v419 = vmul.f32 %v410, %v348
      %v420 = vmul.f32 %v410, %v349
      %v421 = vmul.f32 %v410, %v350
      %v422 = vmul.f32 %v410, %v351
      %v423 = vmul.f32 %v410, %v352
      %v424 = vmul.f32 %v410, %v353
      %v425 = vmul.f32 %v410, %v354
      %v426 = vmul.f32 %v410, %v355
      %v427 = vmul.f32 %v410, %v356
      %v428 = vmul.f32 %v410, %v357
      %v429 = vmul.f32 %v410, %v358
      %v430 = vmul.f32 %v410, %v359
      %v431 = vmul.f32 %v410, %v360
      %v432 = vmul.f32 %v410, %v361
      %v433 = vmul.f32 %v410, %v362
      %v434 = vmul.f32 %v410, %v363
      %v435 = vmul.f32 %v410, %v364
      %v436 = vmul.f32 %v410, %v365
      %v437 = vmul.f32 %v410, %v366
      %v438 = vmul.f32 %v410, %v367
      %v439 = vmul.f32 %v410, %v368
      %v440 = vmul.f32 %v410, %v369
      %v441 = vmul.f32 %v410, %v370
      %v442 = vmul.f32 %v410, %v371
      %v443 = vmul.f32 %v410, %v372
      %v444 = vsel %vm373, %v341, %v412
      %v445 = vsel %vm374, %v342, %v413
      %v446 = vsel %vm375, %v343, %v414
      %v447 = vsel %vm376, %v344, %v415
      %v448 = vsel %vm377, %v345, %v416
      %v449 = vsel %vm378, %v346, %v417
      %v450 = vsel %vm379, %v347, %v418
      %v451 = vsel %vm380, %v348, %v419
      %v452 = vsel %vm381, %v349, %v420
      %v453 = vsel %vm382, %v350, %v421
      %v454 = vsel %vm383, %v351, %v422
      %v455 = vsel %vm384, %v352, %v423
      %v456 = vsel %vm385, %v353, %v424
      %v457 = vsel %vm386, %v354, %v425
      %v458 = vsel %vm387, %v355, %v426
      %v459 = vsel %vm388, %v356, %v427
      %v460 = vsel %vm389, %v357, %v428
      %v461 = vsel %vm390, %v358, %v429
      %v462 = vsel %vm391, %v359, %v430
      %v463 = vsel %vm392, %v360, %v431
      %v464 = vsel %vm393, %v361, %v432
      %v465 = vsel %vm394, %v362, %v433
      %v466 = vsel %vm395, %v363, %v434
      %v467 = vsel %vm396, %v364, %v435
      %v468 = vsel %vm397, %v365, %v436
      %v469 = vsel %vm398, %v366, %v437
      %v470 = vsel %vm399, %v367, %v438
      %v471 = vsel %vm400, %v368, %v439
      %v472 = vsel %vm401, %v369, %v440
      %v473 = vsel %vm402, %v370, %v441
      %v474 = vsel %vm403, %v371, %v442
      %v475 = vsel %vm404, %v372, %v443
      %476 = vst [vmem:[#allocation2] sm:$0xff] 0.0
      %477 = vst [vmem:[#allocation2 + $0x8] sm:$0xff] 0.0
      %478 = vst [vmem:[#allocation2 + $0x10] sm:$0x3] 0.0
      %s479 = scalar_lea.vmem [#allocation2], 408
      %480 = vst [vmem:[%s479] sm:$0xff] 0.0
      %481 = vst [vmem:[%s479 + $0x8] sm:$0xff] 0.0
      %482 = vst [vmem:[%s479 + $0x10] sm:$0x3] 0.0
      %483 = vst [vmem:[#allocation2] sm:$0x1] 0.0
      %484 = vst [vmem:[#allocation2 + $0x18] sm:$0x1] 0.0
      %485 = vst [vmem:[#allocation2 + $0x30] sm:$0x1] 0.0
      %486 = vst [vmem:[#allocation2 + $0x48] sm:$0x1] 0.0
      %487 = vst [vmem:[#allocation2 + $0x60] sm:$0x1] 0.0
      %488 = vst [vmem:[#allocation2 + $0x78] sm:$0x1] 0.0
      %489 = vst [vmem:[#allocation2 + $0x90] sm:$0x1] 0.0
      %490 = vst [vmem:[#allocation2 + $0xa8] sm:$0x1] 0.0
      %491 = vst [vmem:[#allocation2 + $0xc0] sm:$0x1] 0.0
      %492 = vst [vmem:[#allocation2 + $0xd8] sm:$0x1] 0.0
      %493 = vst [vmem:[#allocation2 + $0xf0] sm:$0x1] 0.0
      %494 = vst [vmem:[#allocation2 + $0x108] sm:$0x1] 0.0
      %495 = vst [vmem:[#allocation2 + $0x120] sm:$0x1] 0.0
      %496 = vst [vmem:[#allocation2 + $0x138] sm:$0x1] 0.0
      %497 = vst [vmem:[#allocation2 + $0x150] sm:$0x1] 0.0
      %498 = vst [vmem:[#allocation2 + $0x168] sm:$0x1] 0.0
      %499 = vst [vmem:[#allocation2 + $0x180] sm:$0x1] 0.0
      %500 = vst [vmem:[#allocation2 + $0x198] sm:$0x1] 0.0
      %501 = vst [vmem:[#allocation2 + $0x11] sm:$0x1] 0.0
      %502 = vst [vmem:[#allocation2 + $0x29] sm:$0x1] 0.0
      %503 = vst [vmem:[#allocation2 + $0x41] sm:$0x1] 0.0
      %504 = vst [vmem:[#allocation2 + $0x59] sm:$0x1] 0.0
      %505 = vst [vmem:[#allocation2 + $0x71] sm:$0x1] 0.0
      %506 = vst [vmem:[#allocation2 + $0x89] sm:$0x1] 0.0
      %507 = vst [vmem:[#allocation2 + $0xa1] sm:$0x1] 0.0
      %508 = vst [vmem:[#allocation2 + $0xb9] sm:$0x1] 0.0
      %509 = vst [vmem:[#allocation2 + $0xd1] sm:$0x1] 0.0
      %510 = vst [vmem:[#allocation2 + $0xe9] sm:$0x1] 0.0
      %511 = vst [vmem:[#allocation2 + $0x101] sm:$0x1] 0.0
      %512 = vst [vmem:[#allocation2 + $0x119] sm:$0x1] 0.0
      %513 = vst [vmem:[#allocation2 + $0x131] sm:$0x1] 0.0
      %514 = vst [vmem:[#allocation2 + $0x149] sm:$0x1] 0.0
      %515 = vst [vmem:[#allocation2 + $0x161] sm:$0x1] 0.0
      %516 = vst [vmem:[#allocation2 + $0x179] sm:$0x1] 0.0
      %517 = vst [vmem:[#allocation2 + $0x191] sm:$0x1] 0.0
      %518 = vst [vmem:[#allocation2 + $0x1a9] sm:$0x1] 0.0
      %s519 = scalar_lea.vmem [#allocation2], 24
      %520 = vst [vmem:[%s519 + $0x1] sm:$0xff] %v444
      %521 = vst [vmem:[%s519 + $0x9] sm:$0xff] %v445
      %522 = vst [vmem:[%s519 + $0x19] sm:$0xff] %v446
      %523 = vst [vmem:[%s519 + $0x21] sm:$0xff] %v447
      %524 = vst [vmem:[%s519 + $0x31] sm:$0xff] %v448
      %525 = vst [vmem:[%s519 + $0x39] sm:$0xff] %v449
      %526 = vst [vmem:[%s519 + $0x49] sm:$0xff] %v450
      %527 = vst [vmem:[%s519 + $0x51] sm:$0xff] %v451
      %528 = vst [vmem:[%s519 + $0x61] sm:$0xff] %v452
      %529 = vst [vmem:[%s519 + $0x69] sm:$0xff] %v453
      %530 = vst [vmem:[%s519 + $0x79] sm:$0xff] %v454
      %531 = vst [vmem:[%s519 + $0x81] sm:$0xff] %v455
      %532 = vst [vmem:[%s519 + $0x91] sm:$0xff] %v456
      %533 = vst [vmem:[%s519 + $0x99] sm:$0xff] %v457
      %534 = vst [vmem:[%s519 + $0xa9] sm:$0xff] %v458
      %535 = vst [vmem:[%s519 + $0xb1] sm:$0xff] %v459
      %536 = vst [vmem:[%s519 + $0xc1] sm:$0xff] %v460
      %537 = vst [vmem:[%s519 + $0xc9] sm:$0xff] %v461
      %538 = vst [vmem:[%s519 + $0xd9] sm:$0xff] %v462
      %539 = vst [vmem:[%s519 + $0xe1] sm:$0xff] %v463
      %540 = vst [vmem:[%s519 + $0xf1] sm:$0xff] %v464
      %541 = vst [vmem:[%s519 + $0xf9] sm:$0xff] %v465
      %542 = vst [vmem:[%s519 + $0x109] sm:$0xff] %v466
      %543 = vst [vmem:[%s519 + $0x111] sm:$0xff] %v467
      %544 = vst [vmem:[%s519 + $0x121] sm:$0xff] %v468
      %545 = vst [vmem:[%s519 + $0x129] sm:$0xff] %v469
      %546 = vst [vmem:[%s519 + $0x139] sm:$0xff] %v470
      %547 = vst [vmem:[%s519 + $0x141] sm:$0xff] %v471
      %548 = vst [vmem:[%s519 + $0x151] sm:$0xff] %v472
      %549 = vst [vmem:[%s519 + $0x159] sm:$0xff] %v473
      %550 = vst [vmem:[%s519 + $0x169] sm:$0xff] %v474
      %551 = vst [vmem:[%s519 + $0x171] sm:$0xff] %v475
      %v552 = vld [vmem:[%s4] sm:$0xff]
      %v553 = vld [vmem:[%s4 + $0x8] sm:$0x1]
      loop: start=0, step=1, limit=2
      $region41: #{residual_forward.8} parent=39 // loop_pre_header
        _
      $region42: #{residual_forward.8} parent=39 // loop_header
        %s555 = sphi 0, %s559
        %p556 = scmp.ge.s32.totalorder %s555, 2
        %v560 = vphi 0.0, %v1078
        %v561 = vphi 0.0, %v1116
      $region43: #{residual_forward.8} parent=39 // loop_header_branch
        %558 = sbr.rel (%p556) target = $region47
      $region44: #{residual_forward.8} parent=39 // loop_body
        %s562 = smul.u32 %s555, 8
        %s563 = smul.u32 %s562, 24
        %s564 = scalar_lea.vmem [#allocation2], %s563
        %v565 = vld [vmem:[%s564] sm:$0xff]
        %v566 = vld [vmem:[%s564 + $0x8] sm:$0xff]
        %v567 = vld [vmem:[%s564 + $0x18] sm:$0xff]
        %v568 = vld [vmem:[%s564 + $0x20] sm:$0xff]
        %v569 = vld [vmem:[%s564 + $0x30] sm:$0xff]
        %v570 = vld [vmem:[%s564 + $0x38] sm:$0xff]
        %v571 = vld [vmem:[%s564 + $0x48] sm:$0xff]
        %v572 = vld [vmem:[%s564 + $0x50] sm:$0xff]
        %v573 = vld [vmem:[%s564 + $0x60] sm:$0xff]
        %v574 = vld [vmem:[%s564 + $0x68] sm:$0xff]
        %v575 = vld [vmem:[%s564 + $0x78] sm:$0xff]
        %v576 = vld [vmem:[%s564 + $0x80] sm:$0xff]
        %v577 = vld [vmem:[%s564 + $0x90] sm:$0xff]
        %v578 = vld [vmem:[%s564 + $0x98] sm:$0xff]
        %v579 = vld [vmem:[%s564 + $0xa8] sm:$0xff]
        %v580 = vld [vmem:[%s564 + $0xb0] sm:$0xff]
        %v581 = vlaneseq
        %v582 = vshrl.u32 %v581, 7
        %v583 = vsub.s32 0, %v582
        %v584 = vrot.slane %v552, %v583
        %v585 = vmul.f32 %v565, %v584
        %v586 = vmul.f32 %v566, %v584
        %v587 = vmul.f32 %v567, %v584
        %v588 = vmul.f32 %v568, %v584
        %v589 = vmul.f32 %v569, %v584
        %v590 = vmul.f32 %v570, %v584
        %v591 = vmul.f32 %v571, %v584
        %v592 = vmul.f32 %v572, %v584
        %v593 = vmul.f32 %v573, %v584
        %v594 = vmul.f32 %v574, %v584
        %v595 = vmul.f32 %v575, %v584
        %v596 = vmul.f32 %v576, %v584
        %v597 = vmul.f32 %v577, %v584
        %v598 = vmul.f32 %v578, %v584
        %v599 = vmul.f32 %v579, %v584
        %v600 = vmul.f32 %v580, %v584
        %v601 = vadd.f32 %v585, 0.0
        %v602 = vadd.f32 %v586, 0.0
        %v603 = vadd.f32 %v587, 0.0
        %v604 = vadd.f32 %v588, 0.0
        %v605 = vadd.f32 %v589, 0.0
        %v606 = vadd.f32 %v590, 0.0
        %v607 = vadd.f32 %v591, 0.0
        %v608 = vadd.f32 %v592, 0.0
        %v609 = vadd.f32 %v593, 0.0
        %v610 = vadd.f32 %v594, 0.0
        %v611 = vadd.f32 %v595, 0.0
        %v612 = vadd.f32 %v596, 0.0
        %v613 = vadd.f32 %v597, 0.0
        %v614 = vadd.f32 %v598, 0.0
        %v615 = vadd.f32 %v599, 0.0
        %v616 = vadd.f32 %v600, 0.0
        %v617 = vld [vmem:[%s564 + $0x1] sm:$0xff]
        %v618 = vld [vmem:[%s564 + $0x9] sm:$0xff]
        %v619 = vld [vmem:[%s564 + $0x19] sm:$0xff]
        %v620 = vld [vmem:[%s564 + $0x21] sm:$0xff]
        %v621 = vld [vmem:[%s564 + $0x31] sm:$0xff]
        %v622 = vld [vmem:[%s564 + $0x39] sm:$0xff]
        %v623 = vld [vmem:[%s564 + $0x49] sm:$0xff]
        %v624 = vld [vmem:[%s564 + $0x51] sm:$0xff]
        %v625 = vld [vmem:[%s564 + $0x61] sm:$0xff]
        %v626 = vld [vmem:[%s564 + $0x69] sm:$0xff]
        %v627 = vld [vmem:[%s564 + $0x79] sm:$0xff]
        %v628 = vld [vmem:[%s564 + $0x81] sm:$0xff]
        %v629 = vld [vmem:[%s564 + $0x91] sm:$0xff]
        %v630 = vld [vmem:[%s564 + $0x99] sm:$0xff]
        %v631 = vld [vmem:[%s564 + $0xa9] sm:$0xff]
        %v632 = vld [vmem:[%s564 + $0xb1] sm:$0xff]
        %v633 = vlaneseq
        %v634 = vshrl.u32 %v633, 7
        %v635 = vsub.s32 1, %v634
        %v636 = vrot.slane %v552, %v635
        %v637 = vmul.f32 %v617, %v636
        %v638 = vmul.f32 %v618, %v636
        %v639 = vmul.f32 %v619, %v636
        %v640 = vmul.f32 %v620, %v636
        %v641 = vmul.f32 %v621, %v636
        %v642 = vmul.f32 %v622, %v636
        %v643 = vmul.f32 %v623, %v636
        %v644 = vmul.f32 %v624, %v636
        %v645 = vmul.f32 %v625, %v636
        %v646 = vmul.f32 %v626, %v636
        %v647 = vmul.f32 %v627, %v636
        %v648 = vmul.f32 %v628, %v636
        %v649 = vmul.f32 %v629, %v636
        %v650 = vmul.f32 %v630, %v636
        %v651 = vmul.f32 %v631, %v636
        %v652 = vmul.f32 %v632, %v636
        %v653 = vadd.f32 %v601, %v637
        %v654 = vadd.f32 %v602, %v638
        %v655 = vadd.f32 %v603, %v639
        %v656 = vadd.f32 %v604, %v640
        %v657 = vadd.f32 %v605, %v641
        %v658 = vadd.f32 %v606, %v642
        %v659 = vadd.f32 %v607, %v643
        %v660 = vadd.f32 %v608, %v644
        %v661 = vadd.f32 %v609, %v645
        %v662 = vadd.f32 %v610, %v646
        %v663 = vadd.f32 %v611, %v647
        %v664 = vadd.f32 %v612, %v648
        %v665 = vadd.f32 %v613, %v649
        %v666 = vadd.f32 %v614, %v650
        %v667 = vadd.f32 %v615, %v651
        %v668 = vadd.f32 %v616, %v652
        %v669 = vld [vmem:[%s564 + $0x2] sm:$0xff]
        %v670 = vld [vmem:[%s564 + $0xa] sm:$0xff]
        %v671 = vld [vmem:[%s564 + $0x1a] sm:$0xff]
        %v672 = vld [vmem:[%s564 + $0x22] sm:$0xff]
        %v673 = vld [vmem:[%s564 + $0x32] sm:$0xff]
        %v674 = vld [vmem:[%s564 + $0x3a] sm:$0xff]
        %v675 = vld [vmem:[%s564 + $0x4a] sm:$0xff]
        %v676 = vld [vmem:[%s564 + $0x52] sm:$0xff]
        %v677 = vld [vmem:[%s564 + $0x62] sm:$0xff]
        %v678 = vld [vmem:[%s564 + $0x6a] sm:$0xff]
        %v679 = vld [vmem:[%s564 + $0x7a] sm:$0xff]
        %v680 = vld [vmem:[%s564 + $0x82] sm:$0xff]
        %v681 = vld [vmem:[%s564 + $0x92] sm:$0xff]
        %v682 = vld [vmem:[%s564 + $0x9a] sm:$0xff]
        %v683 = vld [vmem:[%s564 + $0xaa] sm:$0xff]
        %v684 = vld [vmem:[%s564 + $0xb2] sm:$0xff]
        %v685 = vlaneseq
        %v686 = vshrl.u32 %v685, 7
        %v687 = vsub.s32 2, %v686
        %v688 = vrot.slane %v552, %v687
        %v689 = vmul.f32 %v669, %v688
        %v690 = vmul.f32 %v670, %v688
        %v691 = vmul.f32 %v671, %v688
        %v692 = vmul.f32 %v672, %v688
        %v693 = vmul.f32 %v673, %v688
        %v694 = vmul.f32 %v674, %v688
        %v695 = vmul.f32 %v675, %v688
        %v696 = vmul.f32 %v676, %v688
        %v697 = vmul.f32 %v677, %v688
        %v698 = vmul.f32 %v678, %v688
        %v699 = vmul.f32 %v679, %v688
        %v700 = vmul.f32 %v680, %v688
        %v701 = vmul.f32 %v681, %v688
        %v702 = vmul.f32 %v682, %v688
        %v703 = vmul.f32 %v683, %v688
        %v704 = vmul.f32 %v684, %v688
        %v705 = vadd.f32 %v653, %v689
        %v706 = vadd.f32 %v654, %v690
        %v707 = vadd.f32 %v655, %v691
        %v708 = vadd.f32 %v656, %v692
        %v709 = vadd.f32 %v657, %v693
        %v710 = vadd.f32 %v658, %v694
        %v711 = vadd.f32 %v659, %v695
        %v712 = vadd.f32 %v660, %v696
        %v713 = vadd.f32 %v661, %v697
        %v714 = vadd.f32 %v662, %v698
        %v715 = vadd.f32 %v663, %v699
        %v716 = vadd.f32 %v664, %v700
        %v717 = vadd.f32 %v665, %v701
        %v718 = vadd.f32 %v666, %v702
        %v719 = vadd.f32 %v667, %v703
        %v720 = vadd.f32 %v668, %v704
        %s721 = sadd.s32 %s562, 1
        %s722 = smul.u32 %s721, 24
        %s723 = scalar_lea.vmem [#allocation2], %s722
        %v724 = vld [vmem:[%s723] sm:$0xff]
        %v725 = vld [vmem:[%s723 + $0x8] sm:$0xff]
        %v726 = vld [vmem:[%s723 + $0x18] sm:$0xff]
        %v727 = vld [vmem:[%s723 + $0x20] sm:$0xff]
        %v728 = vld [vmem:[%s723 + $0x30] sm:$0xff]
        %v729 = vld [vmem:[%s723 + $0x38] sm:$0xff]
        %v730 = vld [vmem:[%s723 + $0x48] sm:$0xff]
        %v731 = vld [vmem:[%s723 + $0x50] sm:$0xff]
        %v732 = vld [vmem:[%s723 + $0x60] sm:$0xff]
        %v733 = vld [vmem:[%s723 + $0x68] sm:$0xff]
        %v734 = vld [vmem:[%s723 + $0x78] sm:$0xff]
        %v735 = vld [vmem:[%s723 + $0x80] sm:$0xff]
        %v736 = vld [vmem:[%s723 + $0x90] sm:$0xff]
        %v737 = vld [vmem:[%s723 + $0x98] sm:$0xff]
        %v738 = vld [vmem:[%s723 + $0xa8] sm:$0xff]
        %v739 = vld [vmem:[%s723 + $0xb0] sm:$0xff]
        %v740 = vlaneseq
        %v741 = vshrl.u32 %v740, 7
        %v742 = vsub.s32 3, %v741
        %v743 = vrot.slane %v552, %v742
        %v744 = vmul.f32 %v724, %v743
        %v745 = vmul.f32 %v725, %v743
        %v746 = vmul.f32 %v726, %v743
        %v747 = vmul.f32 %v727, %v743
        %v748 = vmul.f32 %v728, %v743
        %v749 = vmul.f32 %v729, %v743
        %v750 = vmul.f32 %v730, %v743
        %v751 = vmul.f32 %v731, %v743
        %v752 = vmul.f32 %v732, %v743
        %v753 = vmul.f32 %v733, %v743
        %v754 = vmul.f32 %v734, %v743
        %v755 = vmul.f32 %v735, %v743
        %v756 = vmul.f32 %v736, %v743
        %v757 = vmul.f32 %v737, %v743
        %v758 = vmul.f32 %v738, %v743
        %v759 = vmul.f32 %v739, %v743
        %v760 = vadd.f32 %v705, %v744
        %v761 = vadd.f32 %v706, %v745
        %v762 = vadd.f32 %v707, %v746
        %v763 = vadd.f32 %v708, %v747
        %v764 = vadd.f32 %v709, %v748
        %v765 = vadd.f32 %v710, %v749
        %v766 = vadd.f32 %v711, %v750
        %v767 = vadd.f32 %v712, %v751
        %v768 = vadd.f32 %v713, %v752
        %v769 = vadd.f32 %v714, %v753
        %v770 = vadd.f32 %v715, %v754
        %v771 = vadd.f32 %v716, %v755
        %v772 = vadd.f32 %v717, %v756
        %v773 = vadd.f32 %v718, %v757
        %v774 = vadd.f32 %v719, %v758
        %v775 = vadd.f32 %v720, %v759
        %v776 = vld [vmem:[%s723 + $0x1] sm:$0xff]
        %v777 = vld [vmem:[%s723 + $0x9] sm:$0xff]
        %v778 = vld [vmem:[%s723 + $0x19] sm:$0xff]
        %v779 = vld [vmem:[%s723 + $0x21] sm:$0xff]
        %v780 = vld [vmem:[%s723 + $0x31] sm:$0xff]
        %v781 = vld [vmem:[%s723 + $0x39] sm:$0xff]
        %v782 = vld [vmem:[%s723 + $0x49] sm:$0xff]
        %v783 = vld [vmem:[%s723 + $0x51] sm:$0xff]
        %v784 = vld [vmem:[%s723 + $0x61] sm:$0xff]
        %v785 = vld [vmem:[%s723 + $0x69] sm:$0xff]
        %v786 = vld [vmem:[%s723 + $0x79] sm:$0xff]
        %v787 = vld [vmem:[%s723 + $0x81] sm:$0xff]
        %v788 = vld [vmem:[%s723 + $0x91] sm:$0xff]
        %v789 = vld [vmem:[%s723 + $0x99] sm:$0xff]
        %v790 = vld [vmem:[%s723 + $0xa9] sm:$0xff]
        %v791 = vld [vmem:[%s723 + $0xb1] sm:$0xff]
        %v792 = vlaneseq
        %v793 = vshrl.u32 %v792, 7
        %v794 = vsub.s32 4, %v793
        %v795 = vrot.slane %v552, %v794
        %v796 = vmul.f32 %v776, %v795
        %v797 = vmul.f32 %v777, %v795
        %v798 = vmul.f32 %v778, %v795
        %v799 = vmul.f32 %v779, %v795
        %v800 = vmul.f32 %v780, %v795
        %v801 = vmul.f32 %v781, %v795
        %v802 = vmul.f32 %v782, %v795
        %v803 = vmul.f32 %v783, %v795
        %v804 = vmul.f32 %v784, %v795
        %v805 = vmul.f32 %v785, %v795
        %v806 = vmul.f32 %v786, %v795
        %v807 = vmul.f32 %v787, %v795
        %v808 = vmul.f32 %v788, %v795
        %v809 = vmul.f32 %v789, %v795
        %v810 = vmul.f32 %v790, %v795
        %v811 = vmul.f32 %v791, %v795
        %v812 = vadd.f32 %v760, %v796
        %v813 = vadd.f32 %v761, %v797
        %v814 = vadd.f32 %v762, %v798
        %v815 = vadd.f32 %v763, %v799
        %v816 = vadd.f32 %v764, %v800
        %v817 = vadd.f32 %v765, %v801
        %v818 = vadd.f32 %v766, %v802
        %v819 = vadd.f32 %v767, %v803
        %v820 = vadd.f32 %v768, %v804
        %v821 = vadd.f32 %v769, %v805
        %v822 = vadd.f32 %v770, %v806
        %v823 = vadd.f32 %v771, %v807
        %v824 = vadd.f32 %v772, %v808
        %v825 = vadd.f32 %v773, %v809
        %v826 = vadd.f32 %v774, %v810
        %v827 = vadd.f32 %v775, %v811
        %v828 = vld [vmem:[%s723 + $0x2] sm:$0xff]
        %v829 = vld [vmem:[%s723 + $0xa] sm:$0xff]
        %v830 = vld [vmem:[%s723 + $0x1a] sm:$0xff]
        %v831 = vld [vmem:[%s723 + $0x22] sm:$0xff]
        %v832 = vld [vmem:[%s723 + $0x32] sm:$0xff]
        %v833 = vld [vmem:[%s723 + $0x3a] sm:$0xff]
        %v834 = vld [vmem:[%s723 + $0x4a] sm:$0xff]
        %v835 = vld [vmem:[%s723 + $0x52] sm:$0xff]
        %v836 = vld [vmem:[%s723 + $0x62] sm:$0xff]
        %v837 = vld [vmem:[%s723 + $0x6a] sm:$0xff]
        %v838 = vld [vmem:[%s723 + $0x7a] sm:$0xff]
        %v839 = vld [vmem:[%s723 + $0x82] sm:$0xff]
        %v840 = vld [vmem:[%s723 + $0x92] sm:$0xff]
        %v841 = vld [vmem:[%s723 + $0x9a] sm:$0xff]
        %v842 = vld [vmem:[%s723 + $0xaa] sm:$0xff]
        %v843 = vld [vmem:[%s723 + $0xb2] sm:$0xff]
        %v844 = vlaneseq
        %v845 = vshrl.u32 %v844, 7
        %v846 = vsub.s32 5, %v845
        %v847 = vrot.slane %v552, %v846
        %v848 = vmul.f32 %v828, %v847
        %v849 = vmul.f32 %v829, %v847
        %v850 = vmul.f32 %v830, %v847
        %v851 = vmul.f32 %v831, %v847
        %v852 = vmul.f32 %v832, %v847
        %v853 = vmul.f32 %v833, %v847
        %v854 = vmul.f32 %v834, %v847
        %v855 = vmul.f32 %v835, %v847
        %v856 = vmul.f32 %v836, %v847
        %v857 = vmul.f32 %v837, %v847
        %v858 = vmul.f32 %v838, %v847
        %v859 = vmul.f32 %v839, %v847
        %v860 = vmul.f32 %v840, %v847
        %v861 = vmul.f32 %v841, %v847
        %v862 = vmul.f32 %v842, %v847
        %v863 = vmul.f32 %v843, %v847
        %v864 = vadd.f32 %v812, %v848
        %v865 = vadd.f32 %v813, %v849
        %v866 = vadd.f32 %v814, %v850
        %v867 = vadd.f32 %v815, %v851
        %v868 = vadd.f32 %v816, %v852
        %v869 = vadd.f32 %v817, %v853
        %v870 = vadd.f32 %v818, %v854
        %v871 = vadd.f32 %v819, %v855
        %v872 = vadd.f32 %v820, %v856
        %v873 = vadd.f32 %v821, %v857
        %v874 = vadd.f32 %v822, %v858
        %v875 = vadd.f32 %v823, %v859
        %v876 = vadd.f32 %v824, %v860
        %v877 = vadd.f32 %v825, %v861
        %v878 = vadd.f32 %v826, %v862
        %v879 = vadd.f32 %v827, %v863
        %s880 = sadd.s32 %s562, 2
        %s881 = smul.u32 %s880, 24
        %s882 = scalar_lea.vmem [#allocation2], %s881
        %v883 = vld [vmem:[%s882] sm:$0xff]
        %v884 = vld [vmem:[%s882 + $0x8] sm:$0xff]
        %v885 = vld [vmem:[%s882 + $0x18] sm:$0xff]
        %v886 = vld [vmem:[%s882 + $0x20] sm:$0xff]
        %v887 = vld [vmem:[%s882 + $0x30] sm:$0xff]
        %v888 = vld [vmem:[%s882 + $0x38] sm:$0xff]
        %v889 = vld [vmem:[%s882 + $0x48] sm:$0xff]
        %v890 = vld [vmem:[%s882 + $0x50] sm:$0xff]
        %v891 = vld [vmem:[%s882 + $0x60] sm:$0xff]
        %v892 = vld [vmem:[%s882 + $0x68] sm:$0xff]
        %v893 = vld [vmem:[%s882 + $0x78] sm:$0xff]
        %v894 = vld [vmem:[%s882 + $0x80] sm:$0xff]
        %v895 = vld [vmem:[%s882 + $0x90] sm:$0xff]
        %v896 = vld [vmem:[%s882 + $0x98] sm:$0xff]
        %v897 = vld [vmem:[%s882 + $0xa8] sm:$0xff]
        %v898 = vld [vmem:[%s882 + $0xb0] sm:$0xff]
        %v899 = vlaneseq
        %v900 = vshrl.u32 %v899, 7
        %v901 = vsub.s32 6, %v900
        %v902 = vrot.slane %v552, %v901
        %v903 = vmul.f32 %v883, %v902
        %v904 = vmul.f32 %v884, %v902
        %v905 = vmul.f32 %v885, %v902
        %v906 = vmul.f32 %v886, %v902
        %v907 = vmul.f32 %v887, %v902
        %v908 = vmul.f32 %v888, %v902
        %v909 = vmul.f32 %v889, %v902
        %v910 = vmul.f32 %v890, %v902
        %v911 = vmul.f32 %v891, %v902
        %v912 = vmul.f32 %v892, %v902
        %v913 = vmul.f32 %v893, %v902
        %v914 = vmul.f32 %v894, %v902
        %v915 = vmul.f32 %v895, %v902
        %v916 = vmul.f32 %v896, %v902
        %v917 = vmul.f32 %v897, %v902
        %v918 = vmul.f32 %v898, %v902
        %v919 = vadd.f32 %v864, %v903
        %v920 = vadd.f32 %v865, %v904
        %v921 = vadd.f32 %v866, %v905
        %v922 = vadd.f32 %v867, %v906
        %v923 = vadd.f32 %v868, %v907
        %v924 = vadd.f32 %v869, %v908
        %v925 = vadd.f32 %v870, %v909
        %v926 = vadd.f32 %v871, %v910
        %v927 = vadd.f32 %v872, %v911
        %v928 = vadd.f32 %v873, %v912
        %v929 = vadd.f32 %v874, %v913
        %v930 = vadd.f32 %v875, %v914
        %v931 = vadd.f32 %v876, %v915
        %v932 = vadd.f32 %v877, %v916
        %v933 = vadd.f32 %v878, %v917
        %v934 = vadd.f32 %v879, %v918
        %v935 = vld [vmem:[%s882 + $0x1] sm:$0xff]
        %v936 = vld [vmem:[%s882 + $0x9] sm:$0xff]
        %v937 = vld [vmem:[%s882 + $0x19] sm:$0xff]
        %v938 = vld [vmem:[%s882 + $0x21] sm:$0xff]
        %v939 = vld [vmem:[%s882 + $0x31] sm:$0xff]
        %v940 = vld [vmem:[%s882 + $0x39] sm:$0xff]
        %v941 = vld [vmem:[%s882 + $0x49] sm:$0xff]
        %v942 = vld [vmem:[%s882 + $0x51] sm:$0xff]
        %v943 = vld [vmem:[%s882 + $0x61] sm:$0xff]
        %v944 = vld [vmem:[%s882 + $0x69] sm:$0xff]
        %v945 = vld [vmem:[%s882 + $0x79] sm:$0xff]
        %v946 = vld [vmem:[%s882 + $0x81] sm:$0xff]
        %v947 = vld [vmem:[%s882 + $0x91] sm:$0xff]
        %v948 = vld [vmem:[%s882 + $0x99] sm:$0xff]
        %v949 = vld [vmem:[%s882 + $0xa9] sm:$0xff]
        %v950 = vld [vmem:[%s882 + $0xb1] sm:$0xff]
        %v951 = vlaneseq
        %v952 = vshrl.u32 %v951, 7
        %v953 = vsub.s32 7, %v952
        %v954 = vrot.slane %v552, %v953
        %v955 = vmul.f32 %v935, %v954
        %v956 = vmul.f32 %v936, %v954
        %v957 = vmul.f32 %v937, %v954
        %v958 = vmul.f32 %v938, %v954
        %v959 = vmul.f32 %v939, %v954
        %v960 = vmul.f32 %v940, %v954
        %v961 = vmul.f32 %v941, %v954
        %v962 = vmul.f32 %v942, %v954
        %v963 = vmul.f32 %v943, %v954
        %v964 = vmul.f32 %v944, %v954
        %v965 = vmul.f32 %v945, %v954
        %v966 = vmul.f32 %v946, %v954
        %v967 = vmul.f32 %v947, %v954
        %v968 = vmul.f32 %v948, %v954
        %v969 = vmul.f32 %v949, %v954
        %v970 = vmul.f32 %v950, %v954
        %v971 = vadd.f32 %v919, %v955
        %v972 = vadd.f32 %v920, %v956
        %v973 = vadd.f32 %v921, %v957
        %v974 = vadd.f32 %v922, %v958
        %v975 = vadd.f32 %v923, %v959
        %v976 = vadd.f32 %v924, %v960
        %v977 = vadd.f32 %v925, %v961
        %v978 = vadd.f32 %v926, %v962
        %v979 = vadd.f32 %v927, %v963
        %v980 = vadd.f32 %v928, %v964
        %v981 = vadd.f32 %v929, %v965
        %v982 = vadd.f32 %v930, %v966
        %v983 = vadd.f32 %v931, %v967
        %v984 = vadd.f32 %v932, %v968
        %v985 = vadd.f32 %v933, %v969
        %v986 = vadd.f32 %v934, %v970
        %v987 = vld [vmem:[%s882 + $0x2] sm:$0xff]
        %v988 = vld [vmem:[%s882 + $0xa] sm:$0xff]
        %v989 = vld [vmem:[%s882 + $0x1a] sm:$0xff]
        %v990 = vld [vmem:[%s882 + $0x22] sm:$0xff]
        %v991 = vld [vmem:[%s882 + $0x32] sm:$0xff]
        %v992 = vld [vmem:[%s882 + $0x3a] sm:$0xff]
        %v993 = vld [vmem:[%s882 + $0x4a] sm:$0xff]
        %v994 = vld [vmem:[%s882 + $0x52] sm:$0xff]
        %v995 = vld [vmem:[%s882 + $0x62] sm:$0xff]
        %v996 = vld [vmem:[%s882 + $0x6a] sm:$0xff]
        %v997 = vld [vmem:[%s882 + $0x7a] sm:$0xff]
        %v998 = vld [vmem:[%s882 + $0x82] sm:$0xff]
        %v999 = vld [vmem:[%s882 + $0x92] sm:$0xff]
        %v1000 = vld [vmem:[%s882 + $0x9a] sm:$0xff]
        %v1001 = vld [vmem:[%s882 + $0xaa] sm:$0xff]
        %v1002 = vld [vmem:[%s882 + $0xb2] sm:$0xff]
        %v1003 = vlaneseq
        %v1004 = vshrl.u32 %v1003, 7
        %v1005 = vsub.s32 0, %v1004
        %v1006 = vrot.slane %v553, %v1005
        %v1007 = vmul.f32 %v987, %v1006
        %v1008 = vmul.f32 %v988, %v1006
        %v1009 = vmul.f32 %v989, %v1006
        %v1010 = vmul.f32 %v990, %v1006
        %v1011 = vmul.f32 %v991, %v1006
        %v1012 = vmul.f32 %v992, %v1006
        %v1013 = vmul.f32 %v993, %v1006
        %v1014 = vmul.f32 %v994, %v1006
        %v1015 = vmul.f32 %v995, %v1006
        %v1016 = vmul.f32 %v996, %v1006
        %v1017 = vmul.f32 %v997, %v1006
        %v1018 = vmul.f32 %v998, %v1006
        %v1019 = vmul.f32 %v999, %v1006
        %v1020 = vmul.f32 %v1000, %v1006
        %v1021 = vmul.f32 %v1001, %v1006
        %v1022 = vmul.f32 %v1002, %v1006
        %v1023 = vadd.f32 %v971, %v1007
        %v1024 = vadd.f32 %v972, %v1008
        %v1025 = vadd.f32 %v973, %v1009
        %v1026 = vadd.f32 %v974, %v1010
        %v1027 = vadd.f32 %v975, %v1011
        %v1028 = vadd.f32 %v976, %v1012
        %v1029 = vadd.f32 %v977, %v1013
        %v1030 = vadd.f32 %v978, %v1014
        %v1031 = vadd.f32 %v979, %v1015
        %v1032 = vadd.f32 %v980, %v1016
        %v1033 = vadd.f32 %v981, %v1017
        %v1034 = vadd.f32 %v982, %v1018
        %v1035 = vadd.f32 %v983, %v1019
        %v1036 = vadd.f32 %v984, %v1020
        %v1037 = vadd.f32 %v985, %v1021
        %v1038 = vadd.f32 %v986, %v1022
        %s1039 = smul.u32 %s562, 16
        %s1040 = scalar_lea.vmem %s258, %s1039
        %1041 = vst [vmem:[%s1040] sm:$0xff] %v1023
        %1042 = vst [vmem:[%s1040 + $0x8] sm:$0xff] %v1024
        %1043 = vst [vmem:[%s1040 + $0x10] sm:$0xff] %v1025
        %1044 = vst [vmem:[%s1040 + $0x18] sm:$0xff] %v1026
        %1045 = vst [vmem:[%s1040 + $0x20] sm:$0xff] %v1027
        %1046 = vst [vmem:[%s1040 + $0x28] sm:$0xff] %v1028
        %1047 = vst [vmem:[%s1040 + $0x30] sm:$0xff] %v1029
        %1048 = vst [vmem:[%s1040 + $0x38] sm:$0xff] %v1030
        %1049 = vst [vmem:[%s1040 + $0x40] sm:$0xff] %v1031
        %1050 = vst [vmem:[%s1040 + $0x48] sm:$0xff] %v1032
        %1051 = vst [vmem:[%s1040 + $0x50] sm:$0xff] %v1033
        %1052 = vst [vmem:[%s1040 + $0x58] sm:$0xff] %v1034
        %1053 = vst [vmem:[%s1040 + $0x60] sm:$0xff] %v1035
        %1054 = vst [vmem:[%s1040 + $0x68] sm:$0xff] %v1036
        %1055 = vst [vmem:[%s1040 + $0x70] sm:$0xff] %v1037
        %1056 = vst [vmem:[%s1040 + $0x78] sm:$0xff] %v1038
        %v1057 = vadd.f32 %v1023, %v1025
        %v1058 = vadd.f32 %v1057, %v1027
        %v1059 = vadd.f32 %v1058, %v1029
        %v1060 = vadd.f32 %v1059, %v1031
        %v1061 = vadd.f32 %v1060, %v1033
        %v1062 = vadd.f32 %v1061, %v1035
        %v1063 = vadd.f32 %v1062, %v1037
        %v1064 = vadd.f32 %v1024, %v1026
        %v1065 = vadd.f32 %v1064, %v1028
        %v1066 = vadd.f32 %v1065, %v1030
        %v1067 = vadd.f32 %v1066, %v1032
        %v1068 = vadd.f32 %v1067, %v1034
        %v1069 = vadd.f32 %v1068, %v1036
        %v1070 = vadd.f32 %v1069, %v1038
        %v1071 = vadd.f32 %v1063, %v1070
        %v1072 = vrot.slane %v1071, 4
        %v1073 = vadd.f32 %v1071, %v1072
        %v1074 = vrot.slane %v1073, 2
        %v1075 = vadd.f32 %v1073, %v1074
        %v1076 = vrot.slane %v1075, 1
        %v1077 = vadd.f32 %v1075, %v1076
        %v1078 = vadd.f32 %v560, %v1077
        %v1079 = vmul.f32 %v1023, %v1023
        %v1080 = vmul.f32 %v1024, %v1024
        %v1081 = vmul.f32 %v1025, %v1025
        %v1082 = vmul.f32 %v1026, %v1026
        %v1083 = vmul.f32 %v1027, %v1027
        %v1084 = vmul.f32 %v1028, %v1028
        %v1085 = vmul.f32 %v1029, %v1029
        %v1086 = vmul.f32 %v1030, %v1030
        %v1087 = vmul.f32 %v1031, %v1031
        %v1088 = vmul.f32 %v1032, %v1032
        %v1089 = vmul.f32 %v1033, %v1033
        %v1090 = vmul.f32 %v1034, %v1034
        %v1091 = vmul.f32 %v1035, %v1035
        %v1092 = vmul.f32 %v1036, %v1036
        %v1093 = vmul.f32 %v1037, %v1037
        %v1094 = vmul.f32 %v1038, %v1038
        %v1095 = vadd.f32 %v1079, %v1081
        %v1096 = vadd.f32 %v1095, %v1083
        %v1097 = vadd.f32 %v1096, %v1085
        %v1098 = vadd.f32 %v1097, %v1087
        %v1099 = vadd.f32 %v1098, %v1089
        %v1100 = vadd.f32 %v1099, %v1091
        %v1101 = vadd.f32 %v1100, %v1093
        %v1102 = vadd.f32 %v1080, %v1082
        %v1103 = vadd.f32 %v1102, %v1084
        %v1104 = vadd.f32 %v1103, %v1086
        %v1105 = vadd.f32 %v1104, %v1088
        %v1106 = vadd.f32 %v1105, %v1090
        %v1107 = vadd.f32 %v1106, %v1092
        %v1108 = vadd.f32 %v1107, %v1094
        %v1109 = vadd.f32 %v1101, %v1108
        %v1110 = vrot.slane %v1109, 4
        %v1111 = vadd.f32 %v1109, %v1110
        %v1112 = vrot.slane %v1111, 2
        %v1113 = vadd.f32 %v1111, %v1112
        %v1114 = vrot.slane %v1113, 1
        %v1115 = vadd.f32 %v1113, %v1114
        %v1116 = vadd.f32 %v561, %v1115
      $region45: #{residual_forward.8} parent=39 // loop_footer
        %s559 = sadd.s32 1, %s555
      $region46: #{residual_forward.8} parent=39 // loop_footer_branch
        %554 = sbr.rel target = $region42
      $region47: #{residual_forward.8} parent=39 // loop_exit
        _
      %1117 = vst [vmem:[%s262] sm:$0x1] %v560
      %1118 = vst [vmem:[%s262 + $0x1] sm:$0x1] %v561
      %p1119 = scmp.lt.s32.totalorder %s18, 1
      %s1120 = scalar_select %p1119, %s18, 1
      %s1121 = smul.addr %s1120, 32
      %s1122 = smul.addr %s1121, 8
      %s1123 = scalar_lea.vmem %s5, %s1122
      %p1124 = scmp.lt.s32.totalorder %s18, 1
      %s1125 = scalar_select %p1124, %s18, 1
      %s1126 = smul.addr %s1125, 2
      %s1127 = scalar_lea.vmem %s6, %s1126
      // Predicated region
      $region48: #{residual_forward.8} parent=39 // pred_check
        %p1128 = pneg %p146
      $region49: #{residual_forward.8} parent=39 // pred_check_branch
        %1130 = sbr.rel (%p1128) target = $region51
      $region50: #{residual_forward.8} parent=39 // pred_region
        _
      $region51: #{residual_forward.8} parent=39 // pred_fallthru
        _
      // Predicated region
      $region52: #{residual_forward.8} parent=39 // pred_check
        %p1131 = pneg %p172
      $region53: #{residual_forward.8} parent=39 // pred_check_branch
        %1133 = sbr.rel (%p1131) target = $region55
      $region54: #{residual_forward.8} parent=39 // pred_region
        _
      $region55: #{residual_forward.8} parent=39 // pred_fallthru
        _
    $region40: #{residual_forward.8} parent=5 // pred_fallthru
      _
    %p1134 = scmp.le.s32.totalorder 2, %s13
    // Predicated region
    $region56: #{residual_forward.8} parent=5 // pred_check
      %p1135 = pneg %p1134
    $region57: #{residual_forward.8} parent=5 // pred_check_branch
      %1137 = sbr.rel (%p1135) target = $region59
    $region58: #{residual_forward.8} parent=5 // pred_region
      %s1138 = ssub.s32 %s13, 2
      // Predicated region
      $region60: #{residual_forward.8} parent=58 // pred_check
        %p1139 = pneg %p152
      $region61: #{residual_forward.8} parent=58 // pred_check_branch
        %1141 = sbr.rel (%p1139) target = $region63
      $region62: #{residual_forward.8} parent=58 // pred_region
        %p1142 = scmp.lt.s32.totalorder %s19, 1
        %s1143 = scalar_select %p1142, %s19, 1
        %s1144 = smul.addr %s1143, 32
        %s1145 = smul.addr %s1144, 8
        %s1146 = scalar_lea.vmem %s5, %s1145
      $region63: #{residual_forward.8} parent=58 // pred_fallthru
        _
      // Predicated region
      $region64: #{residual_forward.8} parent=58 // pred_check
        %p1147 = pneg %p178
      $region65: #{residual_forward.8} parent=58 // pred_check_branch
        %1149 = sbr.rel (%p1147) target = $region67
      $region66: #{residual_forward.8} parent=58 // pred_region
        %p1150 = scmp.lt.s32.totalorder %s19, 1
        %s1151 = scalar_select %p1150, %s19, 1
        %s1152 = smul.addr %s1151, 2
        %s1153 = scalar_lea.vmem %s6, %s1152
      $region67: #{residual_forward.8} parent=58 // pred_fallthru
        _
    $region59: #{residual_forward.8} parent=5 // pred_fallthru
      _
  $region6: #{residual_forward.8} parent=0 // loop_footer
    %s17 = sadd.s32 1, %s13
  $region7: #{residual_forward.8} parent=0 // loop_footer_branch
    %12 = sbr.rel target = $region3
  $region8: #{residual_forward.8} parent=0 // loop_exit
    _

// kernel: residual_forward.13
$region0: #{residual_forward.13}
  #allocation0 [shape = 'u32[]', space=smem, size = 0x4, offset = 0x4, fixed_abs, tag = 'smem constant byte address 0x4 - core index']
  #allocation1 [shape = 'u32[144,128]{1,0:T(1,128)}', space=vmem, size = 0x12000, scoped, tag = 'internal scratch']
  %s0 = inlined_call_operand.vmem [shape: f32[512,128], index: 0, kind: input, shape index: {}]
  %s1 = inlined_call_operand.vmem [shape: f32[1,128], index: 1, kind: input, shape index: {}]
  %s2 = inlined_call_operand.vmem [shape: f32[1,128], index: 2, kind: input, shape index: {}]
  %s3 = inlined_call_operand.vmem [shape: f32[512,128], index: 3, kind: input, shape index: {}, may-alias: {3,4}]
  %s4 = inlined_call_operand.vmem [shape: f32[512,128], index: 4, kind: output, shape index: {}, may-alias: {3,4}]
  %s5 = sld [smem:[#allocation0]]
  $region26: #{residual_forward.13} parent=0
    _
  %s7 = ssub.s32 1, %s5
  %s8 = scalar_select 0, %s7, %s5
  // Predicated region
  $region2: #{residual_forward.13} parent=0 // pred_check
    _
  $region3: #{residual_forward.13} parent=0 // pred_check_branch
    %10 = sbr.rel (0) target = $region5
  $region4: #{residual_forward.13} parent=0 // pred_region
    _
  $region5: #{residual_forward.13} parent=0 // pred_fallthru
    _
  // Predicated region
  $region6: #{residual_forward.13} parent=0 // pred_check
    _
  $region7: #{residual_forward.13} parent=0 // pred_check_branch
    %12 = sbr.rel (0) target = $region9
  $region8: #{residual_forward.13} parent=0 // pred_region
    _
  $region9: #{residual_forward.13} parent=0 // pred_fallthru
    _
  // Predicated region
  $region10: #{residual_forward.13} parent=0 // pred_check
    _
  $region11: #{residual_forward.13} parent=0 // pred_check_branch
    %14 = sbr.rel (0) target = $region13
  $region12: #{residual_forward.13} parent=0 // pred_region
    _
  $region13: #{residual_forward.13} parent=0 // pred_fallthru
    _
  // Predicated region
  $region14: #{residual_forward.13} parent=0 // pred_check
    _
  $region15: #{residual_forward.13} parent=0 // pred_check_branch
    %16 = sbr.rel (0) target = $region17
  $region16: #{residual_forward.13} parent=0 // pred_region
    _
  $region17: #{residual_forward.13} parent=0 // pred_fallthru
    _
  %v17 = vld [vmem:[%s3] sm:$0xff]
  %v18 = vld [vmem:[%s3 + $0x8] sm:$0xff]
  %v19 = vld [vmem:[%s3 + $0x10] sm:$0xff]
  %v20 = vld [vmem:[%s3 + $0x18] sm:$0xff]
  %v21 = vld [vmem:[%s3 + $0x20] sm:$0xff]
  %v22 = vld [vmem:[%s3 + $0x28] sm:$0xff]
  %v23 = vld [vmem:[%s3 + $0x30] sm:$0xff]
  %v24 = vld [vmem:[%s3 + $0x38] sm:$0xff]
  %v25 = vld [vmem:[%s3 + $0x40] sm:$0xff]
  %v26 = vld [vmem:[%s3 + $0x48] sm:$0xff]
  %v27 = vld [vmem:[%s3 + $0x50] sm:$0xff]
  %v28 = vld [vmem:[%s3 + $0x58] sm:$0xff]
  %v29 = vld [vmem:[%s3 + $0x60] sm:$0xff]
  %v30 = vld [vmem:[%s3 + $0x68] sm:$0xff]
  %v31 = vld [vmem:[%s3 + $0x70] sm:$0xff]
  %v32 = vld [vmem:[%s3 + $0x78] sm:$0xff]
  %v33 = vld [vmem:[%s3 + $0x80] sm:$0xff]
  %v34 = vld [vmem:[%s3 + $0x88] sm:$0xff]
  %v35 = vld [vmem:[%s3 + $0x90] sm:$0xff]
  %v36 = vld [vmem:[%s3 + $0x98] sm:$0xff]
  %v37 = vld [vmem:[%s3 + $0xa0] sm:$0xff]
  %v38 = vld [vmem:[%s3 + $0xa8] sm:$0xff]
  %v39 = vld [vmem:[%s3 + $0xb0] sm:$0xff]
  %v40 = vld [vmem:[%s3 + $0xb8] sm:$0xff]
  %v41 = vld [vmem:[%s3 + $0xc0] sm:$0xff]
  %v42 = vld [vmem:[%s3 + $0xc8] sm:$0xff]
  %v43 = vld [vmem:[%s3 + $0xd0] sm:$0xff]
  %v44 = vld [vmem:[%s3 + $0xd8] sm:$0xff]
  %v45 = vld [vmem:[%s3 + $0xe0] sm:$0xff]
  %v46 = vld [vmem:[%s3 + $0xe8] sm:$0xff]
  %v47 = vld [vmem:[%s3 + $0xf0] sm:$0xff]
  %v48 = vld [vmem:[%s3 + $0xf8] sm:$0xff]
  %v49 = vld [vmem:[%s3 + $0x100] sm:$0xff]
  %v50 = vld [vmem:[%s3 + $0x108] sm:$0xff]
  %v51 = vld [vmem:[%s3 + $0x110] sm:$0xff]
  %v52 = vld [vmem:[%s3 + $0x118] sm:$0xff]
  %v53 = vld [vmem:[%s3 + $0x120] sm:$0xff]
  %v54 = vld [vmem:[%s3 + $0x128] sm:$0xff]
  %v55 = vld [vmem:[%s3 + $0x130] sm:$0xff]
  %v56 = vld [vmem:[%s3 + $0x138] sm:$0xff]
  %v57 = vld [vmem:[%s3 + $0x140] sm:$0xff]
  %v58 = vld [vmem:[%s3 + $0x148] sm:$0xff]
  %v59 = vld [vmem:[%s3 + $0x150] sm:$0xff]
  %v60 = vld [vmem:[%s3 + $0x158] sm:$0xff]
  %v61 = vld [vmem:[%s3 + $0x160] sm:$0xff]
  %v62 = vld [vmem:[%s3 + $0x168] sm:$0xff]
  %v63 = vld [vmem:[%s3 + $0x170] sm:$0xff]
  %v64 = vld [vmem:[%s3 + $0x178] sm:$0xff]
  %v65 = vld [vmem:[%s3 + $0x180] sm:$0xff]
  %v66 = vld [vmem:[%s3 + $0x188] sm:$0xff]
  %v67 = vld [vmem:[%s3 + $0x190] sm:$0xff]
  %v68 = vld [vmem:[%s3 + $0x198] sm:$0xff]
  %v69 = vld [vmem:[%s3 + $0x1a0] sm:$0xff]
  %v70 = vld [vmem:[%s3 + $0x1a8] sm:$0xff]
  %v71 = vld [vmem:[%s3 + $0x1b0] sm:$0xff]
  %v72 = vld [vmem:[%s3 + $0x1b8] sm:$0xff]
  %v73 = vld [vmem:[%s3 + $0x1c0] sm:$0xff]
  %v74 = vld [vmem:[%s3 + $0x1c8] sm:$0xff]
  %v75 = vld [vmem:[%s3 + $0x1d0] sm:$0xff]
  %v76 = vld [vmem:[%s3 + $0x1d8] sm:$0xff]
  %v77 = vld [vmem:[%s3 + $0x1e0] sm:$0xff]
  %v78 = vld [vmem:[%s3 + $0x1e8] sm:$0xff]
  %v79 = vld [vmem:[%s3 + $0x1f0] sm:$0xff]
  %v80 = vld [vmem:[%s3 + $0x1f8] sm:$0xff]
  %v81 = vld [vmem:[%s0] sm:$0xff]
  %v82 = vld [vmem:[%s0 + $0x8] sm:$0xff]
  %v83 = vld [vmem:[%s0 + $0x10] sm:$0xff]
  %v84 = vld [vmem:[%s0 + $0x18] sm:$0xff]
  %v85 = vld [vmem:[%s0 + $0x20] sm:$0xff]
  %v86 = vld [vmem:[%s0 + $0x28] sm:$0xff]
  %v87 = vld [vmem:[%s0 + $0x30] sm:$0xff]
  %v88 = vld [vmem:[%s0 + $0x38] sm:$0xff]
  %v89 = vld [vmem:[%s0 + $0x40] sm:$0xff]
  %v90 = vld [vmem:[%s0 + $0x48] sm:$0xff]
  %v91 = vld [vmem:[%s0 + $0x50] sm:$0xff]
  %v92 = vld [vmem:[%s0 + $0x58] sm:$0xff]
  %v93 = vld [vmem:[%s0 + $0x60] sm:$0xff]
  %v94 = vld [vmem:[%s0 + $0x68] sm:$0xff]
  %v95 = vld [vmem:[%s0 + $0x70] sm:$0xff]
  %v96 = vld [vmem:[%s0 + $0x78] sm:$0xff]
  %v97 = vld [vmem:[%s0 + $0x80] sm:$0xff]
  %v98 = vld [vmem:[%s0 + $0x88] sm:$0xff]
  %v99 = vld [vmem:[%s0 + $0x90] sm:$0xff]
  %v100 = vld [vmem:[%s0 + $0x98] sm:$0xff]
  %v101 = vld [vmem:[%s0 + $0xa0] sm:$0xff]
  %v102 = vld [vmem:[%s0 + $0xa8] sm:$0xff]
  %v103 = vld [vmem:[%s0 + $0xb0] sm:$0xff]
  %v104 = vld [vmem:[%s0 + $0xb8] sm:$0xff]
  %v105 = vld [vmem:[%s0 + $0xc0] sm:$0xff]
  %v106 = vld [vmem:[%s0 + $0xc8] sm:$0xff]
  %v107 = vld [vmem:[%s0 + $0xd0] sm:$0xff]
  %v108 = vld [vmem:[%s0 + $0xd8] sm:$0xff]
  %v109 = vld [vmem:[%s0 + $0xe0] sm:$0xff]
  %v110 = vld [vmem:[%s0 + $0xe8] sm:$0xff]
  %v111 = vld [vmem:[%s0 + $0xf0] sm:$0xff]
  %v112 = vld [vmem:[%s0 + $0xf8] sm:$0xff]
  %v113 = vld [vmem:[%s0 + $0x100] sm:$0xff]
  %v114 = vld [vmem:[%s0 + $0x108] sm:$0xff]
  %v115 = vld [vmem:[%s0 + $0x110] sm:$0xff]
  %v116 = vld [vmem:[%s0 + $0x118] sm:$0xff]
  %v117 = vld [vmem:[%s0 + $0x120] sm:$0xff]
  %v118 = vld [vmem:[%s0 + $0x128] sm:$0xff]
  %v119 = vld [vmem:[%s0 + $0x130] sm:$0xff]
  %v120 = vld [vmem:[%s0 + $0x138] sm:$0xff]
  %v121 = vld [vmem:[%s0 + $0x140] sm:$0xff]
  %v122 = vld [vmem:[%s0 + $0x148] sm:$0xff]
  %v123 = vld [vmem:[%s0 + $0x150] sm:$0xff]
  %v124 = vld [vmem:[%s0 + $0x158] sm:$0xff]
  %v125 = vld [vmem:[%s0 + $0x160] sm:$0xff]
  %v126 = vld [vmem:[%s0 + $0x168] sm:$0xff]
  %v127 = vld [vmem:[%s0 + $0x170] sm:$0xff]
  %v128 = vld [vmem:[%s0 + $0x178] sm:$0xff]
  %v129 = vld [vmem:[%s0 + $0x180] sm:$0xff]
  %v130 = vld [vmem:[%s0 + $0x188] sm:$0xff]
  %v131 = vld [vmem:[%s0 + $0x190] sm:$0xff]
  %v132 = vld [vmem:[%s0 + $0x198] sm:$0xff]
  %v133 = vld [vmem:[%s0 + $0x1a0] sm:$0xff]
  %v134 = vld [vmem:[%s0 + $0x1a8] sm:$0xff]
  %v135 = vld [vmem:[%s0 + $0x1b0] sm:$0xff]
  %v136 = vld [vmem:[%s0 + $0x1b8] sm:$0xff]
  %v137 = vld [vmem:[%s0 + $0x1c0] sm:$0xff]
  %v138 = vld [vmem:[%s0 + $0x1c8] sm:$0xff]
  %v139 = vld [vmem:[%s0 + $0x1d0] sm:$0xff]
  %v140 = vld [vmem:[%s0 + $0x1d8] sm:$0xff]
  %v141 = vld [vmem:[%s0 + $0x1e0] sm:$0xff]
  %v142 = vld [vmem:[%s0 + $0x1e8] sm:$0xff]
  %v143 = vld [vmem:[%s0 + $0x1f0] sm:$0xff]
  %v144 = vld [vmem:[%s0 + $0x1f8] sm:$0xff]
  %v145 = vld [vmem:[%s1] sm:$0x1]
  %v147 = vlaneseq
  %v148 = vshrl.u32 %v147, 7
  %v149 = vsub.s32 0, %v148
  %v150 = vrot.slane %v145, %v149
  %v152 = vmul.f32 %v81, %v150
  %v153 = vmul.f32 %v82, %v150
  %v154 = vmul.f32 %v83, %v150
  %v155 = vmul.f32 %v84, %v150
  %v156 = vmul.f32 %v85, %v150
  %v157 = vmul.f32 %v86, %v150
  %v158 = vmul.f32 %v87, %v150
  %v159 = vmul.f32 %v88, %v150
  %v160 = vmul.f32 %v89, %v150
  %v161 = vmul.f32 %v90, %v150
  %v162 = vmul.f32 %v91, %v150
  %v163 = vmul.f32 %v92, %v150
  %v164 = vmul.f32 %v93, %v150
  %v165 = vmul.f32 %v94, %v150
  %v166 = vmul.f32 %v95, %v150
  %v167 = vmul.f32 %v96, %v150
  %v168 = vmul.f32 %v97, %v150
  %v169 = vmul.f32 %v98, %v150
  %v170 = vmul.f32 %v99, %v150
  %v171 = vmul.f32 %v100, %v150
  %v172 = vmul.f32 %v101, %v150
  %v173 = vmul.f32 %v102, %v150
  %v174 = vmul.f32 %v103, %v150
  %v175 = vmul.f32 %v104, %v150
  %v176 = vmul.f32 %v105, %v150
  %v177 = vmul.f32 %v106, %v150
  %v178 = vmul.f32 %v107, %v150
  %v179 = vmul.f32 %v108, %v150
  %v180 = vmul.f32 %v109, %v150
  %v181 = vmul.f32 %v110, %v150
  %v182 = vmul.f32 %v111, %v150
  %v183 = vmul.f32 %v112, %v150
  %v184 = vmul.f32 %v113, %v150
  %v185 = vmul.f32 %v114, %v150
  %v186 = vmul.f32 %v115, %v150
  %v187 = vmul.f32 %v116, %v150
  %v188 = vmul.f32 %v117, %v150
  %v189 = vmul.f32 %v118, %v150
  %v190 = vmul.f32 %v119, %v150
  %v191 = vmul.f32 %v120, %v150
  %v192 = vmul.f32 %v121, %v150
  %v193 = vmul.f32 %v122, %v150
  %v194 = vmul.f32 %v123, %v150
  %v195 = vmul.f32 %v124, %v150
  %v196 = vmul.f32 %v125, %v150
  %v197 = vmul.f32 %v126, %v150
  %v198 = vmul.f32 %v127, %v150
  %v199 = vmul.f32 %v128, %v150
  %v200 = vmul.f32 %v129, %v150
  %v201 = vmul.f32 %v130, %v150
  %v202 = vmul.f32 %v131, %v150
  %v203 = vmul.f32 %v132, %v150
  %v204 = vmul.f32 %v133, %v150
  %v205 = vmul.f32 %v134, %v150
  %v206 = vmul.f32 %v135, %v150
  %v207 = vmul.f32 %v136, %v150
  %v208 = vmul.f32 %v137, %v150
  %v209 = vmul.f32 %v138, %v150
  %v210 = vmul.f32 %v139, %v150
  %v211 = vmul.f32 %v140, %v150
  %v212 = vmul.f32 %v141, %v150
  %v213 = vmul.f32 %v142, %v150
  %v214 = vmul.f32 %v143, %v150
  %v215 = vmul.f32 %v144, %v150
  %v216 = vadd.f32 %v17, %v152
  %v217 = vadd.f32 %v18, %v153
  %v218 = vadd.f32 %v19, %v154
  %v219 = vadd.f32 %v20, %v155
  %v220 = vadd.f32 %v21, %v156
  %v221 = vadd.f32 %v22, %v157
  %v222 = vadd.f32 %v23, %v158
  %v223 = vadd.f32 %v24, %v159
  %v224 = vadd.f32 %v25, %v160
  %v225 = vadd.f32 %v26, %v161
  %v226 = vadd.f32 %v27, %v162
  %v227 = vadd.f32 %v28, %v163
  %v228 = vadd.f32 %v29, %v164
  %v229 = vadd.f32 %v30, %v165
  %v230 = vadd.f32 %v31, %v166
  %v231 = vadd.f32 %v32, %v167
  %v232 = vadd.f32 %v33, %v168
  %v233 = vadd.f32 %v34, %v169
  %v234 = vadd.f32 %v35, %v170
  %v235 = vadd.f32 %v36, %v171
  %v236 = vadd.f32 %v37, %v172
  %v237 = vadd.f32 %v38, %v173
  %v238 = vadd.f32 %v39, %v174
  %v239 = vadd.f32 %v40, %v175
  %v240 = vadd.f32 %v41, %v176
  %v241 = vadd.f32 %v42, %v177
  %v242 = vadd.f32 %v43, %v178
  %v243 = vadd.f32 %v44, %v179
  %v244 = vadd.f32 %v45, %v180
  %v245 = vadd.f32 %v46, %v181
  %v246 = vadd.f32 %v47, %v182
  %v247 = vadd.f32 %v48, %v183
  %v248 = vadd.f32 %v49, %v184
  %v249 = vadd.f32 %v50, %v185
  %v250 = vadd.f32 %v51, %v186
  %v251 = vadd.f32 %v52, %v187
  %v252 = vadd.f32 %v53, %v188
  %v253 = vadd.f32 %v54, %v189
  %v254 = vadd.f32 %v55, %v190
  %v255 = vadd.f32 %v56, %v191
  %v256 = vadd.f32 %v57, %v192
  %v257 = vadd.f32 %v58, %v193
  %v258 = vadd.f32 %v59, %v194
  %v259 = vadd.f32 %v60, %v195
  %v260 = vadd.f32 %v61, %v196
  %v261 = vadd.f32 %v62, %v197
  %v262 = vadd.f32 %v63, %v198
  %v263 = vadd.f32 %v64, %v199
  %v264 = vadd.f32 %v65, %v200
  %v265 = vadd.f32 %v66, %v201
  %v266 = vadd.f32 %v67, %v202
  %v267 = vadd.f32 %v68, %v203
  %v268 = vadd.f32 %v69, %v204
  %v269 = vadd.f32 %v70, %v205
  %v270 = vadd.f32 %v71, %v206
  %v271 = vadd.f32 %v72, %v207
  %v272 = vadd.f32 %v73, %v208
  %v273 = vadd.f32 %v74, %v209
  %v274 = vadd.f32 %v75, %v210
  %v275 = vadd.f32 %v76, %v211
  %v276 = vadd.f32 %v77, %v212
  %v277 = vadd.f32 %v78, %v213
  %v278 = vadd.f32 %v79, %v214
  %v279 = vadd.f32 %v80, %v215
  %v280 = vld [vmem:[%s2] sm:$0x1]
  %v282 = vlaneseq
  %v283 = vshrl.u32 %v282, 7
  %v284 = vsub.s32 0, %v283
  %v285 = vrot.slane %v280, %v284
  %v287 = vadd.f32 %v216, %v285
  %v288 = vadd.f32 %v217, %v285
  %v289 = vadd.f32 %v218, %v285
  %v290 = vadd.f32 %v219, %v285
  %v291 = vadd.f32 %v220, %v285
  %v292 = vadd.f32 %v221, %v285
  %v293 = vadd.f32 %v222, %v285
  %v294 = vadd.f32 %v223, %v285
  %v295 = vadd.f32 %v224, %v285
  %v296 = vadd.f32 %v225, %v285
  %v297 = vadd.f32 %v226, %v285
  %v298 = vadd.f32 %v227, %v285
  %v299 = vadd.f32 %v228, %v285
  %v300 = vadd.f32 %v229, %v285
  %v301 = vadd.f32 %v230, %v285
  %v302 = vadd.f32 %v231, %v285
  %v303 = vadd.f32 %v232, %v285
  %v304 = vadd.f32 %v233, %v285
  %v305 = vadd.f32 %v234, %v285
  %v306 = vadd.f32 %v235, %v285
  %v307 = vadd.f32 %v236, %v285
  %v308 = vadd.f32 %v237, %v285
  %v309 = vadd.f32 %v238, %v285
  %v310 = vadd.f32 %v239, %v285
  %v311 = vadd.f32 %v240, %v285
  %v312 = vadd.f32 %v241, %v285
  %v313 = vadd.f32 %v242, %v285
  %v314 = vadd.f32 %v243, %v285
  %v315 = vadd.f32 %v244, %v285
  %v316 = vadd.f32 %v245, %v285
  %v317 = vadd.f32 %v246, %v285
  %v318 = vadd.f32 %v247, %v285
  %v319 = vadd.f32 %v248, %v285
  %v320 = vadd.f32 %v249, %v285
  %v321 = vadd.f32 %v250, %v285
  %v322 = vadd.f32 %v251, %v285
  %v323 = vadd.f32 %v252, %v285
  %v324 = vadd.f32 %v253, %v285
  %v325 = vadd.f32 %v254, %v285
  %v326 = vadd.f32 %v255, %v285
  %v327 = vadd.f32 %v256, %v285
  %v328 = vadd.f32 %v257, %v285
  %v329 = vadd.f32 %v258, %v285
  %v330 = vadd.f32 %v259, %v285
  %v331 = vadd.f32 %v260, %v285
  %v332 = vadd.f32 %v261, %v285
  %v333 = vadd.f32 %v262, %v285
  %v334 = vadd.f32 %v263, %v285
  %v335 = vadd.f32 %v264, %v285
  %v336 = vadd.f32 %v265, %v285
  %v337 = vadd.f32 %v266, %v285
  %v338 = vadd.f32 %v267, %v285
  %v339 = vadd.f32 %v268, %v285
  %v340 = vadd.f32 %v269, %v285
  %v341 = vadd.f32 %v270, %v285
  %v342 = vadd.f32 %v271, %v285
  %v343 = vadd.f32 %v272, %v285
  %v344 = vadd.f32 %v273, %v285
  %v345 = vadd.f32 %v274, %v285
  %v346 = vadd.f32 %v275, %v285
  %v347 = vadd.f32 %v276, %v285
  %v348 = vadd.f32 %v277, %v285
  %v349 = vadd.f32 %v278, %v285
  %v350 = vadd.f32 %v279, %v285
  %351 = vst [vmem:[%s4] sm:$0xff] %v287
  %352 = vst [vmem:[%s4 + $0x8] sm:$0xff] %v288
  %353 = vst [vmem:[%s4 + $0x10] sm:$0xff] %v289
  %354 = vst [vmem:[%s4 + $0x18] sm:$0xff] %v290
  %355 = vst [vmem:[%s4 + $0x20] sm:$0xff] %v291
  %356 = vst [vmem:[%s4 + $0x28] sm:$0xff] %v292
  %357 = vst [vmem:[%s4 + $0x30] sm:$0xff] %v293
  %358 = vst [vmem:[%s4 + $0x38] sm:$0xff] %v294
  %359 = vst [vmem:[%s4 + $0x40] sm:$0xff] %v295
  %360 = vst [vmem:[%s4 + $0x48] sm:$0xff] %v296
  %361 = vst [vmem:[%s4 + $0x50] sm:$0xff] %v297
  %362 = vst [vmem:[%s4 + $0x58] sm:$0xff] %v298
  %363 = vst [vmem:[%s4 + $0x60] sm:$0xff] %v299
  %364 = vst [vmem:[%s4 + $0x68] sm:$0xff] %v300
  %365 = vst [vmem:[%s4 + $0x70] sm:$0xff] %v301
  %366 = vst [vmem:[%s4 + $0x78] sm:$0xff] %v302
  %367 = vst [vmem:[%s4 + $0x80] sm:$0xff] %v303
  %368 = vst [vmem:[%s4 + $0x88] sm:$0xff] %v304
  %369 = vst [vmem:[%s4 + $0x90] sm:$0xff] %v305
  %370 = vst [vmem:[%s4 + $0x98] sm:$0xff] %v306
  %371 = vst [vmem:[%s4 + $0xa0] sm:$0xff] %v307
  %372 = vst [vmem:[%s4 + $0xa8] sm:$0xff] %v308
  %373 = vst [vmem:[%s4 + $0xb0] sm:$0xff] %v309
  %374 = vst [vmem:[%s4 + $0xb8] sm:$0xff] %v310
  %375 = vst [vmem:[%s4 + $0xc0] sm:$0xff] %v311
  %376 = vst [vmem:[%s4 + $0xc8] sm:$0xff] %v312
  %377 = vst [vmem:[%s4 + $0xd0] sm:$0xff] %v313
  %378 = vst [vmem:[%s4 + $0xd8] sm:$0xff] %v314
  %379 = vst [vmem:[%s4 + $0xe0] sm:$0xff] %v315
  %380 = vst [vmem:[%s4 + $0xe8] sm:$0xff] %v316
  %381 = vst [vmem:[%s4 + $0xf0] sm:$0xff] %v317
  %382 = vst [vmem:[%s4 + $0xf8] sm:$0xff] %v318
  %383 = vst [vmem:[%s4 + $0x100] sm:$0xff] %v319
  %384 = vst [vmem:[%s4 + $0x108] sm:$0xff] %v320
  %385 = vst [vmem:[%s4 + $0x110] sm:$0xff] %v321
  %386 = vst [vmem:[%s4 + $0x118] sm:$0xff] %v322
  %387 = vst [vmem:[%s4 + $0x120] sm:$0xff] %v323
  %388 = vst [vmem:[%s4 + $0x128] sm:$0xff] %v324
  %389 = vst [vmem:[%s4 + $0x130] sm:$0xff] %v325
  %390 = vst [vmem:[%s4 + $0x138] sm:$0xff] %v326
  %391 = vst [vmem:[%s4 + $0x140] sm:$0xff] %v327
  %392 = vst [vmem:[%s4 + $0x148] sm:$0xff] %v328
  %393 = vst [vmem:[%s4 + $0x150] sm:$0xff] %v329
  %394 = vst [vmem:[%s4 + $0x158] sm:$0xff] %v330
  %395 = vst [vmem:[%s4 + $0x160] sm:$0xff] %v331
  %396 = vst [vmem:[%s4 + $0x168] sm:$0xff] %v332
  %397 = vst [vmem:[%s4 + $0x170] sm:$0xff] %v333
  %398 = vst [vmem:[%s4 + $0x178] sm:$0xff] %v334
  %399 = vst [vmem:[%s4 + $0x180] sm:$0xff] %v335
  %400 = vst [vmem:[%s4 + $0x188] sm:$0xff] %v336
  %401 = vst [vmem:[%s4 + $0x190] sm:$0xff] %v337
  %402 = vst [vmem:[%s4 + $0x198] sm:$0xff] %v338
  %403 = vst [vmem:[%s4 + $0x1a0] sm:$0xff] %v339
  %404 = vst [vmem:[%s4 + $0x1a8] sm:$0xff] %v340
  %405 = vst [vmem:[%s4 + $0x1b0] sm:$0xff] %v341
  %406 = vst [vmem:[%s4 + $0x1b8] sm:$0xff] %v342
  %407 = vst [vmem:[%s4 + $0x1c0] sm:$0xff] %v343
  %408 = vst [vmem:[%s4 + $0x1c8] sm:$0xff] %v344
  %409 = vst [vmem:[%s4 + $0x1d0] sm:$0xff] %v345
  %410 = vst [vmem:[%s4 + $0x1d8] sm:$0xff] %v346
  %411 = vst [vmem:[%s4 + $0x1e0] sm:$0xff] %v347
  %412 = vst [vmem:[%s4 + $0x1e8] sm:$0xff] %v348
  %413 = vst [vmem:[%s4 + $0x1f0] sm:$0xff] %v349
  %414 = vst [vmem:[%s4 + $0x1f8] sm:$0xff] %v350
  // Predicated region
  $region18: #{residual_forward.13} parent=0 // pred_check
    _
  $region19: #{residual_forward.13} parent=0 // pred_check_branch
    %416 = sbr.rel (0) target = $region21
  $region20: #{residual_forward.13} parent=0 // pred_region
    _
  $region21: #{residual_forward.13} parent=0 // pred_fallthru
    _
  // Predicated region
  $region22: #{residual_forward.13} parent=0 // pred_check
    _
  $region23: #{residual_forward.13} parent=0 // pred_check_branch
    %418 = sbr.rel (0) target = $region25
  $region24: #{residual_forward.13} parent=0 // pred_region
    _
  $region25: #{residual_forward.13} parent=0 // pred_fallthru
    _

</llo_original>
